<compile_context>
chip_gen: v5e
topology: v5e:2x2
jax: 0.10.0
libtpu: 0.0.40
codegen_flags: <defaults>
</compile_context>

<pallas_src>
import jax
import jax.numpy as jnp
from jax.experimental import pallas as pl
from jax.experimental.pallas import tpu as pltpu

NUM_PRELU = 7
LANES = 512            # lane-dense last dim, multiple of 128 -> unmasked vst
MAX_BLOCK_ROWS = 1024  # 1024 x 512 x 4 B = 2 MiB per block (safe on v7x VMEM)


def _prelu_chain_kernel(alpha_ref, x_ref, o_ref):
    # alpha_ref: SMEM (NUM_PRELU,) f32 scalars (scalar-prefetched once).
    # x_ref / o_ref: VMEM (block_rows, LANES) tiles.
    x = x_ref[...].astype(jnp.float32)      # compute in f32 (no-op for f32 in)
    for i in range(NUM_PRELU):               # exact sequential per-layer PReLU
        a = alpha_ref[i]
        x = jnp.where(x > 0, x, a * x)
    o_ref[...] = x.astype(o_ref.dtype)


def prelu_chain(x, alphas):
    """Apply 7 chained PReLU (single-parameter alpha) layers elementwise."""
    orig_shape = x.shape
    orig_dtype = x.dtype
    total = x.size

    # Lane-dense 2D slab: (rows, LANES) with rows a multiple of block_rows.
    rows_needed = -(-total // LANES)                       # ceil div
    block_rows = min(MAX_BLOCK_ROWS, ((rows_needed + 7) // 8) * 8)
    num_blocks = -(-rows_needed // block_rows)
    rows = num_blocks * block_rows
    padded_total = rows * LANES

    flat = x.reshape(-1)
    if padded_total != total:
        flat = jnp.pad(flat, (0, padded_total - total))
    x2d = flat.reshape(rows, LANES)

    out2d = pl.pallas_call(
        _prelu_chain_kernel,
        out_shape=jax.ShapeDtypeStruct((rows, LANES), orig_dtype),
        grid_spec=pltpu.PrefetchScalarGridSpec(
            num_scalar_prefetch=1,                         # alphas -> SMEM once
            grid=(num_blocks,),
            in_specs=[
                pl.BlockSpec((block_rows, LANES), lambda i, alphas: (i, 0)),
            ],
            out_specs=pl.BlockSpec((block_rows, LANES), lambda i, alphas: (i, 0)),
        ),
        compiler_params=pltpu.CompilerParams(
            dimension_semantics=("parallel",),
        ),
        # Operand indices include the scalar-prefetch arg: 0=alphas, 1=x2d.
        input_output_aliases={1: 0},
    )(alphas, x2d)

    return out2d.reshape(-1)[:total].reshape(orig_shape)


def prelu_chain_ref(x, alphas):
    for i in range(NUM_PRELU):
        x = jnp.where(x > 0, x, alphas[i] * x)
    return x


if __name__ == "__main__":
    key = jax.random.PRNGKey(0)
    # Input consistent with the module spec: x1 = torch.randn(1, 3, 224, 224).
    x = jax.random.normal(key, (1, 3, 224, 224), dtype=jnp.float32)

    # PyTorch nn.PReLU() default init: one parameter per layer, value 0.25.
    alphas = jnp.full((NUM_PRELU,), 0.25, dtype=jnp.float32)

    out = prelu_chain(x, alphas)
    out = jax.block_until_ready(out)

    ref = prelu_chain_ref(x, alphas)
    assert out.shape == x.shape and out.dtype == x.dtype
    assert jnp.allclose(out, ref, atol=1e-6, rtol=1e-6)

    print("KERNEL_OK")
</pallas_src>

<mosaic_0001>
module attributes {stable_mosaic.version = 11 : i64} {
  func.func @_prelu_chain_kernel(%arg0: i32, %arg1: memref<7xf32, #tpu.memory_space<smem>>, %arg2: memref<296x512xf32, #tpu.memory_space<vmem>>, %arg3: memref<296x512xf32, #tpu.memory_space<vmem>>) attributes {dimension_semantics = [#tpu.dimension_semantics<parallel>], iteration_bounds = array<i64: 1>, scalar_prefetch = 1 : i64, scratch_operands = 0 : i64, tpu.core_type = #tpu.core_type<tc>, window_params = [{transform_indices = @transform_0, window_bounds = array<i64: 296, 512>}, {transform_indices = @transform_1, window_bounds = array<i64: 296, 512>}]} {
    %c0 = arith.constant 0 : index
    %c0_0 = arith.constant 0 : index
    %0 = vector.load %arg2[%c0, %c0_0] : memref<296x512xf32, #tpu.memory_space<vmem>>, vector<296x512xf32>
    %c0_1 = arith.constant 0 : index
    %1 = memref.load %arg1[%c0_1] : memref<7xf32, #tpu.memory_space<smem>>
    %cst = arith.constant 0.000000e+00 : f32
    %2 = vector.broadcast %cst : f32 to vector<296x512xf32>
    %3 = arith.cmpf ogt, %0, %2 : vector<296x512xf32>
    %4 = vector.broadcast %1 : f32 to vector<296x512xf32>
    %5 = arith.mulf %4, %0 : vector<296x512xf32>
    %6 = arith.select %3, %0, %5 : vector<296x512xi1>, vector<296x512xf32>
    %c1 = arith.constant 1 : index
    %7 = memref.load %arg1[%c1] : memref<7xf32, #tpu.memory_space<smem>>
    %cst_2 = arith.constant 0.000000e+00 : f32
    %8 = vector.broadcast %cst_2 : f32 to vector<296x512xf32>
    %9 = arith.cmpf ogt, %6, %8 : vector<296x512xf32>
    %10 = vector.broadcast %7 : f32 to vector<296x512xf32>
    %11 = arith.mulf %10, %6 : vector<296x512xf32>
    %12 = arith.select %9, %6, %11 : vector<296x512xi1>, vector<296x512xf32>
    %c2 = arith.constant 2 : index
    %13 = memref.load %arg1[%c2] : memref<7xf32, #tpu.memory_space<smem>>
    %cst_3 = arith.constant 0.000000e+00 : f32
    %14 = vector.broadcast %cst_3 : f32 to vector<296x512xf32>
    %15 = arith.cmpf ogt, %12, %14 : vector<296x512xf32>
    %16 = vector.broadcast %13 : f32 to vector<296x512xf32>
    %17 = arith.mulf %16, %12 : vector<296x512xf32>
    %18 = arith.select %15, %12, %17 : vector<296x512xi1>, vector<296x512xf32>
    %c3 = arith.constant 3 : index
    %19 = memref.load %arg1[%c3] : memref<7xf32, #tpu.memory_space<smem>>
    %cst_4 = arith.constant 0.000000e+00 : f32
    %20 = vector.broadcast %cst_4 : f32 to vector<296x512xf32>
    %21 = arith.cmpf ogt, %18, %20 : vector<296x512xf32>
    %22 = vector.broadcast %19 : f32 to vector<296x512xf32>
    %23 = arith.mulf %22, %18 : vector<296x512xf32>
    %24 = arith.select %21, %18, %23 : vector<296x512xi1>, vector<296x512xf32>
    %c4 = arith.constant 4 : index
    %25 = memref.load %arg1[%c4] : memref<7xf32, #tpu.memory_space<smem>>
    %cst_5 = arith.constant 0.000000e+00 : f32
    %26 = vector.broadcast %cst_5 : f32 to vector<296x512xf32>
    %27 = arith.cmpf ogt, %24, %26 : vector<296x512xf32>
    %28 = vector.broadcast %25 : f32 to vector<296x512xf32>
    %29 = arith.mulf %28, %24 : vector<296x512xf32>
    %30 = arith.select %27, %24, %29 : vector<296x512xi1>, vector<296x512xf32>
    %c5 = arith.constant 5 : index
    %31 = memref.load %arg1[%c5] : memref<7xf32, #tpu.memory_space<smem>>
    %cst_6 = arith.constant 0.000000e+00 : f32
    %32 = vector.broadcast %cst_6 : f32 to vector<296x512xf32>
    %33 = arith.cmpf ogt, %30, %32 : vector<296x512xf32>
    %34 = vector.broadcast %31 : f32 to vector<296x512xf32>
    %35 = arith.mulf %34, %30 : vector<296x512xf32>
    %36 = arith.select %33, %30, %35 : vector<296x512xi1>, vector<296x512xf32>
    %c6 = arith.constant 6 : index
    %37 = memref.load %arg1[%c6] : memref<7xf32, #tpu.memory_space<smem>>
    %cst_7 = arith.constant 0.000000e+00 : f32
    %38 = vector.broadcast %cst_7 : f32 to vector<296x512xf32>
    %39 = arith.cmpf ogt, %36, %38 : vector<296x512xf32>
    %40 = vector.broadcast %37 : f32 to vector<296x512xf32>
    %41 = arith.mulf %40, %36 : vector<296x512xf32>
    %42 = arith.select %39, %36, %41 : vector<296x512xi1>, vector<296x512xf32>
    %c0_8 = arith.constant 0 : index
    %c0_9 = arith.constant 0 : index
    %43 = vector.load %arg3[%c0_8, %c0_9] : memref<296x512xf32, #tpu.memory_space<vmem>>, vector<296x512xf32>
    tpu.vector_store %arg3[%c0_8, %c0_9], %42 {strides = array<i32>} : memref<296x512xf32, #tpu.memory_space<vmem>>, vector<296x512xf32>,
    return
  }
  func.func @transform_0(%arg0: i32, %arg1: memref<7xf32, #tpu.memory_space<smem>>) -> (i32, i32) {
    %c0_i32 = arith.constant 0 : i32
    %c0_i32_0 = arith.constant 0 : i32
    return %arg0, %c0_i32 : i32, i32
  }
  func.func @transform_1(%arg0: i32, %arg1: memref<7xf32, #tpu.memory_space<smem>>) -> (i32, i32) {
    %c0_i32 = arith.constant 0 : i32
    %c0_i32_0 = arith.constant 0 : i32
    return %arg0, %c0_i32 : i32, i32
  }
}

</mosaic_0001>

<llo_original>
// kernel: tpu_custom_call.1
$region0: #{tpu_custom_call.1}
  #allocation0 [shape = 'u32[]', space=smem, size = 0x4, offset = 0x4, fixed_abs, tag = 'smem constant byte address 0x4 - core index']
  #allocation1 [shape = 'u32[72,128]{1,0:T(1,128)}', space=vmem, size = 0x9000, scoped, tag = 'internal scratch']
  #allocation2 [shape = 's32[1]{0}', space=sflag, size = 0x4, scoped, tag = 'scoped memory for tpu_custom_call.1']
  #allocation3 [shape = 'u8[512]{0}', space=smem, size = 0x200, scoped, tag = 'prefetched SMEM operand 0']
  %s0 = inlined_call_operand.vmem [shape: f32[7], index: 0, kind: input, shape index: {}]
  %s1 = inlined_call_operand.hbm [shape: f32[296,512], index: 1, kind: input, shape index: {}, may-alias: {1,2}]
  %s2 = inlined_call_operand.hbm [shape: f32[296,512], index: 2, kind: output, shape index: {}, may-alias: {1,2}]
  %s3 = sld [smem:[#allocation0]]
  $region18: #{tpu_custom_call.1} parent=0
    _
  %s5 = ssub.s32 1, %s3
  %s6 = scalar_select 0, %s5, %s3
  %s8 = sshll.u32 %s0, 4
  %s9 = int_to_ptr.vmem [resolvable:$true] %s8
  %11 = dma.vmem_to_smem %s9, 16, [#allocation3], [#allocation2]
  %13 = dma.done [#allocation2], 16
  %14 = sfence
  $region1: #{tpu_custom_call.1} parent=0
    #allocation4 [shape = 'u8[606208]{0}', space=vmem, size = 0x94000, scoped, tag = 'input window, operand 1, single buffered']
    #allocation5 [shape = 's32[1]{0}', space=sflag, size = 0x4, scoped, tag = 'scoped memory for tpu_custom_call.1']
    #allocation6 [shape = 's32[1]{0}', space=sflag, size = 0x4, scoped, tag = 'scoped memory for tpu_custom_call.1']
    #allocation7 [shape = 'u8[606208]{0}', space=vmem, size = 0x94000, scoped, tag = 'output window, operand 0, single buffered']
    %15 = vsyncpa [#allocation5], 0
    %16 = vsyncpa [#allocation6], 0
    // Predicated region
    $region2: #{tpu_custom_call.1} parent=1 // pred_check
      _
    $region3: #{tpu_custom_call.1} parent=1 // pred_check_branch
      %18 = sbr.rel (0) target = $region5
    $region4: #{tpu_custom_call.1} parent=1 // pred_region
      %20 = vsyncadd [#allocation5], 0
      %s21 = sshll.u32 %s1, 4
      %s22 = int_to_ptr.hbm [resolvable:$true] %s21
      %s23 = sshll.u32 [#allocation4], 4
      %s24 = int_to_ptr.vmem [resolvable:$true] %s23
      %29 = dma.hbm_to_vmem [thread:$0]  %s22, 18944, %s24, [#allocation5], 512, 512, 32
    $region5: #{tpu_custom_call.1} parent=1 // pred_fallthru
      _
    // Predicated region
    $region6: #{tpu_custom_call.1} parent=1 // pred_check
      _
    $region7: #{tpu_custom_call.1} parent=1 // pred_check_branch
      %31 = sbr.rel (0) target = $region9
    $region8: #{tpu_custom_call.1} parent=1 // pred_region
      %33 = dma.done [#allocation5], 18944
    $region9: #{tpu_custom_call.1} parent=1 // pred_fallthru
      _
    %v34 = vld [vmem:[#allocation4] sm:$0xff]
    %v35 = vld [vmem:[#allocation4 + $0x8] sm:$0xff]
    %v36 = vld [vmem:[#allocation4 + $0x10] sm:$0xff]
    %v37 = vld [vmem:[#allocation4 + $0x18] sm:$0xff]
    %v38 = vld [vmem:[#allocation4 + $0x20] sm:$0xff]
    %v39 = vld [vmem:[#allocation4 + $0x28] sm:$0xff]
    %v40 = vld [vmem:[#allocation4 + $0x30] sm:$0xff]
    %v41 = vld [vmem:[#allocation4 + $0x38] sm:$0xff]
    %v42 = vld [vmem:[#allocation4 + $0x40] sm:$0xff]
    %v43 = vld [vmem:[#allocation4 + $0x48] sm:$0xff]
    %v44 = vld [vmem:[#allocation4 + $0x50] sm:$0xff]
    %v45 = vld [vmem:[#allocation4 + $0x58] sm:$0xff]
    %v46 = vld [vmem:[#allocation4 + $0x60] sm:$0xff]
    %v47 = vld [vmem:[#allocation4 + $0x68] sm:$0xff]
    %v48 = vld [vmem:[#allocation4 + $0x70] sm:$0xff]
    %v49 = vld [vmem:[#allocation4 + $0x78] sm:$0xff]
    %v50 = vld [vmem:[#allocation4 + $0x80] sm:$0xff]
    %v51 = vld [vmem:[#allocation4 + $0x88] sm:$0xff]
    %v52 = vld [vmem:[#allocation4 + $0x90] sm:$0xff]
    %v53 = vld [vmem:[#allocation4 + $0x98] sm:$0xff]
    %v54 = vld [vmem:[#allocation4 + $0xa0] sm:$0xff]
    %v55 = vld [vmem:[#allocation4 + $0xa8] sm:$0xff]
    %v56 = vld [vmem:[#allocation4 + $0xb0] sm:$0xff]
    %v57 = vld [vmem:[#allocation4 + $0xb8] sm:$0xff]
    %v58 = vld [vmem:[#allocation4 + $0xc0] sm:$0xff]
    %v59 = vld [vmem:[#allocation4 + $0xc8] sm:$0xff]
    %v60 = vld [vmem:[#allocation4 + $0xd0] sm:$0xff]
    %v61 = vld [vmem:[#allocation4 + $0xd8] sm:$0xff]
    %v62 = vld [vmem:[#allocation4 + $0xe0] sm:$0xff]
    %v63 = vld [vmem:[#allocation4 + $0xe8] sm:$0xff]
    %v64 = vld [vmem:[#allocation4 + $0xf0] sm:$0xff]
    %v65 = vld [vmem:[#allocation4 + $0xf8] sm:$0xff]
    %v66 = vld [vmem:[#allocation4 + $0x100] sm:$0xff]
    %v67 = vld [vmem:[#allocation4 + $0x108] sm:$0xff]
    %v68 = vld [vmem:[#allocation4 + $0x110] sm:$0xff]
    %v69 = vld [vmem:[#allocation4 + $0x118] sm:$0xff]
    %v70 = vld [vmem:[#allocation4 + $0x120] sm:$0xff]
    %v71 = vld [vmem:[#allocation4 + $0x128] sm:$0xff]
    %v72 = vld [vmem:[#allocation4 + $0x130] sm:$0xff]
    %v73 = vld [vmem:[#allocation4 + $0x138] sm:$0xff]
    %v74 = vld [vmem:[#allocation4 + $0x140] sm:$0xff]
    %v75 = vld [vmem:[#allocation4 + $0x148] sm:$0xff]
    %v76 = vld [vmem:[#allocation4 + $0x150] sm:$0xff]
    %v77 = vld [vmem:[#allocation4 + $0x158] sm:$0xff]
    %v78 = vld [vmem:[#allocation4 + $0x160] sm:$0xff]
    %v79 = vld [vmem:[#allocation4 + $0x168] sm:$0xff]
    %v80 = vld [vmem:[#allocation4 + $0x170] sm:$0xff]
    %v81 = vld [vmem:[#allocation4 + $0x178] sm:$0xff]
    %v82 = vld [vmem:[#allocation4 + $0x180] sm:$0xff]
    %v83 = vld [vmem:[#allocation4 + $0x188] sm:$0xff]
    %v84 = vld [vmem:[#allocation4 + $0x190] sm:$0xff]
    %v85 = vld [vmem:[#allocation4 + $0x198] sm:$0xff]
    %v86 = vld [vmem:[#allocation4 + $0x1a0] sm:$0xff]
    %v87 = vld [vmem:[#allocation4 + $0x1a8] sm:$0xff]
    %v88 = vld [vmem:[#allocation4 + $0x1b0] sm:$0xff]
    %v89 = vld [vmem:[#allocation4 + $0x1b8] sm:$0xff]
    %v90 = vld [vmem:[#allocation4 + $0x1c0] sm:$0xff]
    %v91 = vld [vmem:[#allocation4 + $0x1c8] sm:$0xff]
    %v92 = vld [vmem:[#allocation4 + $0x1d0] sm:$0xff]
    %v93 = vld [vmem:[#allocation4 + $0x1d8] sm:$0xff]
    %v94 = vld [vmem:[#allocation4 + $0x1e0] sm:$0xff]
    %v95 = vld [vmem:[#allocation4 + $0x1e8] sm:$0xff]
    %v96 = vld [vmem:[#allocation4 + $0x1f0] sm:$0xff]
    %v97 = vld [vmem:[#allocation4 + $0x1f8] sm:$0xff]
    %v98 = vld [vmem:[#allocation4 + $0x200] sm:$0xff]
    %v99 = vld [vmem:[#allocation4 + $0x208] sm:$0xff]
    %v100 = vld [vmem:[#allocation4 + $0x210] sm:$0xff]
    %v101 = vld [vmem:[#allocation4 + $0x218] sm:$0xff]
    %v102 = vld [vmem:[#allocation4 + $0x220] sm:$0xff]
    %v103 = vld [vmem:[#allocation4 + $0x228] sm:$0xff]
    %v104 = vld [vmem:[#allocation4 + $0x230] sm:$0xff]
    %v105 = vld [vmem:[#allocation4 + $0x238] sm:$0xff]
    %v106 = vld [vmem:[#allocation4 + $0x240] sm:$0xff]
    %v107 = vld [vmem:[#allocation4 + $0x248] sm:$0xff]
    %v108 = vld [vmem:[#allocation4 + $0x250] sm:$0xff]
    %v109 = vld [vmem:[#allocation4 + $0x258] sm:$0xff]
    %v110 = vld [vmem:[#allocation4 + $0x260] sm:$0xff]
    %v111 = vld [vmem:[#allocation4 + $0x268] sm:$0xff]
    %v112 = vld [vmem:[#allocation4 + $0x270] sm:$0xff]
    %v113 = vld [vmem:[#allocation4 + $0x278] sm:$0xff]
    %v114 = vld [vmem:[#allocation4 + $0x280] sm:$0xff]
    %v115 = vld [vmem:[#allocation4 + $0x288] sm:$0xff]
    %v116 = vld [vmem:[#allocation4 + $0x290] sm:$0xff]
    %v117 = vld [vmem:[#allocation4 + $0x298] sm:$0xff]
    %v118 = vld [vmem:[#allocation4 + $0x2a0] sm:$0xff]
    %v119 = vld [vmem:[#allocation4 + $0x2a8] sm:$0xff]
    %v120 = vld [vmem:[#allocation4 + $0x2b0] sm:$0xff]
    %v121 = vld [vmem:[#allocation4 + $0x2b8] sm:$0xff]
    %v122 = vld [vmem:[#allocation4 + $0x2c0] sm:$0xff]
    %v123 = vld [vmem:[#allocation4 + $0x2c8] sm:$0xff]
    %v124 = vld [vmem:[#allocation4 + $0x2d0] sm:$0xff]
    %v125 = vld [vmem:[#allocation4 + $0x2d8] sm:$0xff]
    %v126 = vld [vmem:[#allocation4 + $0x2e0] sm:$0xff]
    %v127 = vld [vmem:[#allocation4 + $0x2e8] sm:$0xff]
    %v128 = vld [vmem:[#allocation4 + $0x2f0] sm:$0xff]
    %v129 = vld [vmem:[#allocation4 + $0x2f8] sm:$0xff]
    %v130 = vld [vmem:[#allocation4 + $0x300] sm:$0xff]
    %v131 = vld [vmem:[#allocation4 + $0x308] sm:$0xff]
    %v132 = vld [vmem:[#allocation4 + $0x310] sm:$0xff]
    %v133 = vld [vmem:[#allocation4 + $0x318] sm:$0xff]
    %v134 = vld [vmem:[#allocation4 + $0x320] sm:$0xff]
    %v135 = vld [vmem:[#allocation4 + $0x328] sm:$0xff]
    %v136 = vld [vmem:[#allocation4 + $0x330] sm:$0xff]
    %v137 = vld [vmem:[#allocation4 + $0x338] sm:$0xff]
    %v138 = vld [vmem:[#allocation4 + $0x340] sm:$0xff]
    %v139 = vld [vmem:[#allocation4 + $0x348] sm:$0xff]
    %v140 = vld [vmem:[#allocation4 + $0x350] sm:$0xff]
    %v141 = vld [vmem:[#allocation4 + $0x358] sm:$0xff]
    %v142 = vld [vmem:[#allocation4 + $0x360] sm:$0xff]
    %v143 = vld [vmem:[#allocation4 + $0x368] sm:$0xff]
    %v144 = vld [vmem:[#allocation4 + $0x370] sm:$0xff]
    %v145 = vld [vmem:[#allocation4 + $0x378] sm:$0xff]
    %v146 = vld [vmem:[#allocation4 + $0x380] sm:$0xff]
    %v147 = vld [vmem:[#allocation4 + $0x388] sm:$0xff]
    %v148 = vld [vmem:[#allocation4 + $0x390] sm:$0xff]
    %v149 = vld [vmem:[#allocation4 + $0x398] sm:$0xff]
    %v150 = vld [vmem:[#allocation4 + $0x3a0] sm:$0xff]
    %v151 = vld [vmem:[#allocation4 + $0x3a8] sm:$0xff]
    %v152 = vld [vmem:[#allocation4 + $0x3b0] sm:$0xff]
    %v153 = vld [vmem:[#allocation4 + $0x3b8] sm:$0xff]
    %v154 = vld [vmem:[#allocation4 + $0x3c0] sm:$0xff]
    %v155 = vld [vmem:[#allocation4 + $0x3c8] sm:$0xff]
    %v156 = vld [vmem:[#allocation4 + $0x3d0] sm:$0xff]
    %v157 = vld [vmem:[#allocation4 + $0x3d8] sm:$0xff]
    %v158 = vld [vmem:[#allocation4 + $0x3e0] sm:$0xff]
    %v159 = vld [vmem:[#allocation4 + $0x3e8] sm:$0xff]
    %v160 = vld [vmem:[#allocation4 + $0x3f0] sm:$0xff]
    %v161 = vld [vmem:[#allocation4 + $0x3f8] sm:$0xff]
    %v162 = vld [vmem:[#allocation4 + $0x400] sm:$0xff]
    %v163 = vld [vmem:[#allocation4 + $0x408] sm:$0xff]
    %v164 = vld [vmem:[#allocation4 + $0x410] sm:$0xff]
    %v165 = vld [vmem:[#allocation4 + $0x418] sm:$0xff]
    %v166 = vld [vmem:[#allocation4 + $0x420] sm:$0xff]
    %v167 = vld [vmem:[#allocation4 + $0x428] sm:$0xff]
    %v168 = vld [vmem:[#allocation4 + $0x430] sm:$0xff]
    %v169 = vld [vmem:[#allocation4 + $0x438] sm:$0xff]
    %v170 = vld [vmem:[#allocation4 + $0x440] sm:$0xff]
    %v171 = vld [vmem:[#allocation4 + $0x448] sm:$0xff]
    %v172 = vld [vmem:[#allocation4 + $0x450] sm:$0xff]
    %v173 = vld [vmem:[#allocation4 + $0x458] sm:$0xff]
    %v174 = vld [vmem:[#allocation4 + $0x460] sm:$0xff]
    %v175 = vld [vmem:[#allocation4 + $0x468] sm:$0xff]
    %v176 = vld [vmem:[#allocation4 + $0x470] sm:$0xff]
    %v177 = vld [vmem:[#allocation4 + $0x478] sm:$0xff]
    %v178 = vld [vmem:[#allocation4 + $0x480] sm:$0xff]
    %v179 = vld [vmem:[#allocation4 + $0x488] sm:$0xff]
    %v180 = vld [vmem:[#allocation4 + $0x490] sm:$0xff]
    %v181 = vld [vmem:[#allocation4 + $0x498] sm:$0xff]
    %s182 = sld [smem:[#allocation3]]
    %vm183 = vcmp.gt.f32.partialorder %v34, 0.0
    %vm184 = vcmp.gt.f32.partialorder %v35, 0.0
    %vm185 = vcmp.gt.f32.partialorder %v36, 0.0
    %vm186 = vcmp.gt.f32.partialorder %v37, 0.0
    %vm187 = vcmp.gt.f32.partialorder %v38, 0.0
    %vm188 = vcmp.gt.f32.partialorder %v39, 0.0
    %vm189 = vcmp.gt.f32.partialorder %v40, 0.0
    %vm190 = vcmp.gt.f32.partialorder %v41, 0.0
    %vm191 = vcmp.gt.f32.partialorder %v42, 0.0
    %vm192 = vcmp.gt.f32.partialorder %v43, 0.0
    %vm193 = vcmp.gt.f32.partialorder %v44, 0.0
    %vm194 = vcmp.gt.f32.partialorder %v45, 0.0
    %vm195 = vcmp.gt.f32.partialorder %v46, 0.0
    %vm196 = vcmp.gt.f32.partialorder %v47, 0.0
    %vm197 = vcmp.gt.f32.partialorder %v48, 0.0
    %vm198 = vcmp.gt.f32.partialorder %v49, 0.0
    %vm199 = vcmp.gt.f32.partialorder %v50, 0.0
    %vm200 = vcmp.gt.f32.partialorder %v51, 0.0
    %vm201 = vcmp.gt.f32.partialorder %v52, 0.0
    %vm202 = vcmp.gt.f32.partialorder %v53, 0.0
    %vm203 = vcmp.gt.f32.partialorder %v54, 0.0
    %vm204 = vcmp.gt.f32.partialorder %v55, 0.0
    %vm205 = vcmp.gt.f32.partialorder %v56, 0.0
    %vm206 = vcmp.gt.f32.partialorder %v57, 0.0
    %vm207 = vcmp.gt.f32.partialorder %v58, 0.0
    %vm208 = vcmp.gt.f32.partialorder %v59, 0.0
    %vm209 = vcmp.gt.f32.partialorder %v60, 0.0
    %vm210 = vcmp.gt.f32.partialorder %v61, 0.0
    %vm211 = vcmp.gt.f32.partialorder %v62, 0.0
    %vm212 = vcmp.gt.f32.partialorder %v63, 0.0
    %vm213 = vcmp.gt.f32.partialorder %v64, 0.0
    %vm214 = vcmp.gt.f32.partialorder %v65, 0.0
    %vm215 = vcmp.gt.f32.partialorder %v66, 0.0
    %vm216 = vcmp.gt.f32.partialorder %v67, 0.0
    %vm217 = vcmp.gt.f32.partialorder %v68, 0.0
    %vm218 = vcmp.gt.f32.partialorder %v69, 0.0
    %vm219 = vcmp.gt.f32.partialorder %v70, 0.0
    %vm220 = vcmp.gt.f32.partialorder %v71, 0.0
    %vm221 = vcmp.gt.f32.partialorder %v72, 0.0
    %vm222 = vcmp.gt.f32.partialorder %v73, 0.0
    %vm223 = vcmp.gt.f32.partialorder %v74, 0.0
    %vm224 = vcmp.gt.f32.partialorder %v75, 0.0
    %vm225 = vcmp.gt.f32.partialorder %v76, 0.0
    %vm226 = vcmp.gt.f32.partialorder %v77, 0.0
    %vm227 = vcmp.gt.f32.partialorder %v78, 0.0
    %vm228 = vcmp.gt.f32.partialorder %v79, 0.0
    %vm229 = vcmp.gt.f32.partialorder %v80, 0.0
    %vm230 = vcmp.gt.f32.partialorder %v81, 0.0
    %vm231 = vcmp.gt.f32.partialorder %v82, 0.0
    %vm232 = vcmp.gt.f32.partialorder %v83, 0.0
    %vm233 = vcmp.gt.f32.partialorder %v84, 0.0
    %vm234 = vcmp.gt.f32.partialorder %v85, 0.0
    %vm235 = vcmp.gt.f32.partialorder %v86, 0.0
    %vm236 = vcmp.gt.f32.partialorder %v87, 0.0
    %vm237 = vcmp.gt.f32.partialorder %v88, 0.0
    %vm238 = vcmp.gt.f32.partialorder %v89, 0.0
    %vm239 = vcmp.gt.f32.partialorder %v90, 0.0
    %vm240 = vcmp.gt.f32.partialorder %v91, 0.0
    %vm241 = vcmp.gt.f32.partialorder %v92, 0.0
    %vm242 = vcmp.gt.f32.partialorder %v93, 0.0
    %vm243 = vcmp.gt.f32.partialorder %v94, 0.0
    %vm244 = vcmp.gt.f32.partialorder %v95, 0.0
    %vm245 = vcmp.gt.f32.partialorder %v96, 0.0
    %vm246 = vcmp.gt.f32.partialorder %v97, 0.0
    %vm247 = vcmp.gt.f32.partialorder %v98, 0.0
    %vm248 = vcmp.gt.f32.partialorder %v99, 0.0
    %vm249 = vcmp.gt.f32.partialorder %v100, 0.0
    %vm250 = vcmp.gt.f32.partialorder %v101, 0.0
    %vm251 = vcmp.gt.f32.partialorder %v102, 0.0
    %vm252 = vcmp.gt.f32.partialorder %v103, 0.0
    %vm253 = vcmp.gt.f32.partialorder %v104, 0.0
    %vm254 = vcmp.gt.f32.partialorder %v105, 0.0
    %vm255 = vcmp.gt.f32.partialorder %v106, 0.0
    %vm256 = vcmp.gt.f32.partialorder %v107, 0.0
    %vm257 = vcmp.gt.f32.partialorder %v108, 0.0
    %vm258 = vcmp.gt.f32.partialorder %v109, 0.0
    %vm259 = vcmp.gt.f32.partialorder %v110, 0.0
    %vm260 = vcmp.gt.f32.partialorder %v111, 0.0
    %vm261 = vcmp.gt.f32.partialorder %v112, 0.0
    %vm262 = vcmp.gt.f32.partialorder %v113, 0.0
    %vm263 = vcmp.gt.f32.partialorder %v114, 0.0
    %vm264 = vcmp.gt.f32.partialorder %v115, 0.0
    %vm265 = vcmp.gt.f32.partialorder %v116, 0.0
    %vm266 = vcmp.gt.f32.partialorder %v117, 0.0
    %vm267 = vcmp.gt.f32.partialorder %v118, 0.0
    %vm268 = vcmp.gt.f32.partialorder %v119, 0.0
    %vm269 = vcmp.gt.f32.partialorder %v120, 0.0
    %vm270 = vcmp.gt.f32.partialorder %v121, 0.0
    %vm271 = vcmp.gt.f32.partialorder %v122, 0.0
    %vm272 = vcmp.gt.f32.partialorder %v123, 0.0
    %vm273 = vcmp.gt.f32.partialorder %v124, 0.0
    %vm274 = vcmp.gt.f32.partialorder %v125, 0.0
    %vm275 = vcmp.gt.f32.partialorder %v126, 0.0
    %vm276 = vcmp.gt.f32.partialorder %v127, 0.0
    %vm277 = vcmp.gt.f32.partialorder %v128, 0.0
    %vm278 = vcmp.gt.f32.partialorder %v129, 0.0
    %vm279 = vcmp.gt.f32.partialorder %v130, 0.0
    %vm280 = vcmp.gt.f32.partialorder %v131, 0.0
    %vm281 = vcmp.gt.f32.partialorder %v132, 0.0
    %vm282 = vcmp.gt.f32.partialorder %v133, 0.0
    %vm283 = vcmp.gt.f32.partialorder %v134, 0.0
    %vm284 = vcmp.gt.f32.partialorder %v135, 0.0
    %vm285 = vcmp.gt.f32.partialorder %v136, 0.0
    %vm286 = vcmp.gt.f32.partialorder %v137, 0.0
    %vm287 = vcmp.gt.f32.partialorder %v138, 0.0
    %vm288 = vcmp.gt.f32.partialorder %v139, 0.0
    %vm289 = vcmp.gt.f32.partialorder %v140, 0.0
    %vm290 = vcmp.gt.f32.partialorder %v141, 0.0
    %vm291 = vcmp.gt.f32.partialorder %v142, 0.0
    %vm292 = vcmp.gt.f32.partialorder %v143, 0.0
    %vm293 = vcmp.gt.f32.partialorder %v144, 0.0
    %vm294 = vcmp.gt.f32.partialorder %v145, 0.0
    %vm295 = vcmp.gt.f32.partialorder %v146, 0.0
    %vm296 = vcmp.gt.f32.partialorder %v147, 0.0
    %vm297 = vcmp.gt.f32.partialorder %v148, 0.0
    %vm298 = vcmp.gt.f32.partialorder %v149, 0.0
    %vm299 = vcmp.gt.f32.partialorder %v150, 0.0
    %vm300 = vcmp.gt.f32.partialorder %v151, 0.0
    %vm301 = vcmp.gt.f32.partialorder %v152, 0.0
    %vm302 = vcmp.gt.f32.partialorder %v153, 0.0
    %vm303 = vcmp.gt.f32.partialorder %v154, 0.0
    %vm304 = vcmp.gt.f32.partialorder %v155, 0.0
    %vm305 = vcmp.gt.f32.partialorder %v156, 0.0
    %vm306 = vcmp.gt.f32.partialorder %v157, 0.0
    %vm307 = vcmp.gt.f32.partialorder %v158, 0.0
    %vm308 = vcmp.gt.f32.partialorder %v159, 0.0
    %vm309 = vcmp.gt.f32.partialorder %v160, 0.0
    %vm310 = vcmp.gt.f32.partialorder %v161, 0.0
    %vm311 = vcmp.gt.f32.partialorder %v162, 0.0
    %vm312 = vcmp.gt.f32.partialorder %v163, 0.0
    %vm313 = vcmp.gt.f32.partialorder %v164, 0.0
    %vm314 = vcmp.gt.f32.partialorder %v165, 0.0
    %vm315 = vcmp.gt.f32.partialorder %v166, 0.0
    %vm316 = vcmp.gt.f32.partialorder %v167, 0.0
    %vm317 = vcmp.gt.f32.partialorder %v168, 0.0
    %vm318 = vcmp.gt.f32.partialorder %v169, 0.0
    %vm319 = vcmp.gt.f32.partialorder %v170, 0.0
    %vm320 = vcmp.gt.f32.partialorder %v171, 0.0
    %vm321 = vcmp.gt.f32.partialorder %v172, 0.0
    %vm322 = vcmp.gt.f32.partialorder %v173, 0.0
    %vm323 = vcmp.gt.f32.partialorder %v174, 0.0
    %vm324 = vcmp.gt.f32.partialorder %v175, 0.0
    %vm325 = vcmp.gt.f32.partialorder %v176, 0.0
    %vm326 = vcmp.gt.f32.partialorder %v177, 0.0
    %vm327 = vcmp.gt.f32.partialorder %v178, 0.0
    %vm328 = vcmp.gt.f32.partialorder %v179, 0.0
    %vm329 = vcmp.gt.f32.partialorder %v180, 0.0
    %vm330 = vcmp.gt.f32.partialorder %v181, 0.0
    %v331 = vstv %s182
    %v332 = vmul.f32 %v331, %v34
    %v333 = vmul.f32 %v331, %v35
    %v334 = vmul.f32 %v331, %v36
    %v335 = vmul.f32 %v331, %v37
    %v336 = vmul.f32 %v331, %v38
    %v337 = vmul.f32 %v331, %v39
    %v338 = vmul.f32 %v331, %v40
    %v339 = vmul.f32 %v331, %v41
    %v340 = vmul.f32 %v331, %v42
    %v341 = vmul.f32 %v331, %v43
    %v342 = vmul.f32 %v331, %v44
    %v343 = vmul.f32 %v331, %v45
    %v344 = vmul.f32 %v331, %v46
    %v345 = vmul.f32 %v331, %v47
    %v346 = vmul.f32 %v331, %v48
    %v347 = vmul.f32 %v331, %v49
    %v348 = vmul.f32 %v331, %v50
    %v349 = vmul.f32 %v331, %v51
    %v350 = vmul.f32 %v331, %v52
    %v351 = vmul.f32 %v331, %v53
    %v352 = vmul.f32 %v331, %v54
    %v353 = vmul.f32 %v331, %v55
    %v354 = vmul.f32 %v331, %v56
    %v355 = vmul.f32 %v331, %v57
    %v356 = vmul.f32 %v331, %v58
    %v357 = vmul.f32 %v331, %v59
    %v358 = vmul.f32 %v331, %v60
    %v359 = vmul.f32 %v331, %v61
    %v360 = vmul.f32 %v331, %v62
    %v361 = vmul.f32 %v331, %v63
    %v362 = vmul.f32 %v331, %v64
    %v363 = vmul.f32 %v331, %v65
    %v364 = vmul.f32 %v331, %v66
    %v365 = vmul.f32 %v331, %v67
    %v366 = vmul.f32 %v331, %v68
    %v367 = vmul.f32 %v331, %v69
    %v368 = vmul.f32 %v331, %v70
    %v369 = vmul.f32 %v331, %v71
    %v370 = vmul.f32 %v331, %v72
    %v371 = vmul.f32 %v331, %v73
    %v372 = vmul.f32 %v331, %v74
    %v373 = vmul.f32 %v331, %v75
    %v374 = vmul.f32 %v331, %v76
    %v375 = vmul.f32 %v331, %v77
    %v376 = vmul.f32 %v331, %v78
    %v377 = vmul.f32 %v331, %v79
    %v378 = vmul.f32 %v331, %v80
    %v379 = vmul.f32 %v331, %v81
    %v380 = vmul.f32 %v331, %v82
    %v381 = vmul.f32 %v331, %v83
    %v382 = vmul.f32 %v331, %v84
    %v383 = vmul.f32 %v331, %v85
    %v384 = vmul.f32 %v331, %v86
    %v385 = vmul.f32 %v331, %v87
    %v386 = vmul.f32 %v331, %v88
    %v387 = vmul.f32 %v331, %v89
    %v388 = vmul.f32 %v331, %v90
    %v389 = vmul.f32 %v331, %v91
    %v390 = vmul.f32 %v331, %v92
    %v391 = vmul.f32 %v331, %v93
    %v392 = vmul.f32 %v331, %v94
    %v393 = vmul.f32 %v331, %v95
    %v394 = vmul.f32 %v331, %v96
    %v395 = vmul.f32 %v331, %v97
    %v396 = vmul.f32 %v331, %v98
    %v397 = vmul.f32 %v331, %v99
    %v398 = vmul.f32 %v331, %v100
    %v399 = vmul.f32 %v331, %v101
    %v400 = vmul.f32 %v331, %v102
    %v401 = vmul.f32 %v331, %v103
    %v402 = vmul.f32 %v331, %v104
    %v403 = vmul.f32 %v331, %v105
    %v404 = vmul.f32 %v331, %v106
    %v405 = vmul.f32 %v331, %v107
    %v406 = vmul.f32 %v331, %v108
    %v407 = vmul.f32 %v331, %v109
    %v408 = vmul.f32 %v331, %v110
    %v409 = vmul.f32 %v331, %v111
    %v410 = vmul.f32 %v331, %v112
    %v411 = vmul.f32 %v331, %v113
    %v412 = vmul.f32 %v331, %v114
    %v413 = vmul.f32 %v331, %v115
    %v414 = vmul.f32 %v331, %v116
    %v415 = vmul.f32 %v331, %v117
    %v416 = vmul.f32 %v331, %v118
    %v417 = vmul.f32 %v331, %v119
    %v418 = vmul.f32 %v331, %v120
    %v419 = vmul.f32 %v331, %v121
    %v420 = vmul.f32 %v331, %v122
    %v421 = vmul.f32 %v331, %v123
    %v422 = vmul.f32 %v331, %v124
    %v423 = vmul.f32 %v331, %v125
    %v424 = vmul.f32 %v331, %v126
    %v425 = vmul.f32 %v331, %v127
    %v426 = vmul.f32 %v331, %v128
    %v427 = vmul.f32 %v331, %v129
    %v428 = vmul.f32 %v331, %v130
    %v429 = vmul.f32 %v331, %v131
    %v430 = vmul.f32 %v331, %v132
    %v431 = vmul.f32 %v331, %v133
    %v432 = vmul.f32 %v331, %v134
    %v433 = vmul.f32 %v331, %v135
    %v434 = vmul.f32 %v331, %v136
    %v435 = vmul.f32 %v331, %v137
    %v436 = vmul.f32 %v331, %v138
    %v437 = vmul.f32 %v331, %v139
    %v438 = vmul.f32 %v331, %v140
    %v439 = vmul.f32 %v331, %v141
    %v440 = vmul.f32 %v331, %v142
    %v441 = vmul.f32 %v331, %v143
    %v442 = vmul.f32 %v331, %v144
    %v443 = vmul.f32 %v331, %v145
    %v444 = vmul.f32 %v331, %v146
    %v445 = vmul.f32 %v331, %v147
    %v446 = vmul.f32 %v331, %v148
    %v447 = vmul.f32 %v331, %v149
    %v448 = vmul.f32 %v331, %v150
    %v449 = vmul.f32 %v331, %v151
    %v450 = vmul.f32 %v331, %v152
    %v451 = vmul.f32 %v331, %v153
    %v452 = vmul.f32 %v331, %v154
    %v453 = vmul.f32 %v331, %v155
    %v454 = vmul.f32 %v331, %v156
    %v455 = vmul.f32 %v331, %v157
    %v456 = vmul.f32 %v331, %v158
    %v457 = vmul.f32 %v331, %v159
    %v458 = vmul.f32 %v331, %v160
    %v459 = vmul.f32 %v331, %v161
    %v460 = vmul.f32 %v331, %v162
    %v461 = vmul.f32 %v331, %v163
    %v462 = vmul.f32 %v331, %v164
    %v463 = vmul.f32 %v331, %v165
    %v464 = vmul.f32 %v331, %v166
    %v465 = vmul.f32 %v331, %v167
    %v466 = vmul.f32 %v331, %v168
    %v467 = vmul.f32 %v331, %v169
    %v468 = vmul.f32 %v331, %v170
    %v469 = vmul.f32 %v331, %v171
    %v470 = vmul.f32 %v331, %v172
    %v471 = vmul.f32 %v331, %v173
    %v472 = vmul.f32 %v331, %v174
    %v473 = vmul.f32 %v331, %v175
    %v474 = vmul.f32 %v331, %v176
    %v475 = vmul.f32 %v331, %v177
    %v476 = vmul.f32 %v331, %v178
    %v477 = vmul.f32 %v331, %v179
    %v478 = vmul.f32 %v331, %v180
    %v479 = vmul.f32 %v331, %v181
    %v480 = vsel %vm183, %v34, %v332
    %v481 = vsel %vm184, %v35, %v333
    %v482 = vsel %vm185, %v36, %v334
    %v483 = vsel %vm186, %v37, %v335
    %v484 = vsel %vm187, %v38, %v336
    %v485 = vsel %vm188, %v39, %v337
    %v486 = vsel %vm189, %v40, %v338
    %v487 = vsel %vm190, %v41, %v339
    %v488 = vsel %vm191, %v42, %v340
    %v489 = vsel %vm192, %v43, %v341
    %v490 = vsel %vm193, %v44, %v342
    %v491 = vsel %vm194, %v45, %v343
    %v492 = vsel %vm195, %v46, %v344
    %v493 = vsel %vm196, %v47, %v345
    %v494 = vsel %vm197, %v48, %v346
    %v495 = vsel %vm198, %v49, %v347
    %v496 = vsel %vm199, %v50, %v348
    %v497 = vsel %vm200, %v51, %v349
    %v498 = vsel %vm201, %v52, %v350
    %v499 = vsel %vm202, %v53, %v351
    %v500 = vsel %vm203, %v54, %v352
    %v501 = vsel %vm204, %v55, %v353
    %v502 = vsel %vm205, %v56, %v354
    %v503 = vsel %vm206, %v57, %v355
    %v504 = vsel %vm207, %v58, %v356
    %v505 = vsel %vm208, %v59, %v357
    %v506 = vsel %vm209, %v60, %v358
    %v507 = vsel %vm210, %v61, %v359
    %v508 = vsel %vm211, %v62, %v360
    %v509 = vsel %vm212, %v63, %v361
    %v510 = vsel %vm213, %v64, %v362
    %v511 = vsel %vm214, %v65, %v363
    %v512 = vsel %vm215, %v66, %v364
    %v513 = vsel %vm216, %v67, %v365
    %v514 = vsel %vm217, %v68, %v366
    %v515 = vsel %vm218, %v69, %v367
    %v516 = vsel %vm219, %v70, %v368
    %v517 = vsel %vm220, %v71, %v369
    %v518 = vsel %vm221, %v72, %v370
    %v519 = vsel %vm222, %v73, %v371
    %v520 = vsel %vm223, %v74, %v372
    %v521 = vsel %vm224, %v75, %v373
    %v522 = vsel %vm225, %v76, %v374
    %v523 = vsel %vm226, %v77, %v375
    %v524 = vsel %vm227, %v78, %v376
    %v525 = vsel %vm228, %v79, %v377
    %v526 = vsel %vm229, %v80, %v378
    %v527 = vsel %vm230, %v81, %v379
    %v528 = vsel %vm231, %v82, %v380
    %v529 = vsel %vm232, %v83, %v381
    %v530 = vsel %vm233, %v84, %v382
    %v531 = vsel %vm234, %v85, %v383
    %v532 = vsel %vm235, %v86, %v384
    %v533 = vsel %vm236, %v87, %v385
    %v534 = vsel %vm237, %v88, %v386
    %v535 = vsel %vm238, %v89, %v387
    %v536 = vsel %vm239, %v90, %v388
    %v537 = vsel %vm240, %v91, %v389
    %v538 = vsel %vm241, %v92, %v390
    %v539 = vsel %vm242, %v93, %v391
    %v540 = vsel %vm243, %v94, %v392
    %v541 = vsel %vm244, %v95, %v393
    %v542 = vsel %vm245, %v96, %v394
    %v543 = vsel %vm246, %v97, %v395
    %v544 = vsel %vm247, %v98, %v396
    %v545 = vsel %vm248, %v99, %v397
    %v546 = vsel %vm249, %v100, %v398
    %v547 = vsel %vm250, %v101, %v399
    %v548 = vsel %vm251, %v102, %v400
    %v549 = vsel %vm252, %v103, %v401
    %v550 = vsel %vm253, %v104, %v402
    %v551 = vsel %vm254, %v105, %v403
    %v552 = vsel %vm255, %v106, %v404
    %v553 = vsel %vm256, %v107, %v405
    %v554 = vsel %vm257, %v108, %v406
    %v555 = vsel %vm258, %v109, %v407
    %v556 = vsel %vm259, %v110, %v408
    %v557 = vsel %vm260, %v111, %v409
    %v558 = vsel %vm261, %v112, %v410
    %v559 = vsel %vm262, %v113, %v411
    %v560 = vsel %vm263, %v114, %v412
    %v561 = vsel %vm264, %v115, %v413
    %v562 = vsel %vm265, %v116, %v414
    %v563 = vsel %vm266, %v117, %v415
    %v564 = vsel %vm267, %v118, %v416
    %v565 = vsel %vm268, %v119, %v417
    %v566 = vsel %vm269, %v120, %v418
    %v567 = vsel %vm270, %v121, %v419
    %v568 = vsel %vm271, %v122, %v420
    %v569 = vsel %vm272, %v123, %v421
    %v570 = vsel %vm273, %v124, %v422
    %v571 = vsel %vm274, %v125, %v423
    %v572 = vsel %vm275, %v126, %v424
    %v573 = vsel %vm276, %v127, %v425
    %v574 = vsel %vm277, %v128, %v426
    %v575 = vsel %vm278, %v129, %v427
    %v576 = vsel %vm279, %v130, %v428
    %v577 = vsel %vm280, %v131, %v429
    %v578 = vsel %vm281, %v132, %v430
    %v579 = vsel %vm282, %v133, %v431
    %v580 = vsel %vm283, %v134, %v432
    %v581 = vsel %vm284, %v135, %v433
    %v582 = vsel %vm285, %v136, %v434
    %v583 = vsel %vm286, %v137, %v435
    %v584 = vsel %vm287, %v138, %v436
    %v585 = vsel %vm288, %v139, %v437
    %v586 = vsel %vm289, %v140, %v438
    %v587 = vsel %vm290, %v141, %v439
    %v588 = vsel %vm291, %v142, %v440
    %v589 = vsel %vm292, %v143, %v441
    %v590 = vsel %vm293, %v144, %v442
    %v591 = vsel %vm294, %v145, %v443
    %v592 = vsel %vm295, %v146, %v444
    %v593 = vsel %vm296, %v147, %v445
    %v594 = vsel %vm297, %v148, %v446
    %v595 = vsel %vm298, %v149, %v447
    %v596 = vsel %vm299, %v150, %v448
    %v597 = vsel %vm300, %v151, %v449
    %v598 = vsel %vm301, %v152, %v450
    %v599 = vsel %vm302, %v153, %v451
    %v600 = vsel %vm303, %v154, %v452
    %v601 = vsel %vm304, %v155, %v453
    %v602 = vsel %vm305, %v156, %v454
    %v603 = vsel %vm306, %v157, %v455
    %v604 = vsel %vm307, %v158, %v456
    %v605 = vsel %vm308, %v159, %v457
    %v606 = vsel %vm309, %v160, %v458
    %v607 = vsel %vm310, %v161, %v459
    %v608 = vsel %vm311, %v162, %v460
    %v609 = vsel %vm312, %v163, %v461
    %v610 = vsel %vm313, %v164, %v462
    %v611 = vsel %vm314, %v165, %v463
    %v612 = vsel %vm315, %v166, %v464
    %v613 = vsel %vm316, %v167, %v465
    %v614 = vsel %vm317, %v168, %v466
    %v615 = vsel %vm318, %v169, %v467
    %v616 = vsel %vm319, %v170, %v468
    %v617 = vsel %vm320, %v171, %v469
    %v618 = vsel %vm321, %v172, %v470
    %v619 = vsel %vm322, %v173, %v471
    %v620 = vsel %vm323, %v174, %v472
    %v621 = vsel %vm324, %v175, %v473
    %v622 = vsel %vm325, %v176, %v474
    %v623 = vsel %vm326, %v177, %v475
    %v624 = vsel %vm327, %v178, %v476
    %v625 = vsel %vm328, %v179, %v477
    %v626 = vsel %vm329, %v180, %v478
    %v627 = vsel %vm330, %v181, %v479
    %s628 = sld [smem:[#allocation3 + $0x1]]
    %vm629 = vcmp.gt.f32.partialorder %v480, 0.0
    %vm630 = vcmp.gt.f32.partialorder %v481, 0.0
    %vm631 = vcmp.gt.f32.partialorder %v482, 0.0
    %vm632 = vcmp.gt.f32.partialorder %v483, 0.0
    %vm633 = vcmp.gt.f32.partialorder %v484, 0.0
    %vm634 = vcmp.gt.f32.partialorder %v485, 0.0
    %vm635 = vcmp.gt.f32.partialorder %v486, 0.0
    %vm636 = vcmp.gt.f32.partialorder %v487, 0.0
    %vm637 = vcmp.gt.f32.partialorder %v488, 0.0
    %vm638 = vcmp.gt.f32.partialorder %v489, 0.0
    %vm639 = vcmp.gt.f32.partialorder %v490, 0.0
    %vm640 = vcmp.gt.f32.partialorder %v491, 0.0
    %vm641 = vcmp.gt.f32.partialorder %v492, 0.0
    %vm642 = vcmp.gt.f32.partialorder %v493, 0.0
    %vm643 = vcmp.gt.f32.partialorder %v494, 0.0
    %vm644 = vcmp.gt.f32.partialorder %v495, 0.0
    %vm645 = vcmp.gt.f32.partialorder %v496, 0.0
    %vm646 = vcmp.gt.f32.partialorder %v497, 0.0
    %vm647 = vcmp.gt.f32.partialorder %v498, 0.0
    %vm648 = vcmp.gt.f32.partialorder %v499, 0.0
    %vm649 = vcmp.gt.f32.partialorder %v500, 0.0
    %vm650 = vcmp.gt.f32.partialorder %v501, 0.0
    %vm651 = vcmp.gt.f32.partialorder %v502, 0.0
    %vm652 = vcmp.gt.f32.partialorder %v503, 0.0
    %vm653 = vcmp.gt.f32.partialorder %v504, 0.0
    %vm654 = vcmp.gt.f32.partialorder %v505, 0.0
    %vm655 = vcmp.gt.f32.partialorder %v506, 0.0
    %vm656 = vcmp.gt.f32.partialorder %v507, 0.0
    %vm657 = vcmp.gt.f32.partialorder %v508, 0.0
    %vm658 = vcmp.gt.f32.partialorder %v509, 0.0
    %vm659 = vcmp.gt.f32.partialorder %v510, 0.0
    %vm660 = vcmp.gt.f32.partialorder %v511, 0.0
    %vm661 = vcmp.gt.f32.partialorder %v512, 0.0
    %vm662 = vcmp.gt.f32.partialorder %v513, 0.0
    %vm663 = vcmp.gt.f32.partialorder %v514, 0.0
    %vm664 = vcmp.gt.f32.partialorder %v515, 0.0
    %vm665 = vcmp.gt.f32.partialorder %v516, 0.0
    %vm666 = vcmp.gt.f32.partialorder %v517, 0.0
    %vm667 = vcmp.gt.f32.partialorder %v518, 0.0
    %vm668 = vcmp.gt.f32.partialorder %v519, 0.0
    %vm669 = vcmp.gt.f32.partialorder %v520, 0.0
    %vm670 = vcmp.gt.f32.partialorder %v521, 0.0
    %vm671 = vcmp.gt.f32.partialorder %v522, 0.0
    %vm672 = vcmp.gt.f32.partialorder %v523, 0.0
    %vm673 = vcmp.gt.f32.partialorder %v524, 0.0
    %vm674 = vcmp.gt.f32.partialorder %v525, 0.0
    %vm675 = vcmp.gt.f32.partialorder %v526, 0.0
    %vm676 = vcmp.gt.f32.partialorder %v527, 0.0
    %vm677 = vcmp.gt.f32.partialorder %v528, 0.0
    %vm678 = vcmp.gt.f32.partialorder %v529, 0.0
    %vm679 = vcmp.gt.f32.partialorder %v530, 0.0
    %vm680 = vcmp.gt.f32.partialorder %v531, 0.0
    %vm681 = vcmp.gt.f32.partialorder %v532, 0.0
    %vm682 = vcmp.gt.f32.partialorder %v533, 0.0
    %vm683 = vcmp.gt.f32.partialorder %v534, 0.0
    %vm684 = vcmp.gt.f32.partialorder %v535, 0.0
    %vm685 = vcmp.gt.f32.partialorder %v536, 0.0
    %vm686 = vcmp.gt.f32.partialorder %v537, 0.0
    %vm687 = vcmp.gt.f32.partialorder %v538, 0.0
    %vm688 = vcmp.gt.f32.partialorder %v539, 0.0
    %vm689 = vcmp.gt.f32.partialorder %v540, 0.0
    %vm690 = vcmp.gt.f32.partialorder %v541, 0.0
    %vm691 = vcmp.gt.f32.partialorder %v542, 0.0
    %vm692 = vcmp.gt.f32.partialorder %v543, 0.0
    %vm693 = vcmp.gt.f32.partialorder %v544, 0.0
    %vm694 = vcmp.gt.f32.partialorder %v545, 0.0
    %vm695 = vcmp.gt.f32.partialorder %v546, 0.0
    %vm696 = vcmp.gt.f32.partialorder %v547, 0.0
    %vm697 = vcmp.gt.f32.partialorder %v548, 0.0
    %vm698 = vcmp.gt.f32.partialorder %v549, 0.0
    %vm699 = vcmp.gt.f32.partialorder %v550, 0.0
    %vm700 = vcmp.gt.f32.partialorder %v551, 0.0
    %vm701 = vcmp.gt.f32.partialorder %v552, 0.0
    %vm702 = vcmp.gt.f32.partialorder %v553, 0.0
    %vm703 = vcmp.gt.f32.partialorder %v554, 0.0
    %vm704 = vcmp.gt.f32.partialorder %v555, 0.0
    %vm705 = vcmp.gt.f32.partialorder %v556, 0.0
    %vm706 = vcmp.gt.f32.partialorder %v557, 0.0
    %vm707 = vcmp.gt.f32.partialorder %v558, 0.0
    %vm708 = vcmp.gt.f32.partialorder %v559, 0.0
    %vm709 = vcmp.gt.f32.partialorder %v560, 0.0
    %vm710 = vcmp.gt.f32.partialorder %v561, 0.0
    %vm711 = vcmp.gt.f32.partialorder %v562, 0.0
    %vm712 = vcmp.gt.f32.partialorder %v563, 0.0
    %vm713 = vcmp.gt.f32.partialorder %v564, 0.0
    %vm714 = vcmp.gt.f32.partialorder %v565, 0.0
    %vm715 = vcmp.gt.f32.partialorder %v566, 0.0
    %vm716 = vcmp.gt.f32.partialorder %v567, 0.0
    %vm717 = vcmp.gt.f32.partialorder %v568, 0.0
    %vm718 = vcmp.gt.f32.partialorder %v569, 0.0
    %vm719 = vcmp.gt.f32.partialorder %v570, 0.0
    %vm720 = vcmp.gt.f32.partialorder %v571, 0.0
    %vm721 = vcmp.gt.f32.partialorder %v572, 0.0
    %vm722 = vcmp.gt.f32.partialorder %v573, 0.0
    %vm723 = vcmp.gt.f32.partialorder %v574, 0.0
    %vm724 = vcmp.gt.f32.partialorder %v575, 0.0
    %vm725 = vcmp.gt.f32.partialorder %v576, 0.0
    %vm726 = vcmp.gt.f32.partialorder %v577, 0.0
    %vm727 = vcmp.gt.f32.partialorder %v578, 0.0
    %vm728 = vcmp.gt.f32.partialorder %v579, 0.0
    %vm729 = vcmp.gt.f32.partialorder %v580, 0.0
    %vm730 = vcmp.gt.f32.partialorder %v581, 0.0
    %vm731 = vcmp.gt.f32.partialorder %v582, 0.0
    %vm732 = vcmp.gt.f32.partialorder %v583, 0.0
    %vm733 = vcmp.gt.f32.partialorder %v584, 0.0
    %vm734 = vcmp.gt.f32.partialorder %v585, 0.0
    %vm735 = vcmp.gt.f32.partialorder %v586, 0.0
    %vm736 = vcmp.gt.f32.partialorder %v587, 0.0
    %vm737 = vcmp.gt.f32.partialorder %v588, 0.0
    %vm738 = vcmp.gt.f32.partialorder %v589, 0.0
    %vm739 = vcmp.gt.f32.partialorder %v590, 0.0
    %vm740 = vcmp.gt.f32.partialorder %v591, 0.0
    %vm741 = vcmp.gt.f32.partialorder %v592, 0.0
    %vm742 = vcmp.gt.f32.partialorder %v593, 0.0
    %vm743 = vcmp.gt.f32.partialorder %v594, 0.0
    %vm744 = vcmp.gt.f32.partialorder %v595, 0.0
    %vm745 = vcmp.gt.f32.partialorder %v596, 0.0
    %vm746 = vcmp.gt.f32.partialorder %v597, 0.0
    %vm747 = vcmp.gt.f32.partialorder %v598, 0.0
    %vm748 = vcmp.gt.f32.partialorder %v599, 0.0
    %vm749 = vcmp.gt.f32.partialorder %v600, 0.0
    %vm750 = vcmp.gt.f32.partialorder %v601, 0.0
    %vm751 = vcmp.gt.f32.partialorder %v602, 0.0
    %vm752 = vcmp.gt.f32.partialorder %v603, 0.0
    %vm753 = vcmp.gt.f32.partialorder %v604, 0.0
    %vm754 = vcmp.gt.f32.partialorder %v605, 0.0
    %vm755 = vcmp.gt.f32.partialorder %v606, 0.0
    %vm756 = vcmp.gt.f32.partialorder %v607, 0.0
    %vm757 = vcmp.gt.f32.partialorder %v608, 0.0
    %vm758 = vcmp.gt.f32.partialorder %v609, 0.0
    %vm759 = vcmp.gt.f32.partialorder %v610, 0.0
    %vm760 = vcmp.gt.f32.partialorder %v611, 0.0
    %vm761 = vcmp.gt.f32.partialorder %v612, 0.0
    %vm762 = vcmp.gt.f32.partialorder %v613, 0.0
    %vm763 = vcmp.gt.f32.partialorder %v614, 0.0
    %vm764 = vcmp.gt.f32.partialorder %v615, 0.0
    %vm765 = vcmp.gt.f32.partialorder %v616, 0.0
    %vm766 = vcmp.gt.f32.partialorder %v617, 0.0
    %vm767 = vcmp.gt.f32.partialorder %v618, 0.0
    %vm768 = vcmp.gt.f32.partialorder %v619, 0.0
    %vm769 = vcmp.gt.f32.partialorder %v620, 0.0
    %vm770 = vcmp.gt.f32.partialorder %v621, 0.0
    %vm771 = vcmp.gt.f32.partialorder %v622, 0.0
    %vm772 = vcmp.gt.f32.partialorder %v623, 0.0
    %vm773 = vcmp.gt.f32.partialorder %v624, 0.0
    %vm774 = vcmp.gt.f32.partialorder %v625, 0.0
    %vm775 = vcmp.gt.f32.partialorder %v626, 0.0
    %vm776 = vcmp.gt.f32.partialorder %v627, 0.0
    %v777 = vstv %s628
    %v778 = vmul.f32 %v777, %v480
    %v779 = vmul.f32 %v777, %v481
    %v780 = vmul.f32 %v777, %v482
    %v781 = vmul.f32 %v777, %v483
    %v782 = vmul.f32 %v777, %v484
    %v783 = vmul.f32 %v777, %v485
    %v784 = vmul.f32 %v777, %v486
    %v785 = vmul.f32 %v777, %v487
    %v786 = vmul.f32 %v777, %v488
    %v787 = vmul.f32 %v777, %v489
    %v788 = vmul.f32 %v777, %v490
    %v789 = vmul.f32 %v777, %v491
    %v790 = vmul.f32 %v777, %v492
    %v791 = vmul.f32 %v777, %v493
    %v792 = vmul.f32 %v777, %v494
    %v793 = vmul.f32 %v777, %v495
    %v794 = vmul.f32 %v777, %v496
    %v795 = vmul.f32 %v777, %v497
    %v796 = vmul.f32 %v777, %v498
    %v797 = vmul.f32 %v777, %v499
    %v798 = vmul.f32 %v777, %v500
    %v799 = vmul.f32 %v777, %v501
    %v800 = vmul.f32 %v777, %v502
    %v801 = vmul.f32 %v777, %v503
    %v802 = vmul.f32 %v777, %v504
    %v803 = vmul.f32 %v777, %v505
    %v804 = vmul.f32 %v777, %v506
    %v805 = vmul.f32 %v777, %v507
    %v806 = vmul.f32 %v777, %v508
    %v807 = vmul.f32 %v777, %v509
    %v808 = vmul.f32 %v777, %v510
    %v809 = vmul.f32 %v777, %v511
    %v810 = vmul.f32 %v777, %v512
    %v811 = vmul.f32 %v777, %v513
    %v812 = vmul.f32 %v777, %v514
    %v813 = vmul.f32 %v777, %v515
    %v814 = vmul.f32 %v777, %v516
    %v815 = vmul.f32 %v777, %v517
    %v816 = vmul.f32 %v777, %v518
    %v817 = vmul.f32 %v777, %v519
    %v818 = vmul.f32 %v777, %v520
    %v819 = vmul.f32 %v777, %v521
    %v820 = vmul.f32 %v777, %v522
    %v821 = vmul.f32 %v777, %v523
    %v822 = vmul.f32 %v777, %v524
    %v823 = vmul.f32 %v777, %v525
    %v824 = vmul.f32 %v777, %v526
    %v825 = vmul.f32 %v777, %v527
    %v826 = vmul.f32 %v777, %v528
    %v827 = vmul.f32 %v777, %v529
    %v828 = vmul.f32 %v777, %v530
    %v829 = vmul.f32 %v777, %v531
    %v830 = vmul.f32 %v777, %v532
    %v831 = vmul.f32 %v777, %v533
    %v832 = vmul.f32 %v777, %v534
    %v833 = vmul.f32 %v777, %v535
    %v834 = vmul.f32 %v777, %v536
    %v835 = vmul.f32 %v777, %v537
    %v836 = vmul.f32 %v777, %v538
    %v837 = vmul.f32 %v777, %v539
    %v838 = vmul.f32 %v777, %v540
    %v839 = vmul.f32 %v777, %v541
    %v840 = vmul.f32 %v777, %v542
    %v841 = vmul.f32 %v777, %v543
    %v842 = vmul.f32 %v777, %v544
    %v843 = vmul.f32 %v777, %v545
    %v844 = vmul.f32 %v777, %v546
    %v845 = vmul.f32 %v777, %v547
    %v846 = vmul.f32 %v777, %v548
    %v847 = vmul.f32 %v777, %v549
    %v848 = vmul.f32 %v777, %v550
    %v849 = vmul.f32 %v777, %v551
    %v850 = vmul.f32 %v777, %v552
    %v851 = vmul.f32 %v777, %v553
    %v852 = vmul.f32 %v777, %v554
    %v853 = vmul.f32 %v777, %v555
    %v854 = vmul.f32 %v777, %v556
    %v855 = vmul.f32 %v777, %v557
    %v856 = vmul.f32 %v777, %v558
    %v857 = vmul.f32 %v777, %v559
    %v858 = vmul.f32 %v777, %v560
    %v859 = vmul.f32 %v777, %v561
    %v860 = vmul.f32 %v777, %v562
    %v861 = vmul.f32 %v777, %v563
    %v862 = vmul.f32 %v777, %v564
    %v863 = vmul.f32 %v777, %v565
    %v864 = vmul.f32 %v777, %v566
    %v865 = vmul.f32 %v777, %v567
    %v866 = vmul.f32 %v777, %v568
    %v867 = vmul.f32 %v777, %v569
    %v868 = vmul.f32 %v777, %v570
    %v869 = vmul.f32 %v777, %v571
    %v870 = vmul.f32 %v777, %v572
    %v871 = vmul.f32 %v777, %v573
    %v872 = vmul.f32 %v777, %v574
    %v873 = vmul.f32 %v777, %v575
    %v874 = vmul.f32 %v777, %v576
    %v875 = vmul.f32 %v777, %v577
    %v876 = vmul.f32 %v777, %v578
    %v877 = vmul.f32 %v777, %v579
    %v878 = vmul.f32 %v777, %v580
    %v879 = vmul.f32 %v777, %v581
    %v880 = vmul.f32 %v777, %v582
    %v881 = vmul.f32 %v777, %v583
    %v882 = vmul.f32 %v777, %v584
    %v883 = vmul.f32 %v777, %v585
    %v884 = vmul.f32 %v777, %v586
    %v885 = vmul.f32 %v777, %v587
    %v886 = vmul.f32 %v777, %v588
    %v887 = vmul.f32 %v777, %v589
    %v888 = vmul.f32 %v777, %v590
    %v889 = vmul.f32 %v777, %v591
    %v890 = vmul.f32 %v777, %v592
    %v891 = vmul.f32 %v777, %v593
    %v892 = vmul.f32 %v777, %v594
    %v893 = vmul.f32 %v777, %v595
    %v894 = vmul.f32 %v777, %v596
    %v895 = vmul.f32 %v777, %v597
    %v896 = vmul.f32 %v777, %v598
    %v897 = vmul.f32 %v777, %v599
    %v898 = vmul.f32 %v777, %v600
    %v899 = vmul.f32 %v777, %v601
    %v900 = vmul.f32 %v777, %v602
    %v901 = vmul.f32 %v777, %v603
    %v902 = vmul.f32 %v777, %v604
    %v903 = vmul.f32 %v777, %v605
    %v904 = vmul.f32 %v777, %v606
    %v905 = vmul.f32 %v777, %v607
    %v906 = vmul.f32 %v777, %v608
    %v907 = vmul.f32 %v777, %v609
    %v908 = vmul.f32 %v777, %v610
    %v909 = vmul.f32 %v777, %v611
    %v910 = vmul.f32 %v777, %v612
    %v911 = vmul.f32 %v777, %v613
    %v912 = vmul.f32 %v777, %v614
    %v913 = vmul.f32 %v777, %v615
    %v914 = vmul.f32 %v777, %v616
    %v915 = vmul.f32 %v777, %v617
    %v916 = vmul.f32 %v777, %v618
    %v917 = vmul.f32 %v777, %v619
    %v918 = vmul.f32 %v777, %v620
    %v919 = vmul.f32 %v777, %v621
    %v920 = vmul.f32 %v777, %v622
    %v921 = vmul.f32 %v777, %v623
    %v922 = vmul.f32 %v777, %v624
    %v923 = vmul.f32 %v777, %v625
    %v924 = vmul.f32 %v777, %v626
    %v925 = vmul.f32 %v777, %v627
    %v926 = vsel %vm629, %v480, %v778
    %v927 = vsel %vm630, %v481, %v779
    %v928 = vsel %vm631, %v482, %v780
    %v929 = vsel %vm632, %v483, %v781
    %v930 = vsel %vm633, %v484, %v782
    %v931 = vsel %vm634, %v485, %v783
    %v932 = vsel %vm635, %v486, %v784
    %v933 = vsel %vm636, %v487, %v785
    %v934 = vsel %vm637, %v488, %v786
    %v935 = vsel %vm638, %v489, %v787
    %v936 = vsel %vm639, %v490, %v788
    %v937 = vsel %vm640, %v491, %v789
    %v938 = vsel %vm641, %v492, %v790
    %v939 = vsel %vm642, %v493, %v791
    %v940 = vsel %vm643, %v494, %v792
    %v941 = vsel %vm644, %v495, %v793
    %v942 = vsel %vm645, %v496, %v794
    %v943 = vsel %vm646, %v497, %v795
    %v944 = vsel %vm647, %v498, %v796
    %v945 = vsel %vm648, %v499, %v797
    %v946 = vsel %vm649, %v500, %v798
    %v947 = vsel %vm650, %v501, %v799
    %v948 = vsel %vm651, %v502, %v800
    %v949 = vsel %vm652, %v503, %v801
    %v950 = vsel %vm653, %v504, %v802
    %v951 = vsel %vm654, %v505, %v803
    %v952 = vsel %vm655, %v506, %v804
    %v953 = vsel %vm656, %v507, %v805
    %v954 = vsel %vm657, %v508, %v806
    %v955 = vsel %vm658, %v509, %v807
    %v956 = vsel %vm659, %v510, %v808
    %v957 = vsel %vm660, %v511, %v809
    %v958 = vsel %vm661, %v512, %v810
    %v959 = vsel %vm662, %v513, %v811
    %v960 = vsel %vm663, %v514, %v812
    %v961 = vsel %vm664, %v515, %v813
    %v962 = vsel %vm665, %v516, %v814
    %v963 = vsel %vm666, %v517, %v815
    %v964 = vsel %vm667, %v518, %v816
    %v965 = vsel %vm668, %v519, %v817
    %v966 = vsel %vm669, %v520, %v818
    %v967 = vsel %vm670, %v521, %v819
    %v968 = vsel %vm671, %v522, %v820
    %v969 = vsel %vm672, %v523, %v821
    %v970 = vsel %vm673, %v524, %v822
    %v971 = vsel %vm674, %v525, %v823
    %v972 = vsel %vm675, %v526, %v824
    %v973 = vsel %vm676, %v527, %v825
    %v974 = vsel %vm677, %v528, %v826
    %v975 = vsel %vm678, %v529, %v827
    %v976 = vsel %vm679, %v530, %v828
    %v977 = vsel %vm680, %v531, %v829
    %v978 = vsel %vm681, %v532, %v830
    %v979 = vsel %vm682, %v533, %v831
    %v980 = vsel %vm683, %v534, %v832
    %v981 = vsel %vm684, %v535, %v833
    %v982 = vsel %vm685, %v536, %v834
    %v983 = vsel %vm686, %v537, %v835
    %v984 = vsel %vm687, %v538, %v836
    %v985 = vsel %vm688, %v539, %v837
    %v986 = vsel %vm689, %v540, %v838
    %v987 = vsel %vm690, %v541, %v839
    %v988 = vsel %vm691, %v542, %v840
    %v989 = vsel %vm692, %v543, %v841
    %v990 = vsel %vm693, %v544, %v842
    %v991 = vsel %vm694, %v545, %v843
    %v992 = vsel %vm695, %v546, %v844
    %v993 = vsel %vm696, %v547, %v845
    %v994 = vsel %vm697, %v548, %v846
    %v995 = vsel %vm698, %v549, %v847
    %v996 = vsel %vm699, %v550, %v848
    %v997 = vsel %vm700, %v551, %v849
    %v998 = vsel %vm701, %v552, %v850
    %v999 = vsel %vm702, %v553, %v851
    %v1000 = vsel %vm703, %v554, %v852
    %v1001 = vsel %vm704, %v555, %v853
    %v1002 = vsel %vm705, %v556, %v854
    %v1003 = vsel %vm706, %v557, %v855
    %v1004 = vsel %vm707, %v558, %v856
    %v1005 = vsel %vm708, %v559, %v857
    %v1006 = vsel %vm709, %v560, %v858
    %v1007 = vsel %vm710, %v561, %v859
    %v1008 = vsel %vm711, %v562, %v860
    %v1009 = vsel %vm712, %v563, %v861
    %v1010 = vsel %vm713, %v564, %v862
    %v1011 = vsel %vm714, %v565, %v863
    %v1012 = vsel %vm715, %v566, %v864
    %v1013 = vsel %vm716, %v567, %v865
    %v1014 = vsel %vm717, %v568, %v866
    %v1015 = vsel %vm718, %v569, %v867
    %v1016 = vsel %vm719, %v570, %v868
    %v1017 = vsel %vm720, %v571, %v869
    %v1018 = vsel %vm721, %v572, %v870
    %v1019 = vsel %vm722, %v573, %v871
    %v1020 = vsel %vm723, %v574, %v872
    %v1021 = vsel %vm724, %v575, %v873
    %v1022 = vsel %vm725, %v576, %v874
    %v1023 = vsel %vm726, %v577, %v875
    %v1024 = vsel %vm727, %v578, %v876
    %v1025 = vsel %vm728, %v579, %v877
    %v1026 = vsel %vm729, %v580, %v878
    %v1027 = vsel %vm730, %v581, %v879
    %v1028 = vsel %vm731, %v582, %v880
    %v1029 = vsel %vm732, %v583, %v881
    %v1030 = vsel %vm733, %v584, %v882
    %v1031 = vsel %vm734, %v585, %v883
    %v1032 = vsel %vm735, %v586, %v884
    %v1033 = vsel %vm736, %v587, %v885
    %v1034 = vsel %vm737, %v588, %v886
    %v1035 = vsel %vm738, %v589, %v887
    %v1036 = vsel %vm739, %v590, %v888
    %v1037 = vsel %vm740, %v591, %v889
    %v1038 = vsel %vm741, %v592, %v890
    %v1039 = vsel %vm742, %v593, %v891
    %v1040 = vsel %vm743, %v594, %v892
    %v1041 = vsel %vm744, %v595, %v893
    %v1042 = vsel %vm745, %v596, %v894
    %v1043 = vsel %vm746, %v597, %v895
    %v1044 = vsel %vm747, %v598, %v896
    %v1045 = vsel %vm748, %v599, %v897
    %v1046 = vsel %vm749, %v600, %v898
    %v1047 = vsel %vm750, %v601, %v899
    %v1048 = vsel %vm751, %v602, %v900
    %v1049 = vsel %vm752, %v603, %v901
    %v1050 = vsel %vm753, %v604, %v902
    %v1051 = vsel %vm754, %v605, %v903
    %v1052 = vsel %vm755, %v606, %v904
    %v1053 = vsel %vm756, %v607, %v905
    %v1054 = vsel %vm757, %v608, %v906
    %v1055 = vsel %vm758, %v609, %v907
    %v1056 = vsel %vm759, %v610, %v908
    %v1057 = vsel %vm760, %v611, %v909
    %v1058 = vsel %vm761, %v612, %v910
    %v1059 = vsel %vm762, %v613, %v911
    %v1060 = vsel %vm763, %v614, %v912
    %v1061 = vsel %vm764, %v615, %v913
    %v1062 = vsel %vm765, %v616, %v914
    %v1063 = vsel %vm766, %v617, %v915
    %v1064 = vsel %vm767, %v618, %v916
    %v1065 = vsel %vm768, %v619, %v917
    %v1066 = vsel %vm769, %v620, %v918
    %v1067 = vsel %vm770, %v621, %v919
    %v1068 = vsel %vm771, %v622, %v920
    %v1069 = vsel %vm772, %v623, %v921
    %v1070 = vsel %vm773, %v624, %v922
    %v1071 = vsel %vm774, %v625, %v923
    %v1072 = vsel %vm775, %v626, %v924
    %v1073 = vsel %vm776, %v627, %v925
    %s1074 = sld [smem:[#allocation3 + $0x2]]
    %vm1075 = vcmp.gt.f32.partialorder %v926, 0.0
    %vm1076 = vcmp.gt.f32.partialorder %v927, 0.0
    %vm1077 = vcmp.gt.f32.partialorder %v928, 0.0
    %vm1078 = vcmp.gt.f32.partialorder %v929, 0.0
    %vm1079 = vcmp.gt.f32.partialorder %v930, 0.0
    %vm1080 = vcmp.gt.f32.partialorder %v931, 0.0
    %vm1081 = vcmp.gt.f32.partialorder %v932, 0.0
    %vm1082 = vcmp.gt.f32.partialorder %v933, 0.0
    %vm1083 = vcmp.gt.f32.partialorder %v934, 0.0
    %vm1084 = vcmp.gt.f32.partialorder %v935, 0.0
    %vm1085 = vcmp.gt.f32.partialorder %v936, 0.0
    %vm1086 = vcmp.gt.f32.partialorder %v937, 0.0
    %vm1087 = vcmp.gt.f32.partialorder %v938, 0.0
    %vm1088 = vcmp.gt.f32.partialorder %v939, 0.0
    %vm1089 = vcmp.gt.f32.partialorder %v940, 0.0
    %vm1090 = vcmp.gt.f32.partialorder %v941, 0.0
    %vm1091 = vcmp.gt.f32.partialorder %v942, 0.0
    %vm1092 = vcmp.gt.f32.partialorder %v943, 0.0
    %vm1093 = vcmp.gt.f32.partialorder %v944, 0.0
    %vm1094 = vcmp.gt.f32.partialorder %v945, 0.0
    %vm1095 = vcmp.gt.f32.partialorder %v946, 0.0
    %vm1096 = vcmp.gt.f32.partialorder %v947, 0.0
    %vm1097 = vcmp.gt.f32.partialorder %v948, 0.0
    %vm1098 = vcmp.gt.f32.partialorder %v949, 0.0
    %vm1099 = vcmp.gt.f32.partialorder %v950, 0.0
    %vm1100 = vcmp.gt.f32.partialorder %v951, 0.0
    %vm1101 = vcmp.gt.f32.partialorder %v952, 0.0
    %vm1102 = vcmp.gt.f32.partialorder %v953, 0.0
    %vm1103 = vcmp.gt.f32.partialorder %v954, 0.0
    %vm1104 = vcmp.gt.f32.partialorder %v955, 0.0
    %vm1105 = vcmp.gt.f32.partialorder %v956, 0.0
    %vm1106 = vcmp.gt.f32.partialorder %v957, 0.0
    %vm1107 = vcmp.gt.f32.partialorder %v958, 0.0
    %vm1108 = vcmp.gt.f32.partialorder %v959, 0.0
    %vm1109 = vcmp.gt.f32.partialorder %v960, 0.0
    %vm1110 = vcmp.gt.f32.partialorder %v961, 0.0
    %vm1111 = vcmp.gt.f32.partialorder %v962, 0.0
    %vm1112 = vcmp.gt.f32.partialorder %v963, 0.0
    %vm1113 = vcmp.gt.f32.partialorder %v964, 0.0
    %vm1114 = vcmp.gt.f32.partialorder %v965, 0.0
    %vm1115 = vcmp.gt.f32.partialorder %v966, 0.0
    %vm1116 = vcmp.gt.f32.partialorder %v967, 0.0
    %vm1117 = vcmp.gt.f32.partialorder %v968, 0.0
    %vm1118 = vcmp.gt.f32.partialorder %v969, 0.0
    %vm1119 = vcmp.gt.f32.partialorder %v970, 0.0
    %vm1120 = vcmp.gt.f32.partialorder %v971, 0.0
    %vm1121 = vcmp.gt.f32.partialorder %v972, 0.0
    %vm1122 = vcmp.gt.f32.partialorder %v973, 0.0
    %vm1123 = vcmp.gt.f32.partialorder %v974, 0.0
    %vm1124 = vcmp.gt.f32.partialorder %v975, 0.0
    %vm1125 = vcmp.gt.f32.partialorder %v976, 0.0
    %vm1126 = vcmp.gt.f32.partialorder %v977, 0.0
    %vm1127 = vcmp.gt.f32.partialorder %v978, 0.0
    %vm1128 = vcmp.gt.f32.partialorder %v979, 0.0
    %vm1129 = vcmp.gt.f32.partialorder %v980, 0.0
    %vm1130 = vcmp.gt.f32.partialorder %v981, 0.0
    %vm1131 = vcmp.gt.f32.partialorder %v982, 0.0
    %vm1132 = vcmp.gt.f32.partialorder %v983, 0.0
    %vm1133 = vcmp.gt.f32.partialorder %v984, 0.0
    %vm1134 = vcmp.gt.f32.partialorder %v985, 0.0
    %vm1135 = vcmp.gt.f32.partialorder %v986, 0.0
    %vm1136 = vcmp.gt.f32.partialorder %v987, 0.0
    %vm1137 = vcmp.gt.f32.partialorder %v988, 0.0
    %vm1138 = vcmp.gt.f32.partialorder %v989, 0.0
    %vm1139 = vcmp.gt.f32.partialorder %v990, 0.0
    %vm1140 = vcmp.gt.f32.partialorder %v991, 0.0
    %vm1141 = vcmp.gt.f32.partialorder %v992, 0.0
    %vm1142 = vcmp.gt.f32.partialorder %v993, 0.0
    %vm1143 = vcmp.gt.f32.partialorder %v994, 0.0
    %vm1144 = vcmp.gt.f32.partialorder %v995, 0.0
    %vm1145 = vcmp.gt.f32.partialorder %v996, 0.0
    %vm1146 = vcmp.gt.f32.partialorder %v997, 0.0
    %vm1147 = vcmp.gt.f32.partialorder %v998, 0.0
    %vm1148 = vcmp.gt.f32.partialorder %v999, 0.0
    %vm1149 = vcmp.gt.f32.partialorder %v1000, 0.0
    %vm1150 = vcmp.gt.f32.partialorder %v1001, 0.0
    %vm1151 = vcmp.gt.f32.partialorder %v1002, 0.0
    %vm1152 = vcmp.gt.f32.partialorder %v1003, 0.0
    %vm1153 = vcmp.gt.f32.partialorder %v1004, 0.0
    %vm1154 = vcmp.gt.f32.partialorder %v1005, 0.0
    %vm1155 = vcmp.gt.f32.partialorder %v1006, 0.0
    %vm1156 = vcmp.gt.f32.partialorder %v1007, 0.0
    %vm1157 = vcmp.gt.f32.partialorder %v1008, 0.0
    %vm1158 = vcmp.gt.f32.partialorder %v1009, 0.0
    %vm1159 = vcmp.gt.f32.partialorder %v1010, 0.0
    %vm1160 = vcmp.gt.f32.partialorder %v1011, 0.0
    %vm1161 = vcmp.gt.f32.partialorder %v1012, 0.0
    %vm1162 = vcmp.gt.f32.partialorder %v1013, 0.0
    %vm1163 = vcmp.gt.f32.partialorder %v1014, 0.0
    %vm1164 = vcmp.gt.f32.partialorder %v1015, 0.0
    %vm1165 = vcmp.gt.f32.partialorder %v1016, 0.0
    %vm1166 = vcmp.gt.f32.partialorder %v1017, 0.0
    %vm1167 = vcmp.gt.f32.partialorder %v1018, 0.0
    %vm1168 = vcmp.gt.f32.partialorder %v1019, 0.0
    %vm1169 = vcmp.gt.f32.partialorder %v1020, 0.0
    %vm1170 = vcmp.gt.f32.partialorder %v1021, 0.0
    %vm1171 = vcmp.gt.f32.partialorder %v1022, 0.0
    %vm1172 = vcmp.gt.f32.partialorder %v1023, 0.0
    %vm1173 = vcmp.gt.f32.partialorder %v1024, 0.0
    %vm1174 = vcmp.gt.f32.partialorder %v1025, 0.0
    %vm1175 = vcmp.gt.f32.partialorder %v1026, 0.0
    %vm1176 = vcmp.gt.f32.partialorder %v1027, 0.0
    %vm1177 = vcmp.gt.f32.partialorder %v1028, 0.0
    %vm1178 = vcmp.gt.f32.partialorder %v1029, 0.0
    %vm1179 = vcmp.gt.f32.partialorder %v1030, 0.0
    %vm1180 = vcmp.gt.f32.partialorder %v1031, 0.0
    %vm1181 = vcmp.gt.f32.partialorder %v1032, 0.0
    %vm1182 = vcmp.gt.f32.partialorder %v1033, 0.0
    %vm1183 = vcmp.gt.f32.partialorder %v1034, 0.0
    %vm1184 = vcmp.gt.f32.partialorder %v1035, 0.0
    %vm1185 = vcmp.gt.f32.partialorder %v1036, 0.0
    %vm1186 = vcmp.gt.f32.partialorder %v1037, 0.0
    %vm1187 = vcmp.gt.f32.partialorder %v1038, 0.0
    %vm1188 = vcmp.gt.f32.partialorder %v1039, 0.0
    %vm1189 = vcmp.gt.f32.partialorder %v1040, 0.0
    %vm1190 = vcmp.gt.f32.partialorder %v1041, 0.0
    %vm1191 = vcmp.gt.f32.partialorder %v1042, 0.0
    %vm1192 = vcmp.gt.f32.partialorder %v1043, 0.0
    %vm1193 = vcmp.gt.f32.partialorder %v1044, 0.0
    %vm1194 = vcmp.gt.f32.partialorder %v1045, 0.0
    %vm1195 = vcmp.gt.f32.partialorder %v1046, 0.0
    %vm1196 = vcmp.gt.f32.partialorder %v1047, 0.0
    %vm1197 = vcmp.gt.f32.partialorder %v1048, 0.0
    %vm1198 = vcmp.gt.f32.partialorder %v1049, 0.0
    %vm1199 = vcmp.gt.f32.partialorder %v1050, 0.0
    %vm1200 = vcmp.gt.f32.partialorder %v1051, 0.0
    %vm1201 = vcmp.gt.f32.partialorder %v1052, 0.0
    %vm1202 = vcmp.gt.f32.partialorder %v1053, 0.0
    %vm1203 = vcmp.gt.f32.partialorder %v1054, 0.0
    %vm1204 = vcmp.gt.f32.partialorder %v1055, 0.0
    %vm1205 = vcmp.gt.f32.partialorder %v1056, 0.0
    %vm1206 = vcmp.gt.f32.partialorder %v1057, 0.0
    %vm1207 = vcmp.gt.f32.partialorder %v1058, 0.0
    %vm1208 = vcmp.gt.f32.partialorder %v1059, 0.0
    %vm1209 = vcmp.gt.f32.partialorder %v1060, 0.0
    %vm1210 = vcmp.gt.f32.partialorder %v1061, 0.0
    %vm1211 = vcmp.gt.f32.partialorder %v1062, 0.0
    %vm1212 = vcmp.gt.f32.partialorder %v1063, 0.0
    %vm1213 = vcmp.gt.f32.partialorder %v1064, 0.0
    %vm1214 = vcmp.gt.f32.partialorder %v1065, 0.0
    %vm1215 = vcmp.gt.f32.partialorder %v1066, 0.0
    %vm1216 = vcmp.gt.f32.partialorder %v1067, 0.0
    %vm1217 = vcmp.gt.f32.partialorder %v1068, 0.0
    %vm1218 = vcmp.gt.f32.partialorder %v1069, 0.0
    %vm1219 = vcmp.gt.f32.partialorder %v1070, 0.0
    %vm1220 = vcmp.gt.f32.partialorder %v1071, 0.0
    %vm1221 = vcmp.gt.f32.partialorder %v1072, 0.0
    %vm1222 = vcmp.gt.f32.partialorder %v1073, 0.0
    %v1223 = vstv %s1074
    %v1224 = vmul.f32 %v1223, %v926
    %v1225 = vmul.f32 %v1223, %v927
    %v1226 = vmul.f32 %v1223, %v928
    %v1227 = vmul.f32 %v1223, %v929
    %v1228 = vmul.f32 %v1223, %v930
    %v1229 = vmul.f32 %v1223, %v931
    %v1230 = vmul.f32 %v1223, %v932
    %v1231 = vmul.f32 %v1223, %v933
    %v1232 = vmul.f32 %v1223, %v934
    %v1233 = vmul.f32 %v1223, %v935
    %v1234 = vmul.f32 %v1223, %v936
    %v1235 = vmul.f32 %v1223, %v937
    %v1236 = vmul.f32 %v1223, %v938
    %v1237 = vmul.f32 %v1223, %v939
    %v1238 = vmul.f32 %v1223, %v940
    %v1239 = vmul.f32 %v1223, %v941
    %v1240 = vmul.f32 %v1223, %v942
    %v1241 = vmul.f32 %v1223, %v943
    %v1242 = vmul.f32 %v1223, %v944
    %v1243 = vmul.f32 %v1223, %v945
    %v1244 = vmul.f32 %v1223, %v946
    %v1245 = vmul.f32 %v1223, %v947
    %v1246 = vmul.f32 %v1223, %v948
    %v1247 = vmul.f32 %v1223, %v949
    %v1248 = vmul.f32 %v1223, %v950
    %v1249 = vmul.f32 %v1223, %v951
    %v1250 = vmul.f32 %v1223, %v952
    %v1251 = vmul.f32 %v1223, %v953
    %v1252 = vmul.f32 %v1223, %v954
    %v1253 = vmul.f32 %v1223, %v955
    %v1254 = vmul.f32 %v1223, %v956
    %v1255 = vmul.f32 %v1223, %v957
    %v1256 = vmul.f32 %v1223, %v958
    %v1257 = vmul.f32 %v1223, %v959
    %v1258 = vmul.f32 %v1223, %v960
    %v1259 = vmul.f32 %v1223, %v961
    %v1260 = vmul.f32 %v1223, %v962
    %v1261 = vmul.f32 %v1223, %v963
    %v1262 = vmul.f32 %v1223, %v964
    %v1263 = vmul.f32 %v1223, %v965
    %v1264 = vmul.f32 %v1223, %v966
    %v1265 = vmul.f32 %v1223, %v967
    %v1266 = vmul.f32 %v1223, %v968
    %v1267 = vmul.f32 %v1223, %v969
    %v1268 = vmul.f32 %v1223, %v970
    %v1269 = vmul.f32 %v1223, %v971
    %v1270 = vmul.f32 %v1223, %v972
    %v1271 = vmul.f32 %v1223, %v973
    %v1272 = vmul.f32 %v1223, %v974
    %v1273 = vmul.f32 %v1223, %v975
    %v1274 = vmul.f32 %v1223, %v976
    %v1275 = vmul.f32 %v1223, %v977
    %v1276 = vmul.f32 %v1223, %v978
    %v1277 = vmul.f32 %v1223, %v979
    %v1278 = vmul.f32 %v1223, %v980
    %v1279 = vmul.f32 %v1223, %v981
    %v1280 = vmul.f32 %v1223, %v982
    %v1281 = vmul.f32 %v1223, %v983
    %v1282 = vmul.f32 %v1223, %v984
    %v1283 = vmul.f32 %v1223, %v985
    %v1284 = vmul.f32 %v1223, %v986
    %v1285 = vmul.f32 %v1223, %v987
    %v1286 = vmul.f32 %v1223, %v988
    %v1287 = vmul.f32 %v1223, %v989
    %v1288 = vmul.f32 %v1223, %v990
    %v1289 = vmul.f32 %v1223, %v991
    %v1290 = vmul.f32 %v1223, %v992
    %v1291 = vmul.f32 %v1223, %v993
    %v1292 = vmul.f32 %v1223, %v994
    %v1293 = vmul.f32 %v1223, %v995
    %v1294 = vmul.f32 %v1223, %v996
    %v1295 = vmul.f32 %v1223, %v997
    %v1296 = vmul.f32 %v1223, %v998
    %v1297 = vmul.f32 %v1223, %v999
    %v1298 = vmul.f32 %v1223, %v1000
    %v1299 = vmul.f32 %v1223, %v1001
    %v1300 = vmul.f32 %v1223, %v1002
    %v1301 = vmul.f32 %v1223, %v1003
    %v1302 = vmul.f32 %v1223, %v1004
    %v1303 = vmul.f32 %v1223, %v1005
    %v1304 = vmul.f32 %v1223, %v1006
    %v1305 = vmul.f32 %v1223, %v1007
    %v1306 = vmul.f32 %v1223, %v1008
    %v1307 = vmul.f32 %v1223, %v1009
    %v1308 = vmul.f32 %v1223, %v1010
    %v1309 = vmul.f32 %v1223, %v1011
    %v1310 = vmul.f32 %v1223, %v1012
    %v1311 = vmul.f32 %v1223, %v1013
    %v1312 = vmul.f32 %v1223, %v1014
    %v1313 = vmul.f32 %v1223, %v1015
    %v1314 = vmul.f32 %v1223, %v1016
    %v1315 = vmul.f32 %v1223, %v1017
    %v1316 = vmul.f32 %v1223, %v1018
    %v1317 = vmul.f32 %v1223, %v1019
    %v1318 = vmul.f32 %v1223, %v1020
    %v1319 = vmul.f32 %v1223, %v1021
    %v1320 = vmul.f32 %v1223, %v1022
    %v1321 = vmul.f32 %v1223, %v1023
    %v1322 = vmul.f32 %v1223, %v1024
    %v1323 = vmul.f32 %v1223, %v1025
    %v1324 = vmul.f32 %v1223, %v1026
    %v1325 = vmul.f32 %v1223, %v1027
    %v1326 = vmul.f32 %v1223, %v1028
    %v1327 = vmul.f32 %v1223, %v1029
    %v1328 = vmul.f32 %v1223, %v1030
    %v1329 = vmul.f32 %v1223, %v1031
    %v1330 = vmul.f32 %v1223, %v1032
    %v1331 = vmul.f32 %v1223, %v1033
    %v1332 = vmul.f32 %v1223, %v1034
    %v1333 = vmul.f32 %v1223, %v1035
    %v1334 = vmul.f32 %v1223, %v1036
    %v1335 = vmul.f32 %v1223, %v1037
    %v1336 = vmul.f32 %v1223, %v1038
    %v1337 = vmul.f32 %v1223, %v1039
    %v1338 = vmul.f32 %v1223, %v1040
    %v1339 = vmul.f32 %v1223, %v1041
    %v1340 = vmul.f32 %v1223, %v1042
    %v1341 = vmul.f32 %v1223, %v1043
    %v1342 = vmul.f32 %v1223, %v1044
    %v1343 = vmul.f32 %v1223, %v1045
    %v1344 = vmul.f32 %v1223, %v1046
    %v1345 = vmul.f32 %v1223, %v1047
    %v1346 = vmul.f32 %v1223, %v1048
    %v1347 = vmul.f32 %v1223, %v1049
    %v1348 = vmul.f32 %v1223, %v1050
    %v1349 = vmul.f32 %v1223, %v1051
    %v1350 = vmul.f32 %v1223, %v1052
    %v1351 = vmul.f32 %v1223, %v1053
    %v1352 = vmul.f32 %v1223, %v1054
    %v1353 = vmul.f32 %v1223, %v1055
    %v1354 = vmul.f32 %v1223, %v1056
    %v1355 = vmul.f32 %v1223, %v1057
    %v1356 = vmul.f32 %v1223, %v1058
    %v1357 = vmul.f32 %v1223, %v1059
    %v1358 = vmul.f32 %v1223, %v1060
    %v1359 = vmul.f32 %v1223, %v1061
    %v1360 = vmul.f32 %v1223, %v1062
    %v1361 = vmul.f32 %v1223, %v1063
    %v1362 = vmul.f32 %v1223, %v1064
    %v1363 = vmul.f32 %v1223, %v1065
    %v1364 = vmul.f32 %v1223, %v1066
    %v1365 = vmul.f32 %v1223, %v1067
    %v1366 = vmul.f32 %v1223, %v1068
    %v1367 = vmul.f32 %v1223, %v1069
    %v1368 = vmul.f32 %v1223, %v1070
    %v1369 = vmul.f32 %v1223, %v1071
    %v1370 = vmul.f32 %v1223, %v1072
    %v1371 = vmul.f32 %v1223, %v1073
    %v1372 = vsel %vm1075, %v926, %v1224
    %v1373 = vsel %vm1076, %v927, %v1225
    %v1374 = vsel %vm1077, %v928, %v1226
    %v1375 = vsel %vm1078, %v929, %v1227
    %v1376 = vsel %vm1079, %v930, %v1228
    %v1377 = vsel %vm1080, %v931, %v1229
    %v1378 = vsel %vm1081, %v932, %v1230
    %v1379 = vsel %vm1082, %v933, %v1231
    %v1380 = vsel %vm1083, %v934, %v1232
    %v1381 = vsel %vm1084, %v935, %v1233
    %v1382 = vsel %vm1085, %v936, %v1234
    %v1383 = vsel %vm1086, %v937, %v1235
    %v1384 = vsel %vm1087, %v938, %v1236
    %v1385 = vsel %vm1088, %v939, %v1237
    %v1386 = vsel %vm1089, %v940, %v1238
    %v1387 = vsel %vm1090, %v941, %v1239
    %v1388 = vsel %vm1091, %v942, %v1240
    %v1389 = vsel %vm1092, %v943, %v1241
    %v1390 = vsel %vm1093, %v944, %v1242
    %v1391 = vsel %vm1094, %v945, %v1243
    %v1392 = vsel %vm1095, %v946, %v1244
    %v1393 = vsel %vm1096, %v947, %v1245
    %v1394 = vsel %vm1097, %v948, %v1246
    %v1395 = vsel %vm1098, %v949, %v1247
    %v1396 = vsel %vm1099, %v950, %v1248
    %v1397 = vsel %vm1100, %v951, %v1249
    %v1398 = vsel %vm1101, %v952, %v1250
    %v1399 = vsel %vm1102, %v953, %v1251
    %v1400 = vsel %vm1103, %v954, %v1252
    %v1401 = vsel %vm1104, %v955, %v1253
    %v1402 = vsel %vm1105, %v956, %v1254
    %v1403 = vsel %vm1106, %v957, %v1255
    %v1404 = vsel %vm1107, %v958, %v1256
    %v1405 = vsel %vm1108, %v959, %v1257
    %v1406 = vsel %vm1109, %v960, %v1258
    %v1407 = vsel %vm1110, %v961, %v1259
    %v1408 = vsel %vm1111, %v962, %v1260
    %v1409 = vsel %vm1112, %v963, %v1261
    %v1410 = vsel %vm1113, %v964, %v1262
    %v1411 = vsel %vm1114, %v965, %v1263
    %v1412 = vsel %vm1115, %v966, %v1264
    %v1413 = vsel %vm1116, %v967, %v1265
    %v1414 = vsel %vm1117, %v968, %v1266
    %v1415 = vsel %vm1118, %v969, %v1267
    %v1416 = vsel %vm1119, %v970, %v1268
    %v1417 = vsel %vm1120, %v971, %v1269
    %v1418 = vsel %vm1121, %v972, %v1270
    %v1419 = vsel %vm1122, %v973, %v1271
    %v1420 = vsel %vm1123, %v974, %v1272
    %v1421 = vsel %vm1124, %v975, %v1273
    %v1422 = vsel %vm1125, %v976, %v1274
    %v1423 = vsel %vm1126, %v977, %v1275
    %v1424 = vsel %vm1127, %v978, %v1276
    %v1425 = vsel %vm1128, %v979, %v1277
    %v1426 = vsel %vm1129, %v980, %v1278
    %v1427 = vsel %vm1130, %v981, %v1279
    %v1428 = vsel %vm1131, %v982, %v1280
    %v1429 = vsel %vm1132, %v983, %v1281
    %v1430 = vsel %vm1133, %v984, %v1282
    %v1431 = vsel %vm1134, %v985, %v1283
    %v1432 = vsel %vm1135, %v986, %v1284
    %v1433 = vsel %vm1136, %v987, %v1285
    %v1434 = vsel %vm1137, %v988, %v1286
    %v1435 = vsel %vm1138, %v989, %v1287
    %v1436 = vsel %vm1139, %v990, %v1288
    %v1437 = vsel %vm1140, %v991, %v1289
    %v1438 = vsel %vm1141, %v992, %v1290
    %v1439 = vsel %vm1142, %v993, %v1291
    %v1440 = vsel %vm1143, %v994, %v1292
    %v1441 = vsel %vm1144, %v995, %v1293
    %v1442 = vsel %vm1145, %v996, %v1294
    %v1443 = vsel %vm1146, %v997, %v1295
    %v1444 = vsel %vm1147, %v998, %v1296
    %v1445 = vsel %vm1148, %v999, %v1297
    %v1446 = vsel %vm1149, %v1000, %v1298
    %v1447 = vsel %vm1150, %v1001, %v1299
    %v1448 = vsel %vm1151, %v1002, %v1300
    %v1449 = vsel %vm1152, %v1003, %v1301
    %v1450 = vsel %vm1153, %v1004, %v1302
    %v1451 = vsel %vm1154, %v1005, %v1303
    %v1452 = vsel %vm1155, %v1006, %v1304
    %v1453 = vsel %vm1156, %v1007, %v1305
    %v1454 = vsel %vm1157, %v1008, %v1306
    %v1455 = vsel %vm1158, %v1009, %v1307
    %v1456 = vsel %vm1159, %v1010, %v1308
    %v1457 = vsel %vm1160, %v1011, %v1309
    %v1458 = vsel %vm1161, %v1012, %v1310
    %v1459 = vsel %vm1162, %v1013, %v1311
    %v1460 = vsel %vm1163, %v1014, %v1312
    %v1461 = vsel %vm1164, %v1015, %v1313
    %v1462 = vsel %vm1165, %v1016, %v1314
    %v1463 = vsel %vm1166, %v1017, %v1315
    %v1464 = vsel %vm1167, %v1018, %v1316
    %v1465 = vsel %vm1168, %v1019, %v1317
    %v1466 = vsel %vm1169, %v1020, %v1318
    %v1467 = vsel %vm1170, %v1021, %v1319
    %v1468 = vsel %vm1171, %v1022, %v1320
    %v1469 = vsel %vm1172, %v1023, %v1321
    %v1470 = vsel %vm1173, %v1024, %v1322
    %v1471 = vsel %vm1174, %v1025, %v1323
    %v1472 = vsel %vm1175, %v1026, %v1324
    %v1473 = vsel %vm1176, %v1027, %v1325
    %v1474 = vsel %vm1177, %v1028, %v1326
    %v1475 = vsel %vm1178, %v1029, %v1327
    %v1476 = vsel %vm1179, %v1030, %v1328
    %v1477 = vsel %vm1180, %v1031, %v1329
    %v1478 = vsel %vm1181, %v1032, %v1330
    %v1479 = vsel %vm1182, %v1033, %v1331
    %v1480 = vsel %vm1183, %v1034, %v1332
    %v1481 = vsel %vm1184, %v1035, %v1333
    %v1482 = vsel %vm1185, %v1036, %v1334
    %v1483 = vsel %vm1186, %v1037, %v1335
    %v1484 = vsel %vm1187, %v1038, %v1336
    %v1485 = vsel %vm1188, %v1039, %v1337
    %v1486 = vsel %vm1189, %v1040, %v1338
    %v1487 = vsel %vm1190, %v1041, %v1339
    %v1488 = vsel %vm1191, %v1042, %v1340
    %v1489 = vsel %vm1192, %v1043, %v1341
    %v1490 = vsel %vm1193, %v1044, %v1342
    %v1491 = vsel %vm1194, %v1045, %v1343
    %v1492 = vsel %vm1195, %v1046, %v1344
    %v1493 = vsel %vm1196, %v1047, %v1345
    %v1494 = vsel %vm1197, %v1048, %v1346
    %v1495 = vsel %vm1198, %v1049, %v1347
    %v1496 = vsel %vm1199, %v1050, %v1348
    %v1497 = vsel %vm1200, %v1051, %v1349
    %v1498 = vsel %vm1201, %v1052, %v1350
    %v1499 = vsel %vm1202, %v1053, %v1351
    %v1500 = vsel %vm1203, %v1054, %v1352
    %v1501 = vsel %vm1204, %v1055, %v1353
    %v1502 = vsel %vm1205, %v1056, %v1354
    %v1503 = vsel %vm1206, %v1057, %v1355
    %v1504 = vsel %vm1207, %v1058, %v1356
    %v1505 = vsel %vm1208, %v1059, %v1357
    %v1506 = vsel %vm1209, %v1060, %v1358
    %v1507 = vsel %vm1210, %v1061, %v1359
    %v1508 = vsel %vm1211, %v1062, %v1360
    %v1509 = vsel %vm1212, %v1063, %v1361
    %v1510 = vsel %vm1213, %v1064, %v1362
    %v1511 = vsel %vm1214, %v1065, %v1363
    %v1512 = vsel %vm1215, %v1066, %v1364
    %v1513 = vsel %vm1216, %v1067, %v1365
    %v1514 = vsel %vm1217, %v1068, %v1366
    %v1515 = vsel %vm1218, %v1069, %v1367
    %v1516 = vsel %vm1219, %v1070, %v1368
    %v1517 = vsel %vm1220, %v1071, %v1369
    %v1518 = vsel %vm1221, %v1072, %v1370
    %v1519 = vsel %vm1222, %v1073, %v1371
    %s1520 = sld [smem:[#allocation3 + $0x3]]
    %vm1521 = vcmp.gt.f32.partialorder %v1372, 0.0
    %vm1522 = vcmp.gt.f32.partialorder %v1373, 0.0
    %vm1523 = vcmp.gt.f32.partialorder %v1374, 0.0
    %vm1524 = vcmp.gt.f32.partialorder %v1375, 0.0
    %vm1525 = vcmp.gt.f32.partialorder %v1376, 0.0
    %vm1526 = vcmp.gt.f32.partialorder %v1377, 0.0
    %vm1527 = vcmp.gt.f32.partialorder %v1378, 0.0
    %vm1528 = vcmp.gt.f32.partialorder %v1379, 0.0
    %vm1529 = vcmp.gt.f32.partialorder %v1380, 0.0
    %vm1530 = vcmp.gt.f32.partialorder %v1381, 0.0
    %vm1531 = vcmp.gt.f32.partialorder %v1382, 0.0
    %vm1532 = vcmp.gt.f32.partialorder %v1383, 0.0
    %vm1533 = vcmp.gt.f32.partialorder %v1384, 0.0
    %vm1534 = vcmp.gt.f32.partialorder %v1385, 0.0
    %vm1535 = vcmp.gt.f32.partialorder %v1386, 0.0
    %vm1536 = vcmp.gt.f32.partialorder %v1387, 0.0
    %vm1537 = vcmp.gt.f32.partialorder %v1388, 0.0
    %vm1538 = vcmp.gt.f32.partialorder %v1389, 0.0
    %vm1539 = vcmp.gt.f32.partialorder %v1390, 0.0
    %vm1540 = vcmp.gt.f32.partialorder %v1391, 0.0
    %vm1541 = vcmp.gt.f32.partialorder %v1392, 0.0
    %vm1542 = vcmp.gt.f32.partialorder %v1393, 0.0
    %vm1543 = vcmp.gt.f32.partialorder %v1394, 0.0
    %vm1544 = vcmp.gt.f32.partialorder %v1395, 0.0
    %vm1545 = vcmp.gt.f32.partialorder %v1396, 0.0
    %vm1546 = vcmp.gt.f32.partialorder %v1397, 0.0
    %vm1547 = vcmp.gt.f32.partialorder %v1398, 0.0
    %vm1548 = vcmp.gt.f32.partialorder %v1399, 0.0
    %vm1549 = vcmp.gt.f32.partialorder %v1400, 0.0
    %vm1550 = vcmp.gt.f32.partialorder %v1401, 0.0
    %vm1551 = vcmp.gt.f32.partialorder %v1402, 0.0
    %vm1552 = vcmp.gt.f32.partialorder %v1403, 0.0
    %vm1553 = vcmp.gt.f32.partialorder %v1404, 0.0
    %vm1554 = vcmp.gt.f32.partialorder %v1405, 0.0
    %vm1555 = vcmp.gt.f32.partialorder %v1406, 0.0
    %vm1556 = vcmp.gt.f32.partialorder %v1407, 0.0
    %vm1557 = vcmp.gt.f32.partialorder %v1408, 0.0
    %vm1558 = vcmp.gt.f32.partialorder %v1409, 0.0
    %vm1559 = vcmp.gt.f32.partialorder %v1410, 0.0
    %vm1560 = vcmp.gt.f32.partialorder %v1411, 0.0
    %vm1561 = vcmp.gt.f32.partialorder %v1412, 0.0
    %vm1562 = vcmp.gt.f32.partialorder %v1413, 0.0
    %vm1563 = vcmp.gt.f32.partialorder %v1414, 0.0
    %vm1564 = vcmp.gt.f32.partialorder %v1415, 0.0
    %vm1565 = vcmp.gt.f32.partialorder %v1416, 0.0
    %vm1566 = vcmp.gt.f32.partialorder %v1417, 0.0
    %vm1567 = vcmp.gt.f32.partialorder %v1418, 0.0
    %vm1568 = vcmp.gt.f32.partialorder %v1419, 0.0
    %vm1569 = vcmp.gt.f32.partialorder %v1420, 0.0
    %vm1570 = vcmp.gt.f32.partialorder %v1421, 0.0
    %vm1571 = vcmp.gt.f32.partialorder %v1422, 0.0
    %vm1572 = vcmp.gt.f32.partialorder %v1423, 0.0
    %vm1573 = vcmp.gt.f32.partialorder %v1424, 0.0
    %vm1574 = vcmp.gt.f32.partialorder %v1425, 0.0
    %vm1575 = vcmp.gt.f32.partialorder %v1426, 0.0
    %vm1576 = vcmp.gt.f32.partialorder %v1427, 0.0
    %vm1577 = vcmp.gt.f32.partialorder %v1428, 0.0
    %vm1578 = vcmp.gt.f32.partialorder %v1429, 0.0
    %vm1579 = vcmp.gt.f32.partialorder %v1430, 0.0
    %vm1580 = vcmp.gt.f32.partialorder %v1431, 0.0
    %vm1581 = vcmp.gt.f32.partialorder %v1432, 0.0
    %vm1582 = vcmp.gt.f32.partialorder %v1433, 0.0
    %vm1583 = vcmp.gt.f32.partialorder %v1434, 0.0
    %vm1584 = vcmp.gt.f32.partialorder %v1435, 0.0
    %vm1585 = vcmp.gt.f32.partialorder %v1436, 0.0
    %vm1586 = vcmp.gt.f32.partialorder %v1437, 0.0
    %vm1587 = vcmp.gt.f32.partialorder %v1438, 0.0
    %vm1588 = vcmp.gt.f32.partialorder %v1439, 0.0
    %vm1589 = vcmp.gt.f32.partialorder %v1440, 0.0
    %vm1590 = vcmp.gt.f32.partialorder %v1441, 0.0
    %vm1591 = vcmp.gt.f32.partialorder %v1442, 0.0
    %vm1592 = vcmp.gt.f32.partialorder %v1443, 0.0
    %vm1593 = vcmp.gt.f32.partialorder %v1444, 0.0
    %vm1594 = vcmp.gt.f32.partialorder %v1445, 0.0
    %vm1595 = vcmp.gt.f32.partialorder %v1446, 0.0
    %vm1596 = vcmp.gt.f32.partialorder %v1447, 0.0
    %vm1597 = vcmp.gt.f32.partialorder %v1448, 0.0
    %vm1598 = vcmp.gt.f32.partialorder %v1449, 0.0
    %vm1599 = vcmp.gt.f32.partialorder %v1450, 0.0
    %vm1600 = vcmp.gt.f32.partialorder %v1451, 0.0
    %vm1601 = vcmp.gt.f32.partialorder %v1452, 0.0
    %vm1602 = vcmp.gt.f32.partialorder %v1453, 0.0
    %vm1603 = vcmp.gt.f32.partialorder %v1454, 0.0
    %vm1604 = vcmp.gt.f32.partialorder %v1455, 0.0
    %vm1605 = vcmp.gt.f32.partialorder %v1456, 0.0
    %vm1606 = vcmp.gt.f32.partialorder %v1457, 0.0
    %vm1607 = vcmp.gt.f32.partialorder %v1458, 0.0
    %vm1608 = vcmp.gt.f32.partialorder %v1459, 0.0
    %vm1609 = vcmp.gt.f32.partialorder %v1460, 0.0
    %vm1610 = vcmp.gt.f32.partialorder %v1461, 0.0
    %vm1611 = vcmp.gt.f32.partialorder %v1462, 0.0
    %vm1612 = vcmp.gt.f32.partialorder %v1463, 0.0
    %vm1613 = vcmp.gt.f32.partialorder %v1464, 0.0
    %vm1614 = vcmp.gt.f32.partialorder %v1465, 0.0
    %vm1615 = vcmp.gt.f32.partialorder %v1466, 0.0
    %vm1616 = vcmp.gt.f32.partialorder %v1467, 0.0
    %vm1617 = vcmp.gt.f32.partialorder %v1468, 0.0
    %vm1618 = vcmp.gt.f32.partialorder %v1469, 0.0
    %vm1619 = vcmp.gt.f32.partialorder %v1470, 0.0
    %vm1620 = vcmp.gt.f32.partialorder %v1471, 0.0
    %vm1621 = vcmp.gt.f32.partialorder %v1472, 0.0
    %vm1622 = vcmp.gt.f32.partialorder %v1473, 0.0
    %vm1623 = vcmp.gt.f32.partialorder %v1474, 0.0
    %vm1624 = vcmp.gt.f32.partialorder %v1475, 0.0
    %vm1625 = vcmp.gt.f32.partialorder %v1476, 0.0
    %vm1626 = vcmp.gt.f32.partialorder %v1477, 0.0
    %vm1627 = vcmp.gt.f32.partialorder %v1478, 0.0
    %vm1628 = vcmp.gt.f32.partialorder %v1479, 0.0
    %vm1629 = vcmp.gt.f32.partialorder %v1480, 0.0
    %vm1630 = vcmp.gt.f32.partialorder %v1481, 0.0
    %vm1631 = vcmp.gt.f32.partialorder %v1482, 0.0
    %vm1632 = vcmp.gt.f32.partialorder %v1483, 0.0
    %vm1633 = vcmp.gt.f32.partialorder %v1484, 0.0
    %vm1634 = vcmp.gt.f32.partialorder %v1485, 0.0
    %vm1635 = vcmp.gt.f32.partialorder %v1486, 0.0
    %vm1636 = vcmp.gt.f32.partialorder %v1487, 0.0
    %vm1637 = vcmp.gt.f32.partialorder %v1488, 0.0
    %vm1638 = vcmp.gt.f32.partialorder %v1489, 0.0
    %vm1639 = vcmp.gt.f32.partialorder %v1490, 0.0
    %vm1640 = vcmp.gt.f32.partialorder %v1491, 0.0
    %vm1641 = vcmp.gt.f32.partialorder %v1492, 0.0
    %vm1642 = vcmp.gt.f32.partialorder %v1493, 0.0
    %vm1643 = vcmp.gt.f32.partialorder %v1494, 0.0
    %vm1644 = vcmp.gt.f32.partialorder %v1495, 0.0
    %vm1645 = vcmp.gt.f32.partialorder %v1496, 0.0
    %vm1646 = vcmp.gt.f32.partialorder %v1497, 0.0
    %vm1647 = vcmp.gt.f32.partialorder %v1498, 0.0
    %vm1648 = vcmp.gt.f32.partialorder %v1499, 0.0
    %vm1649 = vcmp.gt.f32.partialorder %v1500, 0.0
    %vm1650 = vcmp.gt.f32.partialorder %v1501, 0.0
    %vm1651 = vcmp.gt.f32.partialorder %v1502, 0.0
    %vm1652 = vcmp.gt.f32.partialorder %v1503, 0.0
    %vm1653 = vcmp.gt.f32.partialorder %v1504, 0.0
    %vm1654 = vcmp.gt.f32.partialorder %v1505, 0.0
    %vm1655 = vcmp.gt.f32.partialorder %v1506, 0.0
    %vm1656 = vcmp.gt.f32.partialorder %v1507, 0.0
    %vm1657 = vcmp.gt.f32.partialorder %v1508, 0.0
    %vm1658 = vcmp.gt.f32.partialorder %v1509, 0.0
    %vm1659 = vcmp.gt.f32.partialorder %v1510, 0.0
    %vm1660 = vcmp.gt.f32.partialorder %v1511, 0.0
    %vm1661 = vcmp.gt.f32.partialorder %v1512, 0.0
    %vm1662 = vcmp.gt.f32.partialorder %v1513, 0.0
    %vm1663 = vcmp.gt.f32.partialorder %v1514, 0.0
    %vm1664 = vcmp.gt.f32.partialorder %v1515, 0.0
    %vm1665 = vcmp.gt.f32.partialorder %v1516, 0.0
    %vm1666 = vcmp.gt.f32.partialorder %v1517, 0.0
    %vm1667 = vcmp.gt.f32.partialorder %v1518, 0.0
    %vm1668 = vcmp.gt.f32.partialorder %v1519, 0.0
    %v1669 = vstv %s1520
    %v1670 = vmul.f32 %v1669, %v1372
    %v1671 = vmul.f32 %v1669, %v1373
    %v1672 = vmul.f32 %v1669, %v1374
    %v1673 = vmul.f32 %v1669, %v1375
    %v1674 = vmul.f32 %v1669, %v1376
    %v1675 = vmul.f32 %v1669, %v1377
    %v1676 = vmul.f32 %v1669, %v1378
    %v1677 = vmul.f32 %v1669, %v1379
    %v1678 = vmul.f32 %v1669, %v1380
    %v1679 = vmul.f32 %v1669, %v1381
    %v1680 = vmul.f32 %v1669, %v1382
    %v1681 = vmul.f32 %v1669, %v1383
    %v1682 = vmul.f32 %v1669, %v1384
    %v1683 = vmul.f32 %v1669, %v1385
    %v1684 = vmul.f32 %v1669, %v1386
    %v1685 = vmul.f32 %v1669, %v1387
    %v1686 = vmul.f32 %v1669, %v1388
    %v1687 = vmul.f32 %v1669, %v1389
    %v1688 = vmul.f32 %v1669, %v1390
    %v1689 = vmul.f32 %v1669, %v1391
    %v1690 = vmul.f32 %v1669, %v1392
    %v1691 = vmul.f32 %v1669, %v1393
    %v1692 = vmul.f32 %v1669, %v1394
    %v1693 = vmul.f32 %v1669, %v1395
    %v1694 = vmul.f32 %v1669, %v1396
    %v1695 = vmul.f32 %v1669, %v1397
    %v1696 = vmul.f32 %v1669, %v1398
    %v1697 = vmul.f32 %v1669, %v1399
    %v1698 = vmul.f32 %v1669, %v1400
    %v1699 = vmul.f32 %v1669, %v1401
    %v1700 = vmul.f32 %v1669, %v1402
    %v1701 = vmul.f32 %v1669, %v1403
    %v1702 = vmul.f32 %v1669, %v1404
    %v1703 = vmul.f32 %v1669, %v1405
    %v1704 = vmul.f32 %v1669, %v1406
    %v1705 = vmul.f32 %v1669, %v1407
    %v1706 = vmul.f32 %v1669, %v1408
    %v1707 = vmul.f32 %v1669, %v1409
    %v1708 = vmul.f32 %v1669, %v1410
    %v1709 = vmul.f32 %v1669, %v1411
    %v1710 = vmul.f32 %v1669, %v1412
    %v1711 = vmul.f32 %v1669, %v1413
    %v1712 = vmul.f32 %v1669, %v1414
    %v1713 = vmul.f32 %v1669, %v1415
    %v1714 = vmul.f32 %v1669, %v1416
    %v1715 = vmul.f32 %v1669, %v1417
    %v1716 = vmul.f32 %v1669, %v1418
    %v1717 = vmul.f32 %v1669, %v1419
    %v1718 = vmul.f32 %v1669, %v1420
    %v1719 = vmul.f32 %v1669, %v1421
    %v1720 = vmul.f32 %v1669, %v1422
    %v1721 = vmul.f32 %v1669, %v1423
    %v1722 = vmul.f32 %v1669, %v1424
    %v1723 = vmul.f32 %v1669, %v1425
    %v1724 = vmul.f32 %v1669, %v1426
    %v1725 = vmul.f32 %v1669, %v1427
    %v1726 = vmul.f32 %v1669, %v1428
    %v1727 = vmul.f32 %v1669, %v1429
    %v1728 = vmul.f32 %v1669, %v1430
    %v1729 = vmul.f32 %v1669, %v1431
    %v1730 = vmul.f32 %v1669, %v1432
    %v1731 = vmul.f32 %v1669, %v1433
    %v1732 = vmul.f32 %v1669, %v1434
    %v1733 = vmul.f32 %v1669, %v1435
    %v1734 = vmul.f32 %v1669, %v1436
    %v1735 = vmul.f32 %v1669, %v1437
    %v1736 = vmul.f32 %v1669, %v1438
    %v1737 = vmul.f32 %v1669, %v1439
    %v1738 = vmul.f32 %v1669, %v1440
    %v1739 = vmul.f32 %v1669, %v1441
    %v1740 = vmul.f32 %v1669, %v1442
    %v1741 = vmul.f32 %v1669, %v1443
    %v1742 = vmul.f32 %v1669, %v1444
    %v1743 = vmul.f32 %v1669, %v1445
    %v1744 = vmul.f32 %v1669, %v1446
    %v1745 = vmul.f32 %v1669, %v1447
    %v1746 = vmul.f32 %v1669, %v1448
    %v1747 = vmul.f32 %v1669, %v1449
    %v1748 = vmul.f32 %v1669, %v1450
    %v1749 = vmul.f32 %v1669, %v1451
    %v1750 = vmul.f32 %v1669, %v1452
    %v1751 = vmul.f32 %v1669, %v1453
    %v1752 = vmul.f32 %v1669, %v1454
    %v1753 = vmul.f32 %v1669, %v1455
    %v1754 = vmul.f32 %v1669, %v1456
    %v1755 = vmul.f32 %v1669, %v1457
    %v1756 = vmul.f32 %v1669, %v1458
    %v1757 = vmul.f32 %v1669, %v1459
    %v1758 = vmul.f32 %v1669, %v1460
    %v1759 = vmul.f32 %v1669, %v1461
    %v1760 = vmul.f32 %v1669, %v1462
    %v1761 = vmul.f32 %v1669, %v1463
    %v1762 = vmul.f32 %v1669, %v1464
    %v1763 = vmul.f32 %v1669, %v1465
    %v1764 = vmul.f32 %v1669, %v1466
    %v1765 = vmul.f32 %v1669, %v1467
    %v1766 = vmul.f32 %v1669, %v1468
    %v1767 = vmul.f32 %v1669, %v1469
    %v1768 = vmul.f32 %v1669, %v1470
    %v1769 = vmul.f32 %v1669, %v1471
    %v1770 = vmul.f32 %v1669, %v1472
    %v1771 = vmul.f32 %v1669, %v1473
    %v1772 = vmul.f32 %v1669, %v1474
    %v1773 = vmul.f32 %v1669, %v1475
    %v1774 = vmul.f32 %v1669, %v1476
    %v1775 = vmul.f32 %v1669, %v1477
    %v1776 = vmul.f32 %v1669, %v1478
    %v1777 = vmul.f32 %v1669, %v1479
    %v1778 = vmul.f32 %v1669, %v1480
    %v1779 = vmul.f32 %v1669, %v1481
    %v1780 = vmul.f32 %v1669, %v1482
    %v1781 = vmul.f32 %v1669, %v1483
    %v1782 = vmul.f32 %v1669, %v1484
    %v1783 = vmul.f32 %v1669, %v1485
    %v1784 = vmul.f32 %v1669, %v1486
    %v1785 = vmul.f32 %v1669, %v1487
    %v1786 = vmul.f32 %v1669, %v1488
    %v1787 = vmul.f32 %v1669, %v1489
    %v1788 = vmul.f32 %v1669, %v1490
    %v1789 = vmul.f32 %v1669, %v1491
    %v1790 = vmul.f32 %v1669, %v1492
    %v1791 = vmul.f32 %v1669, %v1493
    %v1792 = vmul.f32 %v1669, %v1494
    %v1793 = vmul.f32 %v1669, %v1495
    %v1794 = vmul.f32 %v1669, %v1496
    %v1795 = vmul.f32 %v1669, %v1497
    %v1796 = vmul.f32 %v1669, %v1498
    %v1797 = vmul.f32 %v1669, %v1499
    %v1798 = vmul.f32 %v1669, %v1500
    %v1799 = vmul.f32 %v1669, %v1501
    %v1800 = vmul.f32 %v1669, %v1502
    %v1801 = vmul.f32 %v1669, %v1503
    %v1802 = vmul.f32 %v1669, %v1504
    %v1803 = vmul.f32 %v1669, %v1505
    %v1804 = vmul.f32 %v1669, %v1506
    %v1805 = vmul.f32 %v1669, %v1507
    %v1806 = vmul.f32 %v1669, %v1508
    %v1807 = vmul.f32 %v1669, %v1509
    %v1808 = vmul.f32 %v1669, %v1510
    %v1809 = vmul.f32 %v1669, %v1511
    %v1810 = vmul.f32 %v1669, %v1512
    %v1811 = vmul.f32 %v1669, %v1513
    %v1812 = vmul.f32 %v1669, %v1514
    %v1813 = vmul.f32 %v1669, %v1515
    %v1814 = vmul.f32 %v1669, %v1516
    %v1815 = vmul.f32 %v1669, %v1517
    %v1816 = vmul.f32 %v1669, %v1518
    %v1817 = vmul.f32 %v1669, %v1519
    %v1818 = vsel %vm1521, %v1372, %v1670
    %v1819 = vsel %vm1522, %v1373, %v1671
    %v1820 = vsel %vm1523, %v1374, %v1672
    %v1821 = vsel %vm1524, %v1375, %v1673
    %v1822 = vsel %vm1525, %v1376, %v1674
    %v1823 = vsel %vm1526, %v1377, %v1675
    %v1824 = vsel %vm1527, %v1378, %v1676
    %v1825 = vsel %vm1528, %v1379, %v1677
    %v1826 = vsel %vm1529, %v1380, %v1678
    %v1827 = vsel %vm1530, %v1381, %v1679
    %v1828 = vsel %vm1531, %v1382, %v1680
    %v1829 = vsel %vm1532, %v1383, %v1681
    %v1830 = vsel %vm1533, %v1384, %v1682
    %v1831 = vsel %vm1534, %v1385, %v1683
    %v1832 = vsel %vm1535, %v1386, %v1684
    %v1833 = vsel %vm1536, %v1387, %v1685
    %v1834 = vsel %vm1537, %v1388, %v1686
    %v1835 = vsel %vm1538, %v1389, %v1687
    %v1836 = vsel %vm1539, %v1390, %v1688
    %v1837 = vsel %vm1540, %v1391, %v1689
    %v1838 = vsel %vm1541, %v1392, %v1690
    %v1839 = vsel %vm1542, %v1393, %v1691
    %v1840 = vsel %vm1543, %v1394, %v1692
    %v1841 = vsel %vm1544, %v1395, %v1693
    %v1842 = vsel %vm1545, %v1396, %v1694
    %v1843 = vsel %vm1546, %v1397, %v1695
    %v1844 = vsel %vm1547, %v1398, %v1696
    %v1845 = vsel %vm1548, %v1399, %v1697
    %v1846 = vsel %vm1549, %v1400, %v1698
    %v1847 = vsel %vm1550, %v1401, %v1699
    %v1848 = vsel %vm1551, %v1402, %v1700
    %v1849 = vsel %vm1552, %v1403, %v1701
    %v1850 = vsel %vm1553, %v1404, %v1702
    %v1851 = vsel %vm1554, %v1405, %v1703
    %v1852 = vsel %vm1555, %v1406, %v1704
    %v1853 = vsel %vm1556, %v1407, %v1705
    %v1854 = vsel %vm1557, %v1408, %v1706
    %v1855 = vsel %vm1558, %v1409, %v1707
    %v1856 = vsel %vm1559, %v1410, %v1708
    %v1857 = vsel %vm1560, %v1411, %v1709
    %v1858 = vsel %vm1561, %v1412, %v1710
    %v1859 = vsel %vm1562, %v1413, %v1711
    %v1860 = vsel %vm1563, %v1414, %v1712
    %v1861 = vsel %vm1564, %v1415, %v1713
    %v1862 = vsel %vm1565, %v1416, %v1714
    %v1863 = vsel %vm1566, %v1417, %v1715
    %v1864 = vsel %vm1567, %v1418, %v1716
    %v1865 = vsel %vm1568, %v1419, %v1717
    %v1866 = vsel %vm1569, %v1420, %v1718
    %v1867 = vsel %vm1570, %v1421, %v1719
    %v1868 = vsel %vm1571, %v1422, %v1720
    %v1869 = vsel %vm1572, %v1423, %v1721
    %v1870 = vsel %vm1573, %v1424, %v1722
    %v1871 = vsel %vm1574, %v1425, %v1723
    %v1872 = vsel %vm1575, %v1426, %v1724
    %v1873 = vsel %vm1576, %v1427, %v1725
    %v1874 = vsel %vm1577, %v1428, %v1726
    %v1875 = vsel %vm1578, %v1429, %v1727
    %v1876 = vsel %vm1579, %v1430, %v1728
    %v1877 = vsel %vm1580, %v1431, %v1729
    %v1878 = vsel %vm1581, %v1432, %v1730
    %v1879 = vsel %vm1582, %v1433, %v1731
    %v1880 = vsel %vm1583, %v1434, %v1732
    %v1881 = vsel %vm1584, %v1435, %v1733
    %v1882 = vsel %vm1585, %v1436, %v1734
    %v1883 = vsel %vm1586, %v1437, %v1735
    %v1884 = vsel %vm1587, %v1438, %v1736
    %v1885 = vsel %vm1588, %v1439, %v1737
    %v1886 = vsel %vm1589, %v1440, %v1738
    %v1887 = vsel %vm1590, %v1441, %v1739
    %v1888 = vsel %vm1591, %v1442, %v1740
    %v1889 = vsel %vm1592, %v1443, %v1741
    %v1890 = vsel %vm1593, %v1444, %v1742
    %v1891 = vsel %vm1594, %v1445, %v1743
    %v1892 = vsel %vm1595, %v1446, %v1744
    %v1893 = vsel %vm1596, %v1447, %v1745
    %v1894 = vsel %vm1597, %v1448, %v1746
    %v1895 = vsel %vm1598, %v1449, %v1747
    %v1896 = vsel %vm1599, %v1450, %v1748
    %v1897 = vsel %vm1600, %v1451, %v1749
    %v1898 = vsel %vm1601, %v1452, %v1750
    %v1899 = vsel %vm1602, %v1453, %v1751
    %v1900 = vsel %vm1603, %v1454, %v1752
    %v1901 = vsel %vm1604, %v1455, %v1753
    %v1902 = vsel %vm1605, %v1456, %v1754
    %v1903 = vsel %vm1606, %v1457, %v1755
    %v1904 = vsel %vm1607, %v1458, %v1756
    %v1905 = vsel %vm1608, %v1459, %v1757
    %v1906 = vsel %vm1609, %v1460, %v1758
    %v1907 = vsel %vm1610, %v1461, %v1759
    %v1908 = vsel %vm1611, %v1462, %v1760
    %v1909 = vsel %vm1612, %v1463, %v1761
    %v1910 = vsel %vm1613, %v1464, %v1762
    %v1911 = vsel %vm1614, %v1465, %v1763
    %v1912 = vsel %vm1615, %v1466, %v1764
    %v1913 = vsel %vm1616, %v1467, %v1765
    %v1914 = vsel %vm1617, %v1468, %v1766
    %v1915 = vsel %vm1618, %v1469, %v1767
    %v1916 = vsel %vm1619, %v1470, %v1768
    %v1917 = vsel %vm1620, %v1471, %v1769
    %v1918 = vsel %vm1621, %v1472, %v1770
    %v1919 = vsel %vm1622, %v1473, %v1771
    %v1920 = vsel %vm1623, %v1474, %v1772
    %v1921 = vsel %vm1624, %v1475, %v1773
    %v1922 = vsel %vm1625, %v1476, %v1774
    %v1923 = vsel %vm1626, %v1477, %v1775
    %v1924 = vsel %vm1627, %v1478, %v1776
    %v1925 = vsel %vm1628, %v1479, %v1777
    %v1926 = vsel %vm1629, %v1480, %v1778
    %v1927 = vsel %vm1630, %v1481, %v1779
    %v1928 = vsel %vm1631, %v1482, %v1780
    %v1929 = vsel %vm1632, %v1483, %v1781
    %v1930 = vsel %vm1633, %v1484, %v1782
    %v1931 = vsel %vm1634, %v1485, %v1783
    %v1932 = vsel %vm1635, %v1486, %v1784
    %v1933 = vsel %vm1636, %v1487, %v1785
    %v1934 = vsel %vm1637, %v1488, %v1786
    %v1935 = vsel %vm1638, %v1489, %v1787
    %v1936 = vsel %vm1639, %v1490, %v1788
    %v1937 = vsel %vm1640, %v1491, %v1789
    %v1938 = vsel %vm1641, %v1492, %v1790
    %v1939 = vsel %vm1642, %v1493, %v1791
    %v1940 = vsel %vm1643, %v1494, %v1792
    %v1941 = vsel %vm1644, %v1495, %v1793
    %v1942 = vsel %vm1645, %v1496, %v1794
    %v1943 = vsel %vm1646, %v1497, %v1795
    %v1944 = vsel %vm1647, %v1498, %v1796
    %v1945 = vsel %vm1648, %v1499, %v1797
    %v1946 = vsel %vm1649, %v1500, %v1798
    %v1947 = vsel %vm1650, %v1501, %v1799
    %v1948 = vsel %vm1651, %v1502, %v1800
    %v1949 = vsel %vm1652, %v1503, %v1801
    %v1950 = vsel %vm1653, %v1504, %v1802
    %v1951 = vsel %vm1654, %v1505, %v1803
    %v1952 = vsel %vm1655, %v1506, %v1804
    %v1953 = vsel %vm1656, %v1507, %v1805
    %v1954 = vsel %vm1657, %v1508, %v1806
    %v1955 = vsel %vm1658, %v1509, %v1807
    %v1956 = vsel %vm1659, %v1510, %v1808
    %v1957 = vsel %vm1660, %v1511, %v1809
    %v1958 = vsel %vm1661, %v1512, %v1810
    %v1959 = vsel %vm1662, %v1513, %v1811
    %v1960 = vsel %vm1663, %v1514, %v1812
    %v1961 = vsel %vm1664, %v1515, %v1813
    %v1962 = vsel %vm1665, %v1516, %v1814
    %v1963 = vsel %vm1666, %v1517, %v1815
    %v1964 = vsel %vm1667, %v1518, %v1816
    %v1965 = vsel %vm1668, %v1519, %v1817
    %s1966 = sld [smem:[#allocation3 + $0x4]]
    %vm1967 = vcmp.gt.f32.partialorder %v1818, 0.0
    %vm1968 = vcmp.gt.f32.partialorder %v1819, 0.0
    %vm1969 = vcmp.gt.f32.partialorder %v1820, 0.0
    %vm1970 = vcmp.gt.f32.partialorder %v1821, 0.0
    %vm1971 = vcmp.gt.f32.partialorder %v1822, 0.0
    %vm1972 = vcmp.gt.f32.partialorder %v1823, 0.0
    %vm1973 = vcmp.gt.f32.partialorder %v1824, 0.0
    %vm1974 = vcmp.gt.f32.partialorder %v1825, 0.0
    %vm1975 = vcmp.gt.f32.partialorder %v1826, 0.0
    %vm1976 = vcmp.gt.f32.partialorder %v1827, 0.0
    %vm1977 = vcmp.gt.f32.partialorder %v1828, 0.0
    %vm1978 = vcmp.gt.f32.partialorder %v1829, 0.0
    %vm1979 = vcmp.gt.f32.partialorder %v1830, 0.0
    %vm1980 = vcmp.gt.f32.partialorder %v1831, 0.0
    %vm1981 = vcmp.gt.f32.partialorder %v1832, 0.0
    %vm1982 = vcmp.gt.f32.partialorder %v1833, 0.0
    %vm1983 = vcmp.gt.f32.partialorder %v1834, 0.0
    %vm1984 = vcmp.gt.f32.partialorder %v1835, 0.0
    %vm1985 = vcmp.gt.f32.partialorder %v1836, 0.0
    %vm1986 = vcmp.gt.f32.partialorder %v1837, 0.0
    %vm1987 = vcmp.gt.f32.partialorder %v1838, 0.0
    %vm1988 = vcmp.gt.f32.partialorder %v1839, 0.0
    %vm1989 = vcmp.gt.f32.partialorder %v1840, 0.0
    %vm1990 = vcmp.gt.f32.partialorder %v1841, 0.0
    %vm1991 = vcmp.gt.f32.partialorder %v1842, 0.0
    %vm1992 = vcmp.gt.f32.partialorder %v1843, 0.0
    %vm1993 = vcmp.gt.f32.partialorder %v1844, 0.0
    %vm1994 = vcmp.gt.f32.partialorder %v1845, 0.0
    %vm1995 = vcmp.gt.f32.partialorder %v1846, 0.0
    %vm1996 = vcmp.gt.f32.partialorder %v1847, 0.0
    %vm1997 = vcmp.gt.f32.partialorder %v1848, 0.0
    %vm1998 = vcmp.gt.f32.partialorder %v1849, 0.0
    %vm1999 = vcmp.gt.f32.partialorder %v1850, 0.0
    %vm2000 = vcmp.gt.f32.partialorder %v1851, 0.0
    %vm2001 = vcmp.gt.f32.partialorder %v1852, 0.0
    %vm2002 = vcmp.gt.f32.partialorder %v1853, 0.0
    %vm2003 = vcmp.gt.f32.partialorder %v1854, 0.0
    %vm2004 = vcmp.gt.f32.partialorder %v1855, 0.0
    %vm2005 = vcmp.gt.f32.partialorder %v1856, 0.0
    %vm2006 = vcmp.gt.f32.partialorder %v1857, 0.0
    %vm2007 = vcmp.gt.f32.partialorder %v1858, 0.0
    %vm2008 = vcmp.gt.f32.partialorder %v1859, 0.0
    %vm2009 = vcmp.gt.f32.partialorder %v1860, 0.0
    %vm2010 = vcmp.gt.f32.partialorder %v1861, 0.0
    %vm2011 = vcmp.gt.f32.partialorder %v1862, 0.0
    %vm2012 = vcmp.gt.f32.partialorder %v1863, 0.0
    %vm2013 = vcmp.gt.f32.partialorder %v1864, 0.0
    %vm2014 = vcmp.gt.f32.partialorder %v1865, 0.0
    %vm2015 = vcmp.gt.f32.partialorder %v1866, 0.0
    %vm2016 = vcmp.gt.f32.partialorder %v1867, 0.0
    %vm2017 = vcmp.gt.f32.partialorder %v1868, 0.0
    %vm2018 = vcmp.gt.f32.partialorder %v1869, 0.0
    %vm2019 = vcmp.gt.f32.partialorder %v1870, 0.0
    %vm2020 = vcmp.gt.f32.partialorder %v1871, 0.0
    %vm2021 = vcmp.gt.f32.partialorder %v1872, 0.0
    %vm2022 = vcmp.gt.f32.partialorder %v1873, 0.0
    %vm2023 = vcmp.gt.f32.partialorder %v1874, 0.0
    %vm2024 = vcmp.gt.f32.partialorder %v1875, 0.0
    %vm2025 = vcmp.gt.f32.partialorder %v1876, 0.0
    %vm2026 = vcmp.gt.f32.partialorder %v1877, 0.0
    %vm2027 = vcmp.gt.f32.partialorder %v1878, 0.0
    %vm2028 = vcmp.gt.f32.partialorder %v1879, 0.0
    %vm2029 = vcmp.gt.f32.partialorder %v1880, 0.0
    %vm2030 = vcmp.gt.f32.partialorder %v1881, 0.0
    %vm2031 = vcmp.gt.f32.partialorder %v1882, 0.0
    %vm2032 = vcmp.gt.f32.partialorder %v1883, 0.0
    %vm2033 = vcmp.gt.f32.partialorder %v1884, 0.0
    %vm2034 = vcmp.gt.f32.partialorder %v1885, 0.0
    %vm2035 = vcmp.gt.f32.partialorder %v1886, 0.0
    %vm2036 = vcmp.gt.f32.partialorder %v1887, 0.0
    %vm2037 = vcmp.gt.f32.partialorder %v1888, 0.0
    %vm2038 = vcmp.gt.f32.partialorder %v1889, 0.0
    %vm2039 = vcmp.gt.f32.partialorder %v1890, 0.0
    %vm2040 = vcmp.gt.f32.partialorder %v1891, 0.0
    %vm2041 = vcmp.gt.f32.partialorder %v1892, 0.0
    %vm2042 = vcmp.gt.f32.partialorder %v1893, 0.0
    %vm2043 = vcmp.gt.f32.partialorder %v1894, 0.0
    %vm2044 = vcmp.gt.f32.partialorder %v1895, 0.0
    %vm2045 = vcmp.gt.f32.partialorder %v1896, 0.0
    %vm2046 = vcmp.gt.f32.partialorder %v1897, 0.0
    %vm2047 = vcmp.gt.f32.partialorder %v1898, 0.0
    %vm2048 = vcmp.gt.f32.partialorder %v1899, 0.0
    %vm2049 = vcmp.gt.f32.partialorder %v1900, 0.0
    %vm2050 = vcmp.gt.f32.partialorder %v1901, 0.0
    %vm2051 = vcmp.gt.f32.partialorder %v1902, 0.0
    %vm2052 = vcmp.gt.f32.partialorder %v1903, 0.0
    %vm2053 = vcmp.gt.f32.partialorder %v1904, 0.0
    %vm2054 = vcmp.gt.f32.partialorder %v1905, 0.0
    %vm2055 = vcmp.gt.f32.partialorder %v1906, 0.0
    %vm2056 = vcmp.gt.f32.partialorder %v1907, 0.0
    %vm2057 = vcmp.gt.f32.partialorder %v1908, 0.0
    %vm2058 = vcmp.gt.f32.partialorder %v1909, 0.0
    %vm2059 = vcmp.gt.f32.partialorder %v1910, 0.0
    %vm2060 = vcmp.gt.f32.partialorder %v1911, 0.0
    %vm2061 = vcmp.gt.f32.partialorder %v1912, 0.0
    %vm2062 = vcmp.gt.f32.partialorder %v1913, 0.0
    %vm2063 = vcmp.gt.f32.partialorder %v1914, 0.0
    %vm2064 = vcmp.gt.f32.partialorder %v1915, 0.0
    %vm2065 = vcmp.gt.f32.partialorder %v1916, 0.0
    %vm2066 = vcmp.gt.f32.partialorder %v1917, 0.0
    %vm2067 = vcmp.gt.f32.partialorder %v1918, 0.0
    %vm2068 = vcmp.gt.f32.partialorder %v1919, 0.0
    %vm2069 = vcmp.gt.f32.partialorder %v1920, 0.0
    %vm2070 = vcmp.gt.f32.partialorder %v1921, 0.0
    %vm2071 = vcmp.gt.f32.partialorder %v1922, 0.0
    %vm2072 = vcmp.gt.f32.partialorder %v1923, 0.0
    %vm2073 = vcmp.gt.f32.partialorder %v1924, 0.0
    %vm2074 = vcmp.gt.f32.partialorder %v1925, 0.0
    %vm2075 = vcmp.gt.f32.partialorder %v1926, 0.0
    %vm2076 = vcmp.gt.f32.partialorder %v1927, 0.0
    %vm2077 = vcmp.gt.f32.partialorder %v1928, 0.0
    %vm2078 = vcmp.gt.f32.partialorder %v1929, 0.0
    %vm2079 = vcmp.gt.f32.partialorder %v1930, 0.0
    %vm2080 = vcmp.gt.f32.partialorder %v1931, 0.0
    %vm2081 = vcmp.gt.f32.partialorder %v1932, 0.0
    %vm2082 = vcmp.gt.f32.partialorder %v1933, 0.0
    %vm2083 = vcmp.gt.f32.partialorder %v1934, 0.0
    %vm2084 = vcmp.gt.f32.partialorder %v1935, 0.0
    %vm2085 = vcmp.gt.f32.partialorder %v1936, 0.0
    %vm2086 = vcmp.gt.f32.partialorder %v1937, 0.0
    %vm2087 = vcmp.gt.f32.partialorder %v1938, 0.0
    %vm2088 = vcmp.gt.f32.partialorder %v1939, 0.0
    %vm2089 = vcmp.gt.f32.partialorder %v1940, 0.0
    %vm2090 = vcmp.gt.f32.partialorder %v1941, 0.0
    %vm2091 = vcmp.gt.f32.partialorder %v1942, 0.0
    %vm2092 = vcmp.gt.f32.partialorder %v1943, 0.0
    %vm2093 = vcmp.gt.f32.partialorder %v1944, 0.0
    %vm2094 = vcmp.gt.f32.partialorder %v1945, 0.0
    %vm2095 = vcmp.gt.f32.partialorder %v1946, 0.0
    %vm2096 = vcmp.gt.f32.partialorder %v1947, 0.0
    %vm2097 = vcmp.gt.f32.partialorder %v1948, 0.0
    %vm2098 = vcmp.gt.f32.partialorder %v1949, 0.0
    %vm2099 = vcmp.gt.f32.partialorder %v1950, 0.0
    %vm2100 = vcmp.gt.f32.partialorder %v1951, 0.0
    %vm2101 = vcmp.gt.f32.partialorder %v1952, 0.0
    %vm2102 = vcmp.gt.f32.partialorder %v1953, 0.0
    %vm2103 = vcmp.gt.f32.partialorder %v1954, 0.0
    %vm2104 = vcmp.gt.f32.partialorder %v1955, 0.0
    %vm2105 = vcmp.gt.f32.partialorder %v1956, 0.0
    %vm2106 = vcmp.gt.f32.partialorder %v1957, 0.0
    %vm2107 = vcmp.gt.f32.partialorder %v1958, 0.0
    %vm2108 = vcmp.gt.f32.partialorder %v1959, 0.0
    %vm2109 = vcmp.gt.f32.partialorder %v1960, 0.0
    %vm2110 = vcmp.gt.f32.partialorder %v1961, 0.0
    %vm2111 = vcmp.gt.f32.partialorder %v1962, 0.0
    %vm2112 = vcmp.gt.f32.partialorder %v1963, 0.0
    %vm2113 = vcmp.gt.f32.partialorder %v1964, 0.0
    %vm2114 = vcmp.gt.f32.partialorder %v1965, 0.0
    %v2115 = vstv %s1966
    %v2116 = vmul.f32 %v2115, %v1818
    %v2117 = vmul.f32 %v2115, %v1819
    %v2118 = vmul.f32 %v2115, %v1820
    %v2119 = vmul.f32 %v2115, %v1821
    %v2120 = vmul.f32 %v2115, %v1822
    %v2121 = vmul.f32 %v2115, %v1823
    %v2122 = vmul.f32 %v2115, %v1824
    %v2123 = vmul.f32 %v2115, %v1825
    %v2124 = vmul.f32 %v2115, %v1826
    %v2125 = vmul.f32 %v2115, %v1827
    %v2126 = vmul.f32 %v2115, %v1828
    %v2127 = vmul.f32 %v2115, %v1829
    %v2128 = vmul.f32 %v2115, %v1830
    %v2129 = vmul.f32 %v2115, %v1831
    %v2130 = vmul.f32 %v2115, %v1832
    %v2131 = vmul.f32 %v2115, %v1833
    %v2132 = vmul.f32 %v2115, %v1834
    %v2133 = vmul.f32 %v2115, %v1835
    %v2134 = vmul.f32 %v2115, %v1836
    %v2135 = vmul.f32 %v2115, %v1837
    %v2136 = vmul.f32 %v2115, %v1838
    %v2137 = vmul.f32 %v2115, %v1839
    %v2138 = vmul.f32 %v2115, %v1840
    %v2139 = vmul.f32 %v2115, %v1841
    %v2140 = vmul.f32 %v2115, %v1842
    %v2141 = vmul.f32 %v2115, %v1843
    %v2142 = vmul.f32 %v2115, %v1844
    %v2143 = vmul.f32 %v2115, %v1845
    %v2144 = vmul.f32 %v2115, %v1846
    %v2145 = vmul.f32 %v2115, %v1847
    %v2146 = vmul.f32 %v2115, %v1848
    %v2147 = vmul.f32 %v2115, %v1849
    %v2148 = vmul.f32 %v2115, %v1850
    %v2149 = vmul.f32 %v2115, %v1851
    %v2150 = vmul.f32 %v2115, %v1852
    %v2151 = vmul.f32 %v2115, %v1853
    %v2152 = vmul.f32 %v2115, %v1854
    %v2153 = vmul.f32 %v2115, %v1855
    %v2154 = vmul.f32 %v2115, %v1856
    %v2155 = vmul.f32 %v2115, %v1857
    %v2156 = vmul.f32 %v2115, %v1858
    %v2157 = vmul.f32 %v2115, %v1859
    %v2158 = vmul.f32 %v2115, %v1860
    %v2159 = vmul.f32 %v2115, %v1861
    %v2160 = vmul.f32 %v2115, %v1862
    %v2161 = vmul.f32 %v2115, %v1863
    %v2162 = vmul.f32 %v2115, %v1864
    %v2163 = vmul.f32 %v2115, %v1865
    %v2164 = vmul.f32 %v2115, %v1866
    %v2165 = vmul.f32 %v2115, %v1867
    %v2166 = vmul.f32 %v2115, %v1868
    %v2167 = vmul.f32 %v2115, %v1869
    %v2168 = vmul.f32 %v2115, %v1870
    %v2169 = vmul.f32 %v2115, %v1871
    %v2170 = vmul.f32 %v2115, %v1872
    %v2171 = vmul.f32 %v2115, %v1873
    %v2172 = vmul.f32 %v2115, %v1874
    %v2173 = vmul.f32 %v2115, %v1875
    %v2174 = vmul.f32 %v2115, %v1876
    %v2175 = vmul.f32 %v2115, %v1877
    %v2176 = vmul.f32 %v2115, %v1878
    %v2177 = vmul.f32 %v2115, %v1879
    %v2178 = vmul.f32 %v2115, %v1880
    %v2179 = vmul.f32 %v2115, %v1881
    %v2180 = vmul.f32 %v2115, %v1882
    %v2181 = vmul.f32 %v2115, %v1883
    %v2182 = vmul.f32 %v2115, %v1884
    %v2183 = vmul.f32 %v2115, %v1885
    %v2184 = vmul.f32 %v2115, %v1886
    %v2185 = vmul.f32 %v2115, %v1887
    %v2186 = vmul.f32 %v2115, %v1888
    %v2187 = vmul.f32 %v2115, %v1889
    %v2188 = vmul.f32 %v2115, %v1890
    %v2189 = vmul.f32 %v2115, %v1891
    %v2190 = vmul.f32 %v2115, %v1892
    %v2191 = vmul.f32 %v2115, %v1893
    %v2192 = vmul.f32 %v2115, %v1894
    %v2193 = vmul.f32 %v2115, %v1895
    %v2194 = vmul.f32 %v2115, %v1896
    %v2195 = vmul.f32 %v2115, %v1897
    %v2196 = vmul.f32 %v2115, %v1898
    %v2197 = vmul.f32 %v2115, %v1899
    %v2198 = vmul.f32 %v2115, %v1900
    %v2199 = vmul.f32 %v2115, %v1901
    %v2200 = vmul.f32 %v2115, %v1902
    %v2201 = vmul.f32 %v2115, %v1903
    %v2202 = vmul.f32 %v2115, %v1904
    %v2203 = vmul.f32 %v2115, %v1905
    %v2204 = vmul.f32 %v2115, %v1906
    %v2205 = vmul.f32 %v2115, %v1907
    %v2206 = vmul.f32 %v2115, %v1908
    %v2207 = vmul.f32 %v2115, %v1909
    %v2208 = vmul.f32 %v2115, %v1910
    %v2209 = vmul.f32 %v2115, %v1911
    %v2210 = vmul.f32 %v2115, %v1912
    %v2211 = vmul.f32 %v2115, %v1913
    %v2212 = vmul.f32 %v2115, %v1914
    %v2213 = vmul.f32 %v2115, %v1915
    %v2214 = vmul.f32 %v2115, %v1916
    %v2215 = vmul.f32 %v2115, %v1917
    %v2216 = vmul.f32 %v2115, %v1918
    %v2217 = vmul.f32 %v2115, %v1919
    %v2218 = vmul.f32 %v2115, %v1920
    %v2219 = vmul.f32 %v2115, %v1921
    %v2220 = vmul.f32 %v2115, %v1922
    %v2221 = vmul.f32 %v2115, %v1923
    %v2222 = vmul.f32 %v2115, %v1924
    %v2223 = vmul.f32 %v2115, %v1925
    %v2224 = vmul.f32 %v2115, %v1926
    %v2225 = vmul.f32 %v2115, %v1927
    %v2226 = vmul.f32 %v2115, %v1928
    %v2227 = vmul.f32 %v2115, %v1929
    %v2228 = vmul.f32 %v2115, %v1930
    %v2229 = vmul.f32 %v2115, %v1931
    %v2230 = vmul.f32 %v2115, %v1932
    %v2231 = vmul.f32 %v2115, %v1933
    %v2232 = vmul.f32 %v2115, %v1934
    %v2233 = vmul.f32 %v2115, %v1935
    %v2234 = vmul.f32 %v2115, %v1936
    %v2235 = vmul.f32 %v2115, %v1937
    %v2236 = vmul.f32 %v2115, %v1938
    %v2237 = vmul.f32 %v2115, %v1939
    %v2238 = vmul.f32 %v2115, %v1940
    %v2239 = vmul.f32 %v2115, %v1941
    %v2240 = vmul.f32 %v2115, %v1942
    %v2241 = vmul.f32 %v2115, %v1943
    %v2242 = vmul.f32 %v2115, %v1944
    %v2243 = vmul.f32 %v2115, %v1945
    %v2244 = vmul.f32 %v2115, %v1946
    %v2245 = vmul.f32 %v2115, %v1947
    %v2246 = vmul.f32 %v2115, %v1948
    %v2247 = vmul.f32 %v2115, %v1949
    %v2248 = vmul.f32 %v2115, %v1950
    %v2249 = vmul.f32 %v2115, %v1951
    %v2250 = vmul.f32 %v2115, %v1952
    %v2251 = vmul.f32 %v2115, %v1953
    %v2252 = vmul.f32 %v2115, %v1954
    %v2253 = vmul.f32 %v2115, %v1955
    %v2254 = vmul.f32 %v2115, %v1956
    %v2255 = vmul.f32 %v2115, %v1957
    %v2256 = vmul.f32 %v2115, %v1958
    %v2257 = vmul.f32 %v2115, %v1959
    %v2258 = vmul.f32 %v2115, %v1960
    %v2259 = vmul.f32 %v2115, %v1961
    %v2260 = vmul.f32 %v2115, %v1962
    %v2261 = vmul.f32 %v2115, %v1963
    %v2262 = vmul.f32 %v2115, %v1964
    %v2263 = vmul.f32 %v2115, %v1965
    %v2264 = vsel %vm1967, %v1818, %v2116
    %v2265 = vsel %vm1968, %v1819, %v2117
    %v2266 = vsel %vm1969, %v1820, %v2118
    %v2267 = vsel %vm1970, %v1821, %v2119
    %v2268 = vsel %vm1971, %v1822, %v2120
    %v2269 = vsel %vm1972, %v1823, %v2121
    %v2270 = vsel %vm1973, %v1824, %v2122
    %v2271 = vsel %vm1974, %v1825, %v2123
    %v2272 = vsel %vm1975, %v1826, %v2124
    %v2273 = vsel %vm1976, %v1827, %v2125
    %v2274 = vsel %vm1977, %v1828, %v2126
    %v2275 = vsel %vm1978, %v1829, %v2127
    %v2276 = vsel %vm1979, %v1830, %v2128
    %v2277 = vsel %vm1980, %v1831, %v2129
    %v2278 = vsel %vm1981, %v1832, %v2130
    %v2279 = vsel %vm1982, %v1833, %v2131
    %v2280 = vsel %vm1983, %v1834, %v2132
    %v2281 = vsel %vm1984, %v1835, %v2133
    %v2282 = vsel %vm1985, %v1836, %v2134
    %v2283 = vsel %vm1986, %v1837, %v2135
    %v2284 = vsel %vm1987, %v1838, %v2136
    %v2285 = vsel %vm1988, %v1839, %v2137
    %v2286 = vsel %vm1989, %v1840, %v2138
    %v2287 = vsel %vm1990, %v1841, %v2139
    %v2288 = vsel %vm1991, %v1842, %v2140
    %v2289 = vsel %vm1992, %v1843, %v2141
    %v2290 = vsel %vm1993, %v1844, %v2142
    %v2291 = vsel %vm1994, %v1845, %v2143
    %v2292 = vsel %vm1995, %v1846, %v2144
    %v2293 = vsel %vm1996, %v1847, %v2145
    %v2294 = vsel %vm1997, %v1848, %v2146
    %v2295 = vsel %vm1998, %v1849, %v2147
    %v2296 = vsel %vm1999, %v1850, %v2148
    %v2297 = vsel %vm2000, %v1851, %v2149
    %v2298 = vsel %vm2001, %v1852, %v2150
    %v2299 = vsel %vm2002, %v1853, %v2151
    %v2300 = vsel %vm2003, %v1854, %v2152
    %v2301 = vsel %vm2004, %v1855, %v2153
    %v2302 = vsel %vm2005, %v1856, %v2154
    %v2303 = vsel %vm2006, %v1857, %v2155
    %v2304 = vsel %vm2007, %v1858, %v2156
    %v2305 = vsel %vm2008, %v1859, %v2157
    %v2306 = vsel %vm2009, %v1860, %v2158
    %v2307 = vsel %vm2010, %v1861, %v2159
    %v2308 = vsel %vm2011, %v1862, %v2160
    %v2309 = vsel %vm2012, %v1863, %v2161
    %v2310 = vsel %vm2013, %v1864, %v2162
    %v2311 = vsel %vm2014, %v1865, %v2163
    %v2312 = vsel %vm2015, %v1866, %v2164
    %v2313 = vsel %vm2016, %v1867, %v2165
    %v2314 = vsel %vm2017, %v1868, %v2166
    %v2315 = vsel %vm2018, %v1869, %v2167
    %v2316 = vsel %vm2019, %v1870, %v2168
    %v2317 = vsel %vm2020, %v1871, %v2169
    %v2318 = vsel %vm2021, %v1872, %v2170
    %v2319 = vsel %vm2022, %v1873, %v2171
    %v2320 = vsel %vm2023, %v1874, %v2172
    %v2321 = vsel %vm2024, %v1875, %v2173
    %v2322 = vsel %vm2025, %v1876, %v2174
    %v2323 = vsel %vm2026, %v1877, %v2175
    %v2324 = vsel %vm2027, %v1878, %v2176
    %v2325 = vsel %vm2028, %v1879, %v2177
    %v2326 = vsel %vm2029, %v1880, %v2178
    %v2327 = vsel %vm2030, %v1881, %v2179
    %v2328 = vsel %vm2031, %v1882, %v2180
    %v2329 = vsel %vm2032, %v1883, %v2181
    %v2330 = vsel %vm2033, %v1884, %v2182
    %v2331 = vsel %vm2034, %v1885, %v2183
    %v2332 = vsel %vm2035, %v1886, %v2184
    %v2333 = vsel %vm2036, %v1887, %v2185
    %v2334 = vsel %vm2037, %v1888, %v2186
    %v2335 = vsel %vm2038, %v1889, %v2187
    %v2336 = vsel %vm2039, %v1890, %v2188
    %v2337 = vsel %vm2040, %v1891, %v2189
    %v2338 = vsel %vm2041, %v1892, %v2190
    %v2339 = vsel %vm2042, %v1893, %v2191
    %v2340 = vsel %vm2043, %v1894, %v2192
    %v2341 = vsel %vm2044, %v1895, %v2193
    %v2342 = vsel %vm2045, %v1896, %v2194
    %v2343 = vsel %vm2046, %v1897, %v2195
    %v2344 = vsel %vm2047, %v1898, %v2196
    %v2345 = vsel %vm2048, %v1899, %v2197
    %v2346 = vsel %vm2049, %v1900, %v2198
    %v2347 = vsel %vm2050, %v1901, %v2199
    %v2348 = vsel %vm2051, %v1902, %v2200
    %v2349 = vsel %vm2052, %v1903, %v2201
    %v2350 = vsel %vm2053, %v1904, %v2202
    %v2351 = vsel %vm2054, %v1905, %v2203
    %v2352 = vsel %vm2055, %v1906, %v2204
    %v2353 = vsel %vm2056, %v1907, %v2205
    %v2354 = vsel %vm2057, %v1908, %v2206
    %v2355 = vsel %vm2058, %v1909, %v2207
    %v2356 = vsel %vm2059, %v1910, %v2208
    %v2357 = vsel %vm2060, %v1911, %v2209
    %v2358 = vsel %vm2061, %v1912, %v2210
    %v2359 = vsel %vm2062, %v1913, %v2211
    %v2360 = vsel %vm2063, %v1914, %v2212
    %v2361 = vsel %vm2064, %v1915, %v2213
    %v2362 = vsel %vm2065, %v1916, %v2214
    %v2363 = vsel %vm2066, %v1917, %v2215
    %v2364 = vsel %vm2067, %v1918, %v2216
    %v2365 = vsel %vm2068, %v1919, %v2217
    %v2366 = vsel %vm2069, %v1920, %v2218
    %v2367 = vsel %vm2070, %v1921, %v2219
    %v2368 = vsel %vm2071, %v1922, %v2220
    %v2369 = vsel %vm2072, %v1923, %v2221
    %v2370 = vsel %vm2073, %v1924, %v2222
    %v2371 = vsel %vm2074, %v1925, %v2223
    %v2372 = vsel %vm2075, %v1926, %v2224
    %v2373 = vsel %vm2076, %v1927, %v2225
    %v2374 = vsel %vm2077, %v1928, %v2226
    %v2375 = vsel %vm2078, %v1929, %v2227
    %v2376 = vsel %vm2079, %v1930, %v2228
    %v2377 = vsel %vm2080, %v1931, %v2229
    %v2378 = vsel %vm2081, %v1932, %v2230
    %v2379 = vsel %vm2082, %v1933, %v2231
    %v2380 = vsel %vm2083, %v1934, %v2232
    %v2381 = vsel %vm2084, %v1935, %v2233
    %v2382 = vsel %vm2085, %v1936, %v2234
    %v2383 = vsel %vm2086, %v1937, %v2235
    %v2384 = vsel %vm2087, %v1938, %v2236
    %v2385 = vsel %vm2088, %v1939, %v2237
    %v2386 = vsel %vm2089, %v1940, %v2238
    %v2387 = vsel %vm2090, %v1941, %v2239
    %v2388 = vsel %vm2091, %v1942, %v2240
    %v2389 = vsel %vm2092, %v1943, %v2241
    %v2390 = vsel %vm2093, %v1944, %v2242
    %v2391 = vsel %vm2094, %v1945, %v2243
    %v2392 = vsel %vm2095, %v1946, %v2244
    %v2393 = vsel %vm2096, %v1947, %v2245
    %v2394 = vsel %vm2097, %v1948, %v2246
    %v2395 = vsel %vm2098, %v1949, %v2247
    %v2396 = vsel %vm2099, %v1950, %v2248
    %v2397 = vsel %vm2100, %v1951, %v2249
    %v2398 = vsel %vm2101, %v1952, %v2250
    %v2399 = vsel %vm2102, %v1953, %v2251
    %v2400 = vsel %vm2103, %v1954, %v2252
    %v2401 = vsel %vm2104, %v1955, %v2253
    %v2402 = vsel %vm2105, %v1956, %v2254
    %v2403 = vsel %vm2106, %v1957, %v2255
    %v2404 = vsel %vm2107, %v1958, %v2256
    %v2405 = vsel %vm2108, %v1959, %v2257
    %v2406 = vsel %vm2109, %v1960, %v2258
    %v2407 = vsel %vm2110, %v1961, %v2259
    %v2408 = vsel %vm2111, %v1962, %v2260
    %v2409 = vsel %vm2112, %v1963, %v2261
    %v2410 = vsel %vm2113, %v1964, %v2262
    %v2411 = vsel %vm2114, %v1965, %v2263
    %s2412 = sld [smem:[#allocation3 + $0x5]]
    %vm2413 = vcmp.gt.f32.partialorder %v2264, 0.0
    %vm2414 = vcmp.gt.f32.partialorder %v2265, 0.0
    %vm2415 = vcmp.gt.f32.partialorder %v2266, 0.0
    %vm2416 = vcmp.gt.f32.partialorder %v2267, 0.0
    %vm2417 = vcmp.gt.f32.partialorder %v2268, 0.0
    %vm2418 = vcmp.gt.f32.partialorder %v2269, 0.0
    %vm2419 = vcmp.gt.f32.partialorder %v2270, 0.0
    %vm2420 = vcmp.gt.f32.partialorder %v2271, 0.0
    %vm2421 = vcmp.gt.f32.partialorder %v2272, 0.0
    %vm2422 = vcmp.gt.f32.partialorder %v2273, 0.0
    %vm2423 = vcmp.gt.f32.partialorder %v2274, 0.0
    %vm2424 = vcmp.gt.f32.partialorder %v2275, 0.0
    %vm2425 = vcmp.gt.f32.partialorder %v2276, 0.0
    %vm2426 = vcmp.gt.f32.partialorder %v2277, 0.0
    %vm2427 = vcmp.gt.f32.partialorder %v2278, 0.0
    %vm2428 = vcmp.gt.f32.partialorder %v2279, 0.0
    %vm2429 = vcmp.gt.f32.partialorder %v2280, 0.0
    %vm2430 = vcmp.gt.f32.partialorder %v2281, 0.0
    %vm2431 = vcmp.gt.f32.partialorder %v2282, 0.0
    %vm2432 = vcmp.gt.f32.partialorder %v2283, 0.0
    %vm2433 = vcmp.gt.f32.partialorder %v2284, 0.0
    %vm2434 = vcmp.gt.f32.partialorder %v2285, 0.0
    %vm2435 = vcmp.gt.f32.partialorder %v2286, 0.0
    %vm2436 = vcmp.gt.f32.partialorder %v2287, 0.0
    %vm2437 = vcmp.gt.f32.partialorder %v2288, 0.0
    %vm2438 = vcmp.gt.f32.partialorder %v2289, 0.0
    %vm2439 = vcmp.gt.f32.partialorder %v2290, 0.0
    %vm2440 = vcmp.gt.f32.partialorder %v2291, 0.0
    %vm2441 = vcmp.gt.f32.partialorder %v2292, 0.0
    %vm2442 = vcmp.gt.f32.partialorder %v2293, 0.0
    %vm2443 = vcmp.gt.f32.partialorder %v2294, 0.0
    %vm2444 = vcmp.gt.f32.partialorder %v2295, 0.0
    %vm2445 = vcmp.gt.f32.partialorder %v2296, 0.0
    %vm2446 = vcmp.gt.f32.partialorder %v2297, 0.0
    %vm2447 = vcmp.gt.f32.partialorder %v2298, 0.0
    %vm2448 = vcmp.gt.f32.partialorder %v2299, 0.0
    %vm2449 = vcmp.gt.f32.partialorder %v2300, 0.0
    %vm2450 = vcmp.gt.f32.partialorder %v2301, 0.0
    %vm2451 = vcmp.gt.f32.partialorder %v2302, 0.0
    %vm2452 = vcmp.gt.f32.partialorder %v2303, 0.0
    %vm2453 = vcmp.gt.f32.partialorder %v2304, 0.0
    %vm2454 = vcmp.gt.f32.partialorder %v2305, 0.0
    %vm2455 = vcmp.gt.f32.partialorder %v2306, 0.0
    %vm2456 = vcmp.gt.f32.partialorder %v2307, 0.0
    %vm2457 = vcmp.gt.f32.partialorder %v2308, 0.0
    %vm2458 = vcmp.gt.f32.partialorder %v2309, 0.0
    %vm2459 = vcmp.gt.f32.partialorder %v2310, 0.0
    %vm2460 = vcmp.gt.f32.partialorder %v2311, 0.0
    %vm2461 = vcmp.gt.f32.partialorder %v2312, 0.0
    %vm2462 = vcmp.gt.f32.partialorder %v2313, 0.0
    %vm2463 = vcmp.gt.f32.partialorder %v2314, 0.0
    %vm2464 = vcmp.gt.f32.partialorder %v2315, 0.0
    %vm2465 = vcmp.gt.f32.partialorder %v2316, 0.0
    %vm2466 = vcmp.gt.f32.partialorder %v2317, 0.0
    %vm2467 = vcmp.gt.f32.partialorder %v2318, 0.0
    %vm2468 = vcmp.gt.f32.partialorder %v2319, 0.0
    %vm2469 = vcmp.gt.f32.partialorder %v2320, 0.0
    %vm2470 = vcmp.gt.f32.partialorder %v2321, 0.0
    %vm2471 = vcmp.gt.f32.partialorder %v2322, 0.0
    %vm2472 = vcmp.gt.f32.partialorder %v2323, 0.0
    %vm2473 = vcmp.gt.f32.partialorder %v2324, 0.0
    %vm2474 = vcmp.gt.f32.partialorder %v2325, 0.0
    %vm2475 = vcmp.gt.f32.partialorder %v2326, 0.0
    %vm2476 = vcmp.gt.f32.partialorder %v2327, 0.0
    %vm2477 = vcmp.gt.f32.partialorder %v2328, 0.0
    %vm2478 = vcmp.gt.f32.partialorder %v2329, 0.0
    %vm2479 = vcmp.gt.f32.partialorder %v2330, 0.0
    %vm2480 = vcmp.gt.f32.partialorder %v2331, 0.0
    %vm2481 = vcmp.gt.f32.partialorder %v2332, 0.0
    %vm2482 = vcmp.gt.f32.partialorder %v2333, 0.0
    %vm2483 = vcmp.gt.f32.partialorder %v2334, 0.0
    %vm2484 = vcmp.gt.f32.partialorder %v2335, 0.0
    %vm2485 = vcmp.gt.f32.partialorder %v2336, 0.0
    %vm2486 = vcmp.gt.f32.partialorder %v2337, 0.0
    %vm2487 = vcmp.gt.f32.partialorder %v2338, 0.0
    %vm2488 = vcmp.gt.f32.partialorder %v2339, 0.0
    %vm2489 = vcmp.gt.f32.partialorder %v2340, 0.0
    %vm2490 = vcmp.gt.f32.partialorder %v2341, 0.0
    %vm2491 = vcmp.gt.f32.partialorder %v2342, 0.0
    %vm2492 = vcmp.gt.f32.partialorder %v2343, 0.0
    %vm2493 = vcmp.gt.f32.partialorder %v2344, 0.0
    %vm2494 = vcmp.gt.f32.partialorder %v2345, 0.0
    %vm2495 = vcmp.gt.f32.partialorder %v2346, 0.0
    %vm2496 = vcmp.gt.f32.partialorder %v2347, 0.0
    %vm2497 = vcmp.gt.f32.partialorder %v2348, 0.0
    %vm2498 = vcmp.gt.f32.partialorder %v2349, 0.0
    %vm2499 = vcmp.gt.f32.partialorder %v2350, 0.0
    %vm2500 = vcmp.gt.f32.partialorder %v2351, 0.0
    %vm2501 = vcmp.gt.f32.partialorder %v2352, 0.0
    %vm2502 = vcmp.gt.f32.partialorder %v2353, 0.0
    %vm2503 = vcmp.gt.f32.partialorder %v2354, 0.0
    %vm2504 = vcmp.gt.f32.partialorder %v2355, 0.0
    %vm2505 = vcmp.gt.f32.partialorder %v2356, 0.0
    %vm2506 = vcmp.gt.f32.partialorder %v2357, 0.0
    %vm2507 = vcmp.gt.f32.partialorder %v2358, 0.0
    %vm2508 = vcmp.gt.f32.partialorder %v2359, 0.0
    %vm2509 = vcmp.gt.f32.partialorder %v2360, 0.0
    %vm2510 = vcmp.gt.f32.partialorder %v2361, 0.0
    %vm2511 = vcmp.gt.f32.partialorder %v2362, 0.0
    %vm2512 = vcmp.gt.f32.partialorder %v2363, 0.0
    %vm2513 = vcmp.gt.f32.partialorder %v2364, 0.0
    %vm2514 = vcmp.gt.f32.partialorder %v2365, 0.0
    %vm2515 = vcmp.gt.f32.partialorder %v2366, 0.0
    %vm2516 = vcmp.gt.f32.partialorder %v2367, 0.0
    %vm2517 = vcmp.gt.f32.partialorder %v2368, 0.0
    %vm2518 = vcmp.gt.f32.partialorder %v2369, 0.0
    %vm2519 = vcmp.gt.f32.partialorder %v2370, 0.0
    %vm2520 = vcmp.gt.f32.partialorder %v2371, 0.0
    %vm2521 = vcmp.gt.f32.partialorder %v2372, 0.0
    %vm2522 = vcmp.gt.f32.partialorder %v2373, 0.0
    %vm2523 = vcmp.gt.f32.partialorder %v2374, 0.0
    %vm2524 = vcmp.gt.f32.partialorder %v2375, 0.0
    %vm2525 = vcmp.gt.f32.partialorder %v2376, 0.0
    %vm2526 = vcmp.gt.f32.partialorder %v2377, 0.0
    %vm2527 = vcmp.gt.f32.partialorder %v2378, 0.0
    %vm2528 = vcmp.gt.f32.partialorder %v2379, 0.0
    %vm2529 = vcmp.gt.f32.partialorder %v2380, 0.0
    %vm2530 = vcmp.gt.f32.partialorder %v2381, 0.0
    %vm2531 = vcmp.gt.f32.partialorder %v2382, 0.0
    %vm2532 = vcmp.gt.f32.partialorder %v2383, 0.0
    %vm2533 = vcmp.gt.f32.partialorder %v2384, 0.0
    %vm2534 = vcmp.gt.f32.partialorder %v2385, 0.0
    %vm2535 = vcmp.gt.f32.partialorder %v2386, 0.0
    %vm2536 = vcmp.gt.f32.partialorder %v2387, 0.0
    %vm2537 = vcmp.gt.f32.partialorder %v2388, 0.0
    %vm2538 = vcmp.gt.f32.partialorder %v2389, 0.0
    %vm2539 = vcmp.gt.f32.partialorder %v2390, 0.0
    %vm2540 = vcmp.gt.f32.partialorder %v2391, 0.0
    %vm2541 = vcmp.gt.f32.partialorder %v2392, 0.0
    %vm2542 = vcmp.gt.f32.partialorder %v2393, 0.0
    %vm2543 = vcmp.gt.f32.partialorder %v2394, 0.0
    %vm2544 = vcmp.gt.f32.partialorder %v2395, 0.0
    %vm2545 = vcmp.gt.f32.partialorder %v2396, 0.0
    %vm2546 = vcmp.gt.f32.partialorder %v2397, 0.0
    %vm2547 = vcmp.gt.f32.partialorder %v2398, 0.0
    %vm2548 = vcmp.gt.f32.partialorder %v2399, 0.0
    %vm2549 = vcmp.gt.f32.partialorder %v2400, 0.0
    %vm2550 = vcmp.gt.f32.partialorder %v2401, 0.0
    %vm2551 = vcmp.gt.f32.partialorder %v2402, 0.0
    %vm2552 = vcmp.gt.f32.partialorder %v2403, 0.0
    %vm2553 = vcmp.gt.f32.partialorder %v2404, 0.0
    %vm2554 = vcmp.gt.f32.partialorder %v2405, 0.0
    %vm2555 = vcmp.gt.f32.partialorder %v2406, 0.0
    %vm2556 = vcmp.gt.f32.partialorder %v2407, 0.0
    %vm2557 = vcmp.gt.f32.partialorder %v2408, 0.0
    %vm2558 = vcmp.gt.f32.partialorder %v2409, 0.0
    %vm2559 = vcmp.gt.f32.partialorder %v2410, 0.0
    %vm2560 = vcmp.gt.f32.partialorder %v2411, 0.0
    %v2561 = vstv %s2412
    %v2562 = vmul.f32 %v2561, %v2264
    %v2563 = vmul.f32 %v2561, %v2265
    %v2564 = vmul.f32 %v2561, %v2266
    %v2565 = vmul.f32 %v2561, %v2267
    %v2566 = vmul.f32 %v2561, %v2268
    %v2567 = vmul.f32 %v2561, %v2269
    %v2568 = vmul.f32 %v2561, %v2270
    %v2569 = vmul.f32 %v2561, %v2271
    %v2570 = vmul.f32 %v2561, %v2272
    %v2571 = vmul.f32 %v2561, %v2273
    %v2572 = vmul.f32 %v2561, %v2274
    %v2573 = vmul.f32 %v2561, %v2275
    %v2574 = vmul.f32 %v2561, %v2276
    %v2575 = vmul.f32 %v2561, %v2277
    %v2576 = vmul.f32 %v2561, %v2278
    %v2577 = vmul.f32 %v2561, %v2279
    %v2578 = vmul.f32 %v2561, %v2280
    %v2579 = vmul.f32 %v2561, %v2281
    %v2580 = vmul.f32 %v2561, %v2282
    %v2581 = vmul.f32 %v2561, %v2283
    %v2582 = vmul.f32 %v2561, %v2284
    %v2583 = vmul.f32 %v2561, %v2285
    %v2584 = vmul.f32 %v2561, %v2286
    %v2585 = vmul.f32 %v2561, %v2287
    %v2586 = vmul.f32 %v2561, %v2288
    %v2587 = vmul.f32 %v2561, %v2289
    %v2588 = vmul.f32 %v2561, %v2290
    %v2589 = vmul.f32 %v2561, %v2291
    %v2590 = vmul.f32 %v2561, %v2292
    %v2591 = vmul.f32 %v2561, %v2293
    %v2592 = vmul.f32 %v2561, %v2294
    %v2593 = vmul.f32 %v2561, %v2295
    %v2594 = vmul.f32 %v2561, %v2296
    %v2595 = vmul.f32 %v2561, %v2297
    %v2596 = vmul.f32 %v2561, %v2298
    %v2597 = vmul.f32 %v2561, %v2299
    %v2598 = vmul.f32 %v2561, %v2300
    %v2599 = vmul.f32 %v2561, %v2301
    %v2600 = vmul.f32 %v2561, %v2302
    %v2601 = vmul.f32 %v2561, %v2303
    %v2602 = vmul.f32 %v2561, %v2304
    %v2603 = vmul.f32 %v2561, %v2305
    %v2604 = vmul.f32 %v2561, %v2306
    %v2605 = vmul.f32 %v2561, %v2307
    %v2606 = vmul.f32 %v2561, %v2308
    %v2607 = vmul.f32 %v2561, %v2309
    %v2608 = vmul.f32 %v2561, %v2310
    %v2609 = vmul.f32 %v2561, %v2311
    %v2610 = vmul.f32 %v2561, %v2312
    %v2611 = vmul.f32 %v2561, %v2313
    %v2612 = vmul.f32 %v2561, %v2314
    %v2613 = vmul.f32 %v2561, %v2315
    %v2614 = vmul.f32 %v2561, %v2316
    %v2615 = vmul.f32 %v2561, %v2317
    %v2616 = vmul.f32 %v2561, %v2318
    %v2617 = vmul.f32 %v2561, %v2319
    %v2618 = vmul.f32 %v2561, %v2320
    %v2619 = vmul.f32 %v2561, %v2321
    %v2620 = vmul.f32 %v2561, %v2322
    %v2621 = vmul.f32 %v2561, %v2323
    %v2622 = vmul.f32 %v2561, %v2324
    %v2623 = vmul.f32 %v2561, %v2325
    %v2624 = vmul.f32 %v2561, %v2326
    %v2625 = vmul.f32 %v2561, %v2327
    %v2626 = vmul.f32 %v2561, %v2328
    %v2627 = vmul.f32 %v2561, %v2329
    %v2628 = vmul.f32 %v2561, %v2330
    %v2629 = vmul.f32 %v2561, %v2331
    %v2630 = vmul.f32 %v2561, %v2332
    %v2631 = vmul.f32 %v2561, %v2333
    %v2632 = vmul.f32 %v2561, %v2334
    %v2633 = vmul.f32 %v2561, %v2335
    %v2634 = vmul.f32 %v2561, %v2336
    %v2635 = vmul.f32 %v2561, %v2337
    %v2636 = vmul.f32 %v2561, %v2338
    %v2637 = vmul.f32 %v2561, %v2339
    %v2638 = vmul.f32 %v2561, %v2340
    %v2639 = vmul.f32 %v2561, %v2341
    %v2640 = vmul.f32 %v2561, %v2342
    %v2641 = vmul.f32 %v2561, %v2343
    %v2642 = vmul.f32 %v2561, %v2344
    %v2643 = vmul.f32 %v2561, %v2345
    %v2644 = vmul.f32 %v2561, %v2346
    %v2645 = vmul.f32 %v2561, %v2347
    %v2646 = vmul.f32 %v2561, %v2348
    %v2647 = vmul.f32 %v2561, %v2349
    %v2648 = vmul.f32 %v2561, %v2350
    %v2649 = vmul.f32 %v2561, %v2351
    %v2650 = vmul.f32 %v2561, %v2352
    %v2651 = vmul.f32 %v2561, %v2353
    %v2652 = vmul.f32 %v2561, %v2354
    %v2653 = vmul.f32 %v2561, %v2355
    %v2654 = vmul.f32 %v2561, %v2356
    %v2655 = vmul.f32 %v2561, %v2357
    %v2656 = vmul.f32 %v2561, %v2358
    %v2657 = vmul.f32 %v2561, %v2359
    %v2658 = vmul.f32 %v2561, %v2360
    %v2659 = vmul.f32 %v2561, %v2361
    %v2660 = vmul.f32 %v2561, %v2362
    %v2661 = vmul.f32 %v2561, %v2363
    %v2662 = vmul.f32 %v2561, %v2364
    %v2663 = vmul.f32 %v2561, %v2365
    %v2664 = vmul.f32 %v2561, %v2366
    %v2665 = vmul.f32 %v2561, %v2367
    %v2666 = vmul.f32 %v2561, %v2368
    %v2667 = vmul.f32 %v2561, %v2369
    %v2668 = vmul.f32 %v2561, %v2370
    %v2669 = vmul.f32 %v2561, %v2371
    %v2670 = vmul.f32 %v2561, %v2372
    %v2671 = vmul.f32 %v2561, %v2373
    %v2672 = vmul.f32 %v2561, %v2374
    %v2673 = vmul.f32 %v2561, %v2375
    %v2674 = vmul.f32 %v2561, %v2376
    %v2675 = vmul.f32 %v2561, %v2377
    %v2676 = vmul.f32 %v2561, %v2378
    %v2677 = vmul.f32 %v2561, %v2379
    %v2678 = vmul.f32 %v2561, %v2380
    %v2679 = vmul.f32 %v2561, %v2381
    %v2680 = vmul.f32 %v2561, %v2382
    %v2681 = vmul.f32 %v2561, %v2383
    %v2682 = vmul.f32 %v2561, %v2384
    %v2683 = vmul.f32 %v2561, %v2385
    %v2684 = vmul.f32 %v2561, %v2386
    %v2685 = vmul.f32 %v2561, %v2387
    %v2686 = vmul.f32 %v2561, %v2388
    %v2687 = vmul.f32 %v2561, %v2389
    %v2688 = vmul.f32 %v2561, %v2390
    %v2689 = vmul.f32 %v2561, %v2391
    %v2690 = vmul.f32 %v2561, %v2392
    %v2691 = vmul.f32 %v2561, %v2393
    %v2692 = vmul.f32 %v2561, %v2394
    %v2693 = vmul.f32 %v2561, %v2395
    %v2694 = vmul.f32 %v2561, %v2396
    %v2695 = vmul.f32 %v2561, %v2397
    %v2696 = vmul.f32 %v2561, %v2398
    %v2697 = vmul.f32 %v2561, %v2399
    %v2698 = vmul.f32 %v2561, %v2400
    %v2699 = vmul.f32 %v2561, %v2401
    %v2700 = vmul.f32 %v2561, %v2402
    %v2701 = vmul.f32 %v2561, %v2403
    %v2702 = vmul.f32 %v2561, %v2404
    %v2703 = vmul.f32 %v2561, %v2405
    %v2704 = vmul.f32 %v2561, %v2406
    %v2705 = vmul.f32 %v2561, %v2407
    %v2706 = vmul.f32 %v2561, %v2408
    %v2707 = vmul.f32 %v2561, %v2409
    %v2708 = vmul.f32 %v2561, %v2410
    %v2709 = vmul.f32 %v2561, %v2411
    %v2710 = vsel %vm2413, %v2264, %v2562
    %v2711 = vsel %vm2414, %v2265, %v2563
    %v2712 = vsel %vm2415, %v2266, %v2564
    %v2713 = vsel %vm2416, %v2267, %v2565
    %v2714 = vsel %vm2417, %v2268, %v2566
    %v2715 = vsel %vm2418, %v2269, %v2567
    %v2716 = vsel %vm2419, %v2270, %v2568
    %v2717 = vsel %vm2420, %v2271, %v2569
    %v2718 = vsel %vm2421, %v2272, %v2570
    %v2719 = vsel %vm2422, %v2273, %v2571
    %v2720 = vsel %vm2423, %v2274, %v2572
    %v2721 = vsel %vm2424, %v2275, %v2573
    %v2722 = vsel %vm2425, %v2276, %v2574
    %v2723 = vsel %vm2426, %v2277, %v2575
    %v2724 = vsel %vm2427, %v2278, %v2576
    %v2725 = vsel %vm2428, %v2279, %v2577
    %v2726 = vsel %vm2429, %v2280, %v2578
    %v2727 = vsel %vm2430, %v2281, %v2579
    %v2728 = vsel %vm2431, %v2282, %v2580
    %v2729 = vsel %vm2432, %v2283, %v2581
    %v2730 = vsel %vm2433, %v2284, %v2582
    %v2731 = vsel %vm2434, %v2285, %v2583
    %v2732 = vsel %vm2435, %v2286, %v2584
    %v2733 = vsel %vm2436, %v2287, %v2585
    %v2734 = vsel %vm2437, %v2288, %v2586
    %v2735 = vsel %vm2438, %v2289, %v2587
    %v2736 = vsel %vm2439, %v2290, %v2588
    %v2737 = vsel %vm2440, %v2291, %v2589
    %v2738 = vsel %vm2441, %v2292, %v2590
    %v2739 = vsel %vm2442, %v2293, %v2591
    %v2740 = vsel %vm2443, %v2294, %v2592
    %v2741 = vsel %vm2444, %v2295, %v2593
    %v2742 = vsel %vm2445, %v2296, %v2594
    %v2743 = vsel %vm2446, %v2297, %v2595
    %v2744 = vsel %vm2447, %v2298, %v2596
    %v2745 = vsel %vm2448, %v2299, %v2597
    %v2746 = vsel %vm2449, %v2300, %v2598
    %v2747 = vsel %vm2450, %v2301, %v2599
    %v2748 = vsel %vm2451, %v2302, %v2600
    %v2749 = vsel %vm2452, %v2303, %v2601
    %v2750 = vsel %vm2453, %v2304, %v2602
    %v2751 = vsel %vm2454, %v2305, %v2603
    %v2752 = vsel %vm2455, %v2306, %v2604
    %v2753 = vsel %vm2456, %v2307, %v2605
    %v2754 = vsel %vm2457, %v2308, %v2606
    %v2755 = vsel %vm2458, %v2309, %v2607
    %v2756 = vsel %vm2459, %v2310, %v2608
    %v2757 = vsel %vm2460, %v2311, %v2609
    %v2758 = vsel %vm2461, %v2312, %v2610
    %v2759 = vsel %vm2462, %v2313, %v2611
    %v2760 = vsel %vm2463, %v2314, %v2612
    %v2761 = vsel %vm2464, %v2315, %v2613
    %v2762 = vsel %vm2465, %v2316, %v2614
    %v2763 = vsel %vm2466, %v2317, %v2615
    %v2764 = vsel %vm2467, %v2318, %v2616
    %v2765 = vsel %vm2468, %v2319, %v2617
    %v2766 = vsel %vm2469, %v2320, %v2618
    %v2767 = vsel %vm2470, %v2321, %v2619
    %v2768 = vsel %vm2471, %v2322, %v2620
    %v2769 = vsel %vm2472, %v2323, %v2621
    %v2770 = vsel %vm2473, %v2324, %v2622
    %v2771 = vsel %vm2474, %v2325, %v2623
    %v2772 = vsel %vm2475, %v2326, %v2624
    %v2773 = vsel %vm2476, %v2327, %v2625
    %v2774 = vsel %vm2477, %v2328, %v2626
    %v2775 = vsel %vm2478, %v2329, %v2627
    %v2776 = vsel %vm2479, %v2330, %v2628
    %v2777 = vsel %vm2480, %v2331, %v2629
    %v2778 = vsel %vm2481, %v2332, %v2630
    %v2779 = vsel %vm2482, %v2333, %v2631
    %v2780 = vsel %vm2483, %v2334, %v2632
    %v2781 = vsel %vm2484, %v2335, %v2633
    %v2782 = vsel %vm2485, %v2336, %v2634
    %v2783 = vsel %vm2486, %v2337, %v2635
    %v2784 = vsel %vm2487, %v2338, %v2636
    %v2785 = vsel %vm2488, %v2339, %v2637
    %v2786 = vsel %vm2489, %v2340, %v2638
    %v2787 = vsel %vm2490, %v2341, %v2639
    %v2788 = vsel %vm2491, %v2342, %v2640
    %v2789 = vsel %vm2492, %v2343, %v2641
    %v2790 = vsel %vm2493, %v2344, %v2642
    %v2791 = vsel %vm2494, %v2345, %v2643
    %v2792 = vsel %vm2495, %v2346, %v2644
    %v2793 = vsel %vm2496, %v2347, %v2645
    %v2794 = vsel %vm2497, %v2348, %v2646
    %v2795 = vsel %vm2498, %v2349, %v2647
    %v2796 = vsel %vm2499, %v2350, %v2648
    %v2797 = vsel %vm2500, %v2351, %v2649
    %v2798 = vsel %vm2501, %v2352, %v2650
    %v2799 = vsel %vm2502, %v2353, %v2651
    %v2800 = vsel %vm2503, %v2354, %v2652
    %v2801 = vsel %vm2504, %v2355, %v2653
    %v2802 = vsel %vm2505, %v2356, %v2654
    %v2803 = vsel %vm2506, %v2357, %v2655
    %v2804 = vsel %vm2507, %v2358, %v2656
    %v2805 = vsel %vm2508, %v2359, %v2657
    %v2806 = vsel %vm2509, %v2360, %v2658
    %v2807 = vsel %vm2510, %v2361, %v2659
    %v2808 = vsel %vm2511, %v2362, %v2660
    %v2809 = vsel %vm2512, %v2363, %v2661
    %v2810 = vsel %vm2513, %v2364, %v2662
    %v2811 = vsel %vm2514, %v2365, %v2663
    %v2812 = vsel %vm2515, %v2366, %v2664
    %v2813 = vsel %vm2516, %v2367, %v2665
    %v2814 = vsel %vm2517, %v2368, %v2666
    %v2815 = vsel %vm2518, %v2369, %v2667
    %v2816 = vsel %vm2519, %v2370, %v2668
    %v2817 = vsel %vm2520, %v2371, %v2669
    %v2818 = vsel %vm2521, %v2372, %v2670
    %v2819 = vsel %vm2522, %v2373, %v2671
    %v2820 = vsel %vm2523, %v2374, %v2672
    %v2821 = vsel %vm2524, %v2375, %v2673
    %v2822 = vsel %vm2525, %v2376, %v2674
    %v2823 = vsel %vm2526, %v2377, %v2675
    %v2824 = vsel %vm2527, %v2378, %v2676
    %v2825 = vsel %vm2528, %v2379, %v2677
    %v2826 = vsel %vm2529, %v2380, %v2678
    %v2827 = vsel %vm2530, %v2381, %v2679
    %v2828 = vsel %vm2531, %v2382, %v2680
    %v2829 = vsel %vm2532, %v2383, %v2681
    %v2830 = vsel %vm2533, %v2384, %v2682
    %v2831 = vsel %vm2534, %v2385, %v2683
    %v2832 = vsel %vm2535, %v2386, %v2684
    %v2833 = vsel %vm2536, %v2387, %v2685
    %v2834 = vsel %vm2537, %v2388, %v2686
    %v2835 = vsel %vm2538, %v2389, %v2687
    %v2836 = vsel %vm2539, %v2390, %v2688
    %v2837 = vsel %vm2540, %v2391, %v2689
    %v2838 = vsel %vm2541, %v2392, %v2690
    %v2839 = vsel %vm2542, %v2393, %v2691
    %v2840 = vsel %vm2543, %v2394, %v2692
    %v2841 = vsel %vm2544, %v2395, %v2693
    %v2842 = vsel %vm2545, %v2396, %v2694
    %v2843 = vsel %vm2546, %v2397, %v2695
    %v2844 = vsel %vm2547, %v2398, %v2696
    %v2845 = vsel %vm2548, %v2399, %v2697
    %v2846 = vsel %vm2549, %v2400, %v2698
    %v2847 = vsel %vm2550, %v2401, %v2699
    %v2848 = vsel %vm2551, %v2402, %v2700
    %v2849 = vsel %vm2552, %v2403, %v2701
    %v2850 = vsel %vm2553, %v2404, %v2702
    %v2851 = vsel %vm2554, %v2405, %v2703
    %v2852 = vsel %vm2555, %v2406, %v2704
    %v2853 = vsel %vm2556, %v2407, %v2705
    %v2854 = vsel %vm2557, %v2408, %v2706
    %v2855 = vsel %vm2558, %v2409, %v2707
    %v2856 = vsel %vm2559, %v2410, %v2708
    %v2857 = vsel %vm2560, %v2411, %v2709
    %s2858 = sld [smem:[#allocation3 + $0x6]]
    %vm2859 = vcmp.gt.f32.partialorder %v2710, 0.0
    %vm2860 = vcmp.gt.f32.partialorder %v2711, 0.0
    %vm2861 = vcmp.gt.f32.partialorder %v2712, 0.0
    %vm2862 = vcmp.gt.f32.partialorder %v2713, 0.0
    %vm2863 = vcmp.gt.f32.partialorder %v2714, 0.0
    %vm2864 = vcmp.gt.f32.partialorder %v2715, 0.0
    %vm2865 = vcmp.gt.f32.partialorder %v2716, 0.0
    %vm2866 = vcmp.gt.f32.partialorder %v2717, 0.0
    %vm2867 = vcmp.gt.f32.partialorder %v2718, 0.0
    %vm2868 = vcmp.gt.f32.partialorder %v2719, 0.0
    %vm2869 = vcmp.gt.f32.partialorder %v2720, 0.0
    %vm2870 = vcmp.gt.f32.partialorder %v2721, 0.0
    %vm2871 = vcmp.gt.f32.partialorder %v2722, 0.0
    %vm2872 = vcmp.gt.f32.partialorder %v2723, 0.0
    %vm2873 = vcmp.gt.f32.partialorder %v2724, 0.0
    %vm2874 = vcmp.gt.f32.partialorder %v2725, 0.0
    %vm2875 = vcmp.gt.f32.partialorder %v2726, 0.0
    %vm2876 = vcmp.gt.f32.partialorder %v2727, 0.0
    %vm2877 = vcmp.gt.f32.partialorder %v2728, 0.0
    %vm2878 = vcmp.gt.f32.partialorder %v2729, 0.0
    %vm2879 = vcmp.gt.f32.partialorder %v2730, 0.0
    %vm2880 = vcmp.gt.f32.partialorder %v2731, 0.0
    %vm2881 = vcmp.gt.f32.partialorder %v2732, 0.0
    %vm2882 = vcmp.gt.f32.partialorder %v2733, 0.0
    %vm2883 = vcmp.gt.f32.partialorder %v2734, 0.0
    %vm2884 = vcmp.gt.f32.partialorder %v2735, 0.0
    %vm2885 = vcmp.gt.f32.partialorder %v2736, 0.0
    %vm2886 = vcmp.gt.f32.partialorder %v2737, 0.0
    %vm2887 = vcmp.gt.f32.partialorder %v2738, 0.0
    %vm2888 = vcmp.gt.f32.partialorder %v2739, 0.0
    %vm2889 = vcmp.gt.f32.partialorder %v2740, 0.0
    %vm2890 = vcmp.gt.f32.partialorder %v2741, 0.0
    %vm2891 = vcmp.gt.f32.partialorder %v2742, 0.0
    %vm2892 = vcmp.gt.f32.partialorder %v2743, 0.0
    %vm2893 = vcmp.gt.f32.partialorder %v2744, 0.0
    %vm2894 = vcmp.gt.f32.partialorder %v2745, 0.0
    %vm2895 = vcmp.gt.f32.partialorder %v2746, 0.0
    %vm2896 = vcmp.gt.f32.partialorder %v2747, 0.0
    %vm2897 = vcmp.gt.f32.partialorder %v2748, 0.0
    %vm2898 = vcmp.gt.f32.partialorder %v2749, 0.0
    %vm2899 = vcmp.gt.f32.partialorder %v2750, 0.0
    %vm2900 = vcmp.gt.f32.partialorder %v2751, 0.0
    %vm2901 = vcmp.gt.f32.partialorder %v2752, 0.0
    %vm2902 = vcmp.gt.f32.partialorder %v2753, 0.0
    %vm2903 = vcmp.gt.f32.partialorder %v2754, 0.0
    %vm2904 = vcmp.gt.f32.partialorder %v2755, 0.0
    %vm2905 = vcmp.gt.f32.partialorder %v2756, 0.0
    %vm2906 = vcmp.gt.f32.partialorder %v2757, 0.0
    %vm2907 = vcmp.gt.f32.partialorder %v2758, 0.0
    %vm2908 = vcmp.gt.f32.partialorder %v2759, 0.0
    %vm2909 = vcmp.gt.f32.partialorder %v2760, 0.0
    %vm2910 = vcmp.gt.f32.partialorder %v2761, 0.0
    %vm2911 = vcmp.gt.f32.partialorder %v2762, 0.0
    %vm2912 = vcmp.gt.f32.partialorder %v2763, 0.0
    %vm2913 = vcmp.gt.f32.partialorder %v2764, 0.0
    %vm2914 = vcmp.gt.f32.partialorder %v2765, 0.0
    %vm2915 = vcmp.gt.f32.partialorder %v2766, 0.0
    %vm2916 = vcmp.gt.f32.partialorder %v2767, 0.0
    %vm2917 = vcmp.gt.f32.partialorder %v2768, 0.0
    %vm2918 = vcmp.gt.f32.partialorder %v2769, 0.0
    %vm2919 = vcmp.gt.f32.partialorder %v2770, 0.0
    %vm2920 = vcmp.gt.f32.partialorder %v2771, 0.0
    %vm2921 = vcmp.gt.f32.partialorder %v2772, 0.0
    %vm2922 = vcmp.gt.f32.partialorder %v2773, 0.0
    %vm2923 = vcmp.gt.f32.partialorder %v2774, 0.0
    %vm2924 = vcmp.gt.f32.partialorder %v2775, 0.0
    %vm2925 = vcmp.gt.f32.partialorder %v2776, 0.0
    %vm2926 = vcmp.gt.f32.partialorder %v2777, 0.0
    %vm2927 = vcmp.gt.f32.partialorder %v2778, 0.0
    %vm2928 = vcmp.gt.f32.partialorder %v2779, 0.0
    %vm2929 = vcmp.gt.f32.partialorder %v2780, 0.0
    %vm2930 = vcmp.gt.f32.partialorder %v2781, 0.0
    %vm2931 = vcmp.gt.f32.partialorder %v2782, 0.0
    %vm2932 = vcmp.gt.f32.partialorder %v2783, 0.0
    %vm2933 = vcmp.gt.f32.partialorder %v2784, 0.0
    %vm2934 = vcmp.gt.f32.partialorder %v2785, 0.0
    %vm2935 = vcmp.gt.f32.partialorder %v2786, 0.0
    %vm2936 = vcmp.gt.f32.partialorder %v2787, 0.0
    %vm2937 = vcmp.gt.f32.partialorder %v2788, 0.0
    %vm2938 = vcmp.gt.f32.partialorder %v2789, 0.0
    %vm2939 = vcmp.gt.f32.partialorder %v2790, 0.0
    %vm2940 = vcmp.gt.f32.partialorder %v2791, 0.0
    %vm2941 = vcmp.gt.f32.partialorder %v2792, 0.0
    %vm2942 = vcmp.gt.f32.partialorder %v2793, 0.0
    %vm2943 = vcmp.gt.f32.partialorder %v2794, 0.0
    %vm2944 = vcmp.gt.f32.partialorder %v2795, 0.0
    %vm2945 = vcmp.gt.f32.partialorder %v2796, 0.0
    %vm2946 = vcmp.gt.f32.partialorder %v2797, 0.0
    %vm2947 = vcmp.gt.f32.partialorder %v2798, 0.0
    %vm2948 = vcmp.gt.f32.partialorder %v2799, 0.0
    %vm2949 = vcmp.gt.f32.partialorder %v2800, 0.0
    %vm2950 = vcmp.gt.f32.partialorder %v2801, 0.0
    %vm2951 = vcmp.gt.f32.partialorder %v2802, 0.0
    %vm2952 = vcmp.gt.f32.partialorder %v2803, 0.0
    %vm2953 = vcmp.gt.f32.partialorder %v2804, 0.0
    %vm2954 = vcmp.gt.f32.partialorder %v2805, 0.0
    %vm2955 = vcmp.gt.f32.partialorder %v2806, 0.0
    %vm2956 = vcmp.gt.f32.partialorder %v2807, 0.0
    %vm2957 = vcmp.gt.f32.partialorder %v2808, 0.0
    %vm2958 = vcmp.gt.f32.partialorder %v2809, 0.0
    %vm2959 = vcmp.gt.f32.partialorder %v2810, 0.0
    %vm2960 = vcmp.gt.f32.partialorder %v2811, 0.0
    %vm2961 = vcmp.gt.f32.partialorder %v2812, 0.0
    %vm2962 = vcmp.gt.f32.partialorder %v2813, 0.0
    %vm2963 = vcmp.gt.f32.partialorder %v2814, 0.0
    %vm2964 = vcmp.gt.f32.partialorder %v2815, 0.0
    %vm2965 = vcmp.gt.f32.partialorder %v2816, 0.0
    %vm2966 = vcmp.gt.f32.partialorder %v2817, 0.0
    %vm2967 = vcmp.gt.f32.partialorder %v2818, 0.0
    %vm2968 = vcmp.gt.f32.partialorder %v2819, 0.0
    %vm2969 = vcmp.gt.f32.partialorder %v2820, 0.0
    %vm2970 = vcmp.gt.f32.partialorder %v2821, 0.0
    %vm2971 = vcmp.gt.f32.partialorder %v2822, 0.0
    %vm2972 = vcmp.gt.f32.partialorder %v2823, 0.0
    %vm2973 = vcmp.gt.f32.partialorder %v2824, 0.0
    %vm2974 = vcmp.gt.f32.partialorder %v2825, 0.0
    %vm2975 = vcmp.gt.f32.partialorder %v2826, 0.0
    %vm2976 = vcmp.gt.f32.partialorder %v2827, 0.0
    %vm2977 = vcmp.gt.f32.partialorder %v2828, 0.0
    %vm2978 = vcmp.gt.f32.partialorder %v2829, 0.0
    %vm2979 = vcmp.gt.f32.partialorder %v2830, 0.0
    %vm2980 = vcmp.gt.f32.partialorder %v2831, 0.0
    %vm2981 = vcmp.gt.f32.partialorder %v2832, 0.0
    %vm2982 = vcmp.gt.f32.partialorder %v2833, 0.0
    %vm2983 = vcmp.gt.f32.partialorder %v2834, 0.0
    %vm2984 = vcmp.gt.f32.partialorder %v2835, 0.0
    %vm2985 = vcmp.gt.f32.partialorder %v2836, 0.0
    %vm2986 = vcmp.gt.f32.partialorder %v2837, 0.0
    %vm2987 = vcmp.gt.f32.partialorder %v2838, 0.0
    %vm2988 = vcmp.gt.f32.partialorder %v2839, 0.0
    %vm2989 = vcmp.gt.f32.partialorder %v2840, 0.0
    %vm2990 = vcmp.gt.f32.partialorder %v2841, 0.0
    %vm2991 = vcmp.gt.f32.partialorder %v2842, 0.0
    %vm2992 = vcmp.gt.f32.partialorder %v2843, 0.0
    %vm2993 = vcmp.gt.f32.partialorder %v2844, 0.0
    %vm2994 = vcmp.gt.f32.partialorder %v2845, 0.0
    %vm2995 = vcmp.gt.f32.partialorder %v2846, 0.0
    %vm2996 = vcmp.gt.f32.partialorder %v2847, 0.0
    %vm2997 = vcmp.gt.f32.partialorder %v2848, 0.0
    %vm2998 = vcmp.gt.f32.partialorder %v2849, 0.0
    %vm2999 = vcmp.gt.f32.partialorder %v2850, 0.0
    %vm3000 = vcmp.gt.f32.partialorder %v2851, 0.0
    %vm3001 = vcmp.gt.f32.partialorder %v2852, 0.0
    %vm3002 = vcmp.gt.f32.partialorder %v2853, 0.0
    %vm3003 = vcmp.gt.f32.partialorder %v2854, 0.0
    %vm3004 = vcmp.gt.f32.partialorder %v2855, 0.0
    %vm3005 = vcmp.gt.f32.partialorder %v2856, 0.0
    %vm3006 = vcmp.gt.f32.partialorder %v2857, 0.0
    %v3007 = vstv %s2858
    %v3008 = vmul.f32 %v3007, %v2710
    %v3009 = vmul.f32 %v3007, %v2711
    %v3010 = vmul.f32 %v3007, %v2712
    %v3011 = vmul.f32 %v3007, %v2713
    %v3012 = vmul.f32 %v3007, %v2714
    %v3013 = vmul.f32 %v3007, %v2715
    %v3014 = vmul.f32 %v3007, %v2716
    %v3015 = vmul.f32 %v3007, %v2717
    %v3016 = vmul.f32 %v3007, %v2718
    %v3017 = vmul.f32 %v3007, %v2719
    %v3018 = vmul.f32 %v3007, %v2720
    %v3019 = vmul.f32 %v3007, %v2721
    %v3020 = vmul.f32 %v3007, %v2722
    %v3021 = vmul.f32 %v3007, %v2723
    %v3022 = vmul.f32 %v3007, %v2724
    %v3023 = vmul.f32 %v3007, %v2725
    %v3024 = vmul.f32 %v3007, %v2726
    %v3025 = vmul.f32 %v3007, %v2727
    %v3026 = vmul.f32 %v3007, %v2728
    %v3027 = vmul.f32 %v3007, %v2729
    %v3028 = vmul.f32 %v3007, %v2730
    %v3029 = vmul.f32 %v3007, %v2731
    %v3030 = vmul.f32 %v3007, %v2732
    %v3031 = vmul.f32 %v3007, %v2733
    %v3032 = vmul.f32 %v3007, %v2734
    %v3033 = vmul.f32 %v3007, %v2735
    %v3034 = vmul.f32 %v3007, %v2736
    %v3035 = vmul.f32 %v3007, %v2737
    %v3036 = vmul.f32 %v3007, %v2738
    %v3037 = vmul.f32 %v3007, %v2739
    %v3038 = vmul.f32 %v3007, %v2740
    %v3039 = vmul.f32 %v3007, %v2741
    %v3040 = vmul.f32 %v3007, %v2742
    %v3041 = vmul.f32 %v3007, %v2743
    %v3042 = vmul.f32 %v3007, %v2744
    %v3043 = vmul.f32 %v3007, %v2745
    %v3044 = vmul.f32 %v3007, %v2746
    %v3045 = vmul.f32 %v3007, %v2747
    %v3046 = vmul.f32 %v3007, %v2748
    %v3047 = vmul.f32 %v3007, %v2749
    %v3048 = vmul.f32 %v3007, %v2750
    %v3049 = vmul.f32 %v3007, %v2751
    %v3050 = vmul.f32 %v3007, %v2752
    %v3051 = vmul.f32 %v3007, %v2753
    %v3052 = vmul.f32 %v3007, %v2754
    %v3053 = vmul.f32 %v3007, %v2755
    %v3054 = vmul.f32 %v3007, %v2756
    %v3055 = vmul.f32 %v3007, %v2757
    %v3056 = vmul.f32 %v3007, %v2758
    %v3057 = vmul.f32 %v3007, %v2759
    %v3058 = vmul.f32 %v3007, %v2760
    %v3059 = vmul.f32 %v3007, %v2761
    %v3060 = vmul.f32 %v3007, %v2762
    %v3061 = vmul.f32 %v3007, %v2763
    %v3062 = vmul.f32 %v3007, %v2764
    %v3063 = vmul.f32 %v3007, %v2765
    %v3064 = vmul.f32 %v3007, %v2766
    %v3065 = vmul.f32 %v3007, %v2767
    %v3066 = vmul.f32 %v3007, %v2768
    %v3067 = vmul.f32 %v3007, %v2769
    %v3068 = vmul.f32 %v3007, %v2770
    %v3069 = vmul.f32 %v3007, %v2771
    %v3070 = vmul.f32 %v3007, %v2772
    %v3071 = vmul.f32 %v3007, %v2773
    %v3072 = vmul.f32 %v3007, %v2774
    %v3073 = vmul.f32 %v3007, %v2775
    %v3074 = vmul.f32 %v3007, %v2776
    %v3075 = vmul.f32 %v3007, %v2777
    %v3076 = vmul.f32 %v3007, %v2778
    %v3077 = vmul.f32 %v3007, %v2779
    %v3078 = vmul.f32 %v3007, %v2780
    %v3079 = vmul.f32 %v3007, %v2781
    %v3080 = vmul.f32 %v3007, %v2782
    %v3081 = vmul.f32 %v3007, %v2783
    %v3082 = vmul.f32 %v3007, %v2784
    %v3083 = vmul.f32 %v3007, %v2785
    %v3084 = vmul.f32 %v3007, %v2786
    %v3085 = vmul.f32 %v3007, %v2787
    %v3086 = vmul.f32 %v3007, %v2788
    %v3087 = vmul.f32 %v3007, %v2789
    %v3088 = vmul.f32 %v3007, %v2790
    %v3089 = vmul.f32 %v3007, %v2791
    %v3090 = vmul.f32 %v3007, %v2792
    %v3091 = vmul.f32 %v3007, %v2793
    %v3092 = vmul.f32 %v3007, %v2794
    %v3093 = vmul.f32 %v3007, %v2795
    %v3094 = vmul.f32 %v3007, %v2796
    %v3095 = vmul.f32 %v3007, %v2797
    %v3096 = vmul.f32 %v3007, %v2798
    %v3097 = vmul.f32 %v3007, %v2799
    %v3098 = vmul.f32 %v3007, %v2800
    %v3099 = vmul.f32 %v3007, %v2801
    %v3100 = vmul.f32 %v3007, %v2802
    %v3101 = vmul.f32 %v3007, %v2803
    %v3102 = vmul.f32 %v3007, %v2804
    %v3103 = vmul.f32 %v3007, %v2805
    %v3104 = vmul.f32 %v3007, %v2806
    %v3105 = vmul.f32 %v3007, %v2807
    %v3106 = vmul.f32 %v3007, %v2808
    %v3107 = vmul.f32 %v3007, %v2809
    %v3108 = vmul.f32 %v3007, %v2810
    %v3109 = vmul.f32 %v3007, %v2811
    %v3110 = vmul.f32 %v3007, %v2812
    %v3111 = vmul.f32 %v3007, %v2813
    %v3112 = vmul.f32 %v3007, %v2814
    %v3113 = vmul.f32 %v3007, %v2815
    %v3114 = vmul.f32 %v3007, %v2816
    %v3115 = vmul.f32 %v3007, %v2817
    %v3116 = vmul.f32 %v3007, %v2818
    %v3117 = vmul.f32 %v3007, %v2819
    %v3118 = vmul.f32 %v3007, %v2820
    %v3119 = vmul.f32 %v3007, %v2821
    %v3120 = vmul.f32 %v3007, %v2822
    %v3121 = vmul.f32 %v3007, %v2823
    %v3122 = vmul.f32 %v3007, %v2824
    %v3123 = vmul.f32 %v3007, %v2825
    %v3124 = vmul.f32 %v3007, %v2826
    %v3125 = vmul.f32 %v3007, %v2827
    %v3126 = vmul.f32 %v3007, %v2828
    %v3127 = vmul.f32 %v3007, %v2829
    %v3128 = vmul.f32 %v3007, %v2830
    %v3129 = vmul.f32 %v3007, %v2831
    %v3130 = vmul.f32 %v3007, %v2832
    %v3131 = vmul.f32 %v3007, %v2833
    %v3132 = vmul.f32 %v3007, %v2834
    %v3133 = vmul.f32 %v3007, %v2835
    %v3134 = vmul.f32 %v3007, %v2836
    %v3135 = vmul.f32 %v3007, %v2837
    %v3136 = vmul.f32 %v3007, %v2838
    %v3137 = vmul.f32 %v3007, %v2839
    %v3138 = vmul.f32 %v3007, %v2840
    %v3139 = vmul.f32 %v3007, %v2841
    %v3140 = vmul.f32 %v3007, %v2842
    %v3141 = vmul.f32 %v3007, %v2843
    %v3142 = vmul.f32 %v3007, %v2844
    %v3143 = vmul.f32 %v3007, %v2845
    %v3144 = vmul.f32 %v3007, %v2846
    %v3145 = vmul.f32 %v3007, %v2847
    %v3146 = vmul.f32 %v3007, %v2848
    %v3147 = vmul.f32 %v3007, %v2849
    %v3148 = vmul.f32 %v3007, %v2850
    %v3149 = vmul.f32 %v3007, %v2851
    %v3150 = vmul.f32 %v3007, %v2852
    %v3151 = vmul.f32 %v3007, %v2853
    %v3152 = vmul.f32 %v3007, %v2854
    %v3153 = vmul.f32 %v3007, %v2855
    %v3154 = vmul.f32 %v3007, %v2856
    %v3155 = vmul.f32 %v3007, %v2857
    %v3156 = vsel %vm2859, %v2710, %v3008
    %v3157 = vsel %vm2860, %v2711, %v3009
    %v3158 = vsel %vm2861, %v2712, %v3010
    %v3159 = vsel %vm2862, %v2713, %v3011
    %v3160 = vsel %vm2863, %v2714, %v3012
    %v3161 = vsel %vm2864, %v2715, %v3013
    %v3162 = vsel %vm2865, %v2716, %v3014
    %v3163 = vsel %vm2866, %v2717, %v3015
    %v3164 = vsel %vm2867, %v2718, %v3016
    %v3165 = vsel %vm2868, %v2719, %v3017
    %v3166 = vsel %vm2869, %v2720, %v3018
    %v3167 = vsel %vm2870, %v2721, %v3019
    %v3168 = vsel %vm2871, %v2722, %v3020
    %v3169 = vsel %vm2872, %v2723, %v3021
    %v3170 = vsel %vm2873, %v2724, %v3022
    %v3171 = vsel %vm2874, %v2725, %v3023
    %v3172 = vsel %vm2875, %v2726, %v3024
    %v3173 = vsel %vm2876, %v2727, %v3025
    %v3174 = vsel %vm2877, %v2728, %v3026
    %v3175 = vsel %vm2878, %v2729, %v3027
    %v3176 = vsel %vm2879, %v2730, %v3028
    %v3177 = vsel %vm2880, %v2731, %v3029
    %v3178 = vsel %vm2881, %v2732, %v3030
    %v3179 = vsel %vm2882, %v2733, %v3031
    %v3180 = vsel %vm2883, %v2734, %v3032
    %v3181 = vsel %vm2884, %v2735, %v3033
    %v3182 = vsel %vm2885, %v2736, %v3034
    %v3183 = vsel %vm2886, %v2737, %v3035
    %v3184 = vsel %vm2887, %v2738, %v3036
    %v3185 = vsel %vm2888, %v2739, %v3037
    %v3186 = vsel %vm2889, %v2740, %v3038
    %v3187 = vsel %vm2890, %v2741, %v3039
    %v3188 = vsel %vm2891, %v2742, %v3040
    %v3189 = vsel %vm2892, %v2743, %v3041
    %v3190 = vsel %vm2893, %v2744, %v3042
    %v3191 = vsel %vm2894, %v2745, %v3043
    %v3192 = vsel %vm2895, %v2746, %v3044
    %v3193 = vsel %vm2896, %v2747, %v3045
    %v3194 = vsel %vm2897, %v2748, %v3046
    %v3195 = vsel %vm2898, %v2749, %v3047
    %v3196 = vsel %vm2899, %v2750, %v3048
    %v3197 = vsel %vm2900, %v2751, %v3049
    %v3198 = vsel %vm2901, %v2752, %v3050
    %v3199 = vsel %vm2902, %v2753, %v3051
    %v3200 = vsel %vm2903, %v2754, %v3052
    %v3201 = vsel %vm2904, %v2755, %v3053
    %v3202 = vsel %vm2905, %v2756, %v3054
    %v3203 = vsel %vm2906, %v2757, %v3055
    %v3204 = vsel %vm2907, %v2758, %v3056
    %v3205 = vsel %vm2908, %v2759, %v3057
    %v3206 = vsel %vm2909, %v2760, %v3058
    %v3207 = vsel %vm2910, %v2761, %v3059
    %v3208 = vsel %vm2911, %v2762, %v3060
    %v3209 = vsel %vm2912, %v2763, %v3061
    %v3210 = vsel %vm2913, %v2764, %v3062
    %v3211 = vsel %vm2914, %v2765, %v3063
    %v3212 = vsel %vm2915, %v2766, %v3064
    %v3213 = vsel %vm2916, %v2767, %v3065
    %v3214 = vsel %vm2917, %v2768, %v3066
    %v3215 = vsel %vm2918, %v2769, %v3067
    %v3216 = vsel %vm2919, %v2770, %v3068
    %v3217 = vsel %vm2920, %v2771, %v3069
    %v3218 = vsel %vm2921, %v2772, %v3070
    %v3219 = vsel %vm2922, %v2773, %v3071
    %v3220 = vsel %vm2923, %v2774, %v3072
    %v3221 = vsel %vm2924, %v2775, %v3073
    %v3222 = vsel %vm2925, %v2776, %v3074
    %v3223 = vsel %vm2926, %v2777, %v3075
    %v3224 = vsel %vm2927, %v2778, %v3076
    %v3225 = vsel %vm2928, %v2779, %v3077
    %v3226 = vsel %vm2929, %v2780, %v3078
    %v3227 = vsel %vm2930, %v2781, %v3079
    %v3228 = vsel %vm2931, %v2782, %v3080
    %v3229 = vsel %vm2932, %v2783, %v3081
    %v3230 = vsel %vm2933, %v2784, %v3082
    %v3231 = vsel %vm2934, %v2785, %v3083
    %v3232 = vsel %vm2935, %v2786, %v3084
    %v3233 = vsel %vm2936, %v2787, %v3085
    %v3234 = vsel %vm2937, %v2788, %v3086
    %v3235 = vsel %vm2938, %v2789, %v3087
    %v3236 = vsel %vm2939, %v2790, %v3088
    %v3237 = vsel %vm2940, %v2791, %v3089
    %v3238 = vsel %vm2941, %v2792, %v3090
    %v3239 = vsel %vm2942, %v2793, %v3091
    %v3240 = vsel %vm2943, %v2794, %v3092
    %v3241 = vsel %vm2944, %v2795, %v3093
    %v3242 = vsel %vm2945, %v2796, %v3094
    %v3243 = vsel %vm2946, %v2797, %v3095
    %v3244 = vsel %vm2947, %v2798, %v3096
    %v3245 = vsel %vm2948, %v2799, %v3097
    %v3246 = vsel %vm2949, %v2800, %v3098
    %v3247 = vsel %vm2950, %v2801, %v3099
    %v3248 = vsel %vm2951, %v2802, %v3100
    %v3249 = vsel %vm2952, %v2803, %v3101
    %v3250 = vsel %vm2953, %v2804, %v3102
    %v3251 = vsel %vm2954, %v2805, %v3103
    %v3252 = vsel %vm2955, %v2806, %v3104
    %v3253 = vsel %vm2956, %v2807, %v3105
    %v3254 = vsel %vm2957, %v2808, %v3106
    %v3255 = vsel %vm2958, %v2809, %v3107
    %v3256 = vsel %vm2959, %v2810, %v3108
    %v3257 = vsel %vm2960, %v2811, %v3109
    %v3258 = vsel %vm2961, %v2812, %v3110
    %v3259 = vsel %vm2962, %v2813, %v3111
    %v3260 = vsel %vm2963, %v2814, %v3112
    %v3261 = vsel %vm2964, %v2815, %v3113
    %v3262 = vsel %vm2965, %v2816, %v3114
    %v3263 = vsel %vm2966, %v2817, %v3115
    %v3264 = vsel %vm2967, %v2818, %v3116
    %v3265 = vsel %vm2968, %v2819, %v3117
    %v3266 = vsel %vm2969, %v2820, %v3118
    %v3267 = vsel %vm2970, %v2821, %v3119
    %v3268 = vsel %vm2971, %v2822, %v3120
    %v3269 = vsel %vm2972, %v2823, %v3121
    %v3270 = vsel %vm2973, %v2824, %v3122
    %v3271 = vsel %vm2974, %v2825, %v3123
    %v3272 = vsel %vm2975, %v2826, %v3124
    %v3273 = vsel %vm2976, %v2827, %v3125
    %v3274 = vsel %vm2977, %v2828, %v3126
    %v3275 = vsel %vm2978, %v2829, %v3127
    %v3276 = vsel %vm2979, %v2830, %v3128
    %v3277 = vsel %vm2980, %v2831, %v3129
    %v3278 = vsel %vm2981, %v2832, %v3130
    %v3279 = vsel %vm2982, %v2833, %v3131
    %v3280 = vsel %vm2983, %v2834, %v3132
    %v3281 = vsel %vm2984, %v2835, %v3133
    %v3282 = vsel %vm2985, %v2836, %v3134
    %v3283 = vsel %vm2986, %v2837, %v3135
    %v3284 = vsel %vm2987, %v2838, %v3136
    %v3285 = vsel %vm2988, %v2839, %v3137
    %v3286 = vsel %vm2989, %v2840, %v3138
    %v3287 = vsel %vm2990, %v2841, %v3139
    %v3288 = vsel %vm2991, %v2842, %v3140
    %v3289 = vsel %vm2992, %v2843, %v3141
    %v3290 = vsel %vm2993, %v2844, %v3142
    %v3291 = vsel %vm2994, %v2845, %v3143
    %v3292 = vsel %vm2995, %v2846, %v3144
    %v3293 = vsel %vm2996, %v2847, %v3145
    %v3294 = vsel %vm2997, %v2848, %v3146
    %v3295 = vsel %vm2998, %v2849, %v3147
    %v3296 = vsel %vm2999, %v2850, %v3148
    %v3297 = vsel %vm3000, %v2851, %v3149
    %v3298 = vsel %vm3001, %v2852, %v3150
    %v3299 = vsel %vm3002, %v2853, %v3151
    %v3300 = vsel %vm3003, %v2854, %v3152
    %v3301 = vsel %vm3004, %v2855, %v3153
    %v3302 = vsel %vm3005, %v2856, %v3154
    %v3303 = vsel %vm3006, %v2857, %v3155
    %3304 = vst [vmem:[#allocation7] sm:$0xff] %v3156
    %3305 = vst [vmem:[#allocation7 + $0x8] sm:$0xff] %v3157
    %3306 = vst [vmem:[#allocation7 + $0x10] sm:$0xff] %v3158
    %3307 = vst [vmem:[#allocation7 + $0x18] sm:$0xff] %v3159
    %3308 = vst [vmem:[#allocation7 + $0x20] sm:$0xff] %v3160
    %3309 = vst [vmem:[#allocation7 + $0x28] sm:$0xff] %v3161
    %3310 = vst [vmem:[#allocation7 + $0x30] sm:$0xff] %v3162
    %3311 = vst [vmem:[#allocation7 + $0x38] sm:$0xff] %v3163
    %3312 = vst [vmem:[#allocation7 + $0x40] sm:$0xff] %v3164
    %3313 = vst [vmem:[#allocation7 + $0x48] sm:$0xff] %v3165
    %3314 = vst [vmem:[#allocation7 + $0x50] sm:$0xff] %v3166
    %3315 = vst [vmem:[#allocation7 + $0x58] sm:$0xff] %v3167
    %3316 = vst [vmem:[#allocation7 + $0x60] sm:$0xff] %v3168
    %3317 = vst [vmem:[#allocation7 + $0x68] sm:$0xff] %v3169
    %3318 = vst [vmem:[#allocation7 + $0x70] sm:$0xff] %v3170
    %3319 = vst [vmem:[#allocation7 + $0x78] sm:$0xff] %v3171
    %3320 = vst [vmem:[#allocation7 + $0x80] sm:$0xff] %v3172
    %3321 = vst [vmem:[#allocation7 + $0x88] sm:$0xff] %v3173
    %3322 = vst [vmem:[#allocation7 + $0x90] sm:$0xff] %v3174
    %3323 = vst [vmem:[#allocation7 + $0x98] sm:$0xff] %v3175
    %3324 = vst [vmem:[#allocation7 + $0xa0] sm:$0xff] %v3176
    %3325 = vst [vmem:[#allocation7 + $0xa8] sm:$0xff] %v3177
    %3326 = vst [vmem:[#allocation7 + $0xb0] sm:$0xff] %v3178
    %3327 = vst [vmem:[#allocation7 + $0xb8] sm:$0xff] %v3179
    %3328 = vst [vmem:[#allocation7 + $0xc0] sm:$0xff] %v3180
    %3329 = vst [vmem:[#allocation7 + $0xc8] sm:$0xff] %v3181
    %3330 = vst [vmem:[#allocation7 + $0xd0] sm:$0xff] %v3182
    %3331 = vst [vmem:[#allocation7 + $0xd8] sm:$0xff] %v3183
    %3332 = vst [vmem:[#allocation7 + $0xe0] sm:$0xff] %v3184
    %3333 = vst [vmem:[#allocation7 + $0xe8] sm:$0xff] %v3185
    %3334 = vst [vmem:[#allocation7 + $0xf0] sm:$0xff] %v3186
    %3335 = vst [vmem:[#allocation7 + $0xf8] sm:$0xff] %v3187
    %3336 = vst [vmem:[#allocation7 + $0x100] sm:$0xff] %v3188
    %3337 = vst [vmem:[#allocation7 + $0x108] sm:$0xff] %v3189
    %3338 = vst [vmem:[#allocation7 + $0x110] sm:$0xff] %v3190
    %3339 = vst [vmem:[#allocation7 + $0x118] sm:$0xff] %v3191
    %3340 = vst [vmem:[#allocation7 + $0x120] sm:$0xff] %v3192
    %3341 = vst [vmem:[#allocation7 + $0x128] sm:$0xff] %v3193
    %3342 = vst [vmem:[#allocation7 + $0x130] sm:$0xff] %v3194
    %3343 = vst [vmem:[#allocation7 + $0x138] sm:$0xff] %v3195
    %3344 = vst [vmem:[#allocation7 + $0x140] sm:$0xff] %v3196
    %3345 = vst [vmem:[#allocation7 + $0x148] sm:$0xff] %v3197
    %3346 = vst [vmem:[#allocation7 + $0x150] sm:$0xff] %v3198
    %3347 = vst [vmem:[#allocation7 + $0x158] sm:$0xff] %v3199
    %3348 = vst [vmem:[#allocation7 + $0x160] sm:$0xff] %v3200
    %3349 = vst [vmem:[#allocation7 + $0x168] sm:$0xff] %v3201
    %3350 = vst [vmem:[#allocation7 + $0x170] sm:$0xff] %v3202
    %3351 = vst [vmem:[#allocation7 + $0x178] sm:$0xff] %v3203
    %3352 = vst [vmem:[#allocation7 + $0x180] sm:$0xff] %v3204
    %3353 = vst [vmem:[#allocation7 + $0x188] sm:$0xff] %v3205
    %3354 = vst [vmem:[#allocation7 + $0x190] sm:$0xff] %v3206
    %3355 = vst [vmem:[#allocation7 + $0x198] sm:$0xff] %v3207
    %3356 = vst [vmem:[#allocation7 + $0x1a0] sm:$0xff] %v3208
    %3357 = vst [vmem:[#allocation7 + $0x1a8] sm:$0xff] %v3209
    %3358 = vst [vmem:[#allocation7 + $0x1b0] sm:$0xff] %v3210
    %3359 = vst [vmem:[#allocation7 + $0x1b8] sm:$0xff] %v3211
    %3360 = vst [vmem:[#allocation7 + $0x1c0] sm:$0xff] %v3212
    %3361 = vst [vmem:[#allocation7 + $0x1c8] sm:$0xff] %v3213
    %3362 = vst [vmem:[#allocation7 + $0x1d0] sm:$0xff] %v3214
    %3363 = vst [vmem:[#allocation7 + $0x1d8] sm:$0xff] %v3215
    %3364 = vst [vmem:[#allocation7 + $0x1e0] sm:$0xff] %v3216
    %3365 = vst [vmem:[#allocation7 + $0x1e8] sm:$0xff] %v3217
    %3366 = vst [vmem:[#allocation7 + $0x1f0] sm:$0xff] %v3218
    %3367 = vst [vmem:[#allocation7 + $0x1f8] sm:$0xff] %v3219
    %3368 = vst [vmem:[#allocation7 + $0x200] sm:$0xff] %v3220
    %3369 = vst [vmem:[#allocation7 + $0x208] sm:$0xff] %v3221
    %3370 = vst [vmem:[#allocation7 + $0x210] sm:$0xff] %v3222
    %3371 = vst [vmem:[#allocation7 + $0x218] sm:$0xff] %v3223
    %3372 = vst [vmem:[#allocation7 + $0x220] sm:$0xff] %v3224
    %3373 = vst [vmem:[#allocation7 + $0x228] sm:$0xff] %v3225
    %3374 = vst [vmem:[#allocation7 + $0x230] sm:$0xff] %v3226
    %3375 = vst [vmem:[#allocation7 + $0x238] sm:$0xff] %v3227
    %3376 = vst [vmem:[#allocation7 + $0x240] sm:$0xff] %v3228
    %3377 = vst [vmem:[#allocation7 + $0x248] sm:$0xff] %v3229
    %3378 = vst [vmem:[#allocation7 + $0x250] sm:$0xff] %v3230
    %3379 = vst [vmem:[#allocation7 + $0x258] sm:$0xff] %v3231
    %3380 = vst [vmem:[#allocation7 + $0x260] sm:$0xff] %v3232
    %3381 = vst [vmem:[#allocation7 + $0x268] sm:$0xff] %v3233
    %3382 = vst [vmem:[#allocation7 + $0x270] sm:$0xff] %v3234
    %3383 = vst [vmem:[#allocation7 + $0x278] sm:$0xff] %v3235
    %3384 = vst [vmem:[#allocation7 + $0x280] sm:$0xff] %v3236
    %3385 = vst [vmem:[#allocation7 + $0x288] sm:$0xff] %v3237
    %3386 = vst [vmem:[#allocation7 + $0x290] sm:$0xff] %v3238
    %3387 = vst [vmem:[#allocation7 + $0x298] sm:$0xff] %v3239
    %3388 = vst [vmem:[#allocation7 + $0x2a0] sm:$0xff] %v3240
    %3389 = vst [vmem:[#allocation7 + $0x2a8] sm:$0xff] %v3241
    %3390 = vst [vmem:[#allocation7 + $0x2b0] sm:$0xff] %v3242
    %3391 = vst [vmem:[#allocation7 + $0x2b8] sm:$0xff] %v3243
    %3392 = vst [vmem:[#allocation7 + $0x2c0] sm:$0xff] %v3244
    %3393 = vst [vmem:[#allocation7 + $0x2c8] sm:$0xff] %v3245
    %3394 = vst [vmem:[#allocation7 + $0x2d0] sm:$0xff] %v3246
    %3395 = vst [vmem:[#allocation7 + $0x2d8] sm:$0xff] %v3247
    %3396 = vst [vmem:[#allocation7 + $0x2e0] sm:$0xff] %v3248
    %3397 = vst [vmem:[#allocation7 + $0x2e8] sm:$0xff] %v3249
    %3398 = vst [vmem:[#allocation7 + $0x2f0] sm:$0xff] %v3250
    %3399 = vst [vmem:[#allocation7 + $0x2f8] sm:$0xff] %v3251
    %3400 = vst [vmem:[#allocation7 + $0x300] sm:$0xff] %v3252
    %3401 = vst [vmem:[#allocation7 + $0x308] sm:$0xff] %v3253
    %3402 = vst [vmem:[#allocation7 + $0x310] sm:$0xff] %v3254
    %3403 = vst [vmem:[#allocation7 + $0x318] sm:$0xff] %v3255
    %3404 = vst [vmem:[#allocation7 + $0x320] sm:$0xff] %v3256
    %3405 = vst [vmem:[#allocation7 + $0x328] sm:$0xff] %v3257
    %3406 = vst [vmem:[#allocation7 + $0x330] sm:$0xff] %v3258
    %3407 = vst [vmem:[#allocation7 + $0x338] sm:$0xff] %v3259
    %3408 = vst [vmem:[#allocation7 + $0x340] sm:$0xff] %v3260
    %3409 = vst [vmem:[#allocation7 + $0x348] sm:$0xff] %v3261
    %3410 = vst [vmem:[#allocation7 + $0x350] sm:$0xff] %v3262
    %3411 = vst [vmem:[#allocation7 + $0x358] sm:$0xff] %v3263
    %3412 = vst [vmem:[#allocation7 + $0x360] sm:$0xff] %v3264
    %3413 = vst [vmem:[#allocation7 + $0x368] sm:$0xff] %v3265
    %3414 = vst [vmem:[#allocation7 + $0x370] sm:$0xff] %v3266
    %3415 = vst [vmem:[#allocation7 + $0x378] sm:$0xff] %v3267
    %3416 = vst [vmem:[#allocation7 + $0x380] sm:$0xff] %v3268
    %3417 = vst [vmem:[#allocation7 + $0x388] sm:$0xff] %v3269
    %3418 = vst [vmem:[#allocation7 + $0x390] sm:$0xff] %v3270
    %3419 = vst [vmem:[#allocation7 + $0x398] sm:$0xff] %v3271
    %3420 = vst [vmem:[#allocation7 + $0x3a0] sm:$0xff] %v3272
    %3421 = vst [vmem:[#allocation7 + $0x3a8] sm:$0xff] %v3273
    %3422 = vst [vmem:[#allocation7 + $0x3b0] sm:$0xff] %v3274
    %3423 = vst [vmem:[#allocation7 + $0x3b8] sm:$0xff] %v3275
    %3424 = vst [vmem:[#allocation7 + $0x3c0] sm:$0xff] %v3276
    %3425 = vst [vmem:[#allocation7 + $0x3c8] sm:$0xff] %v3277
    %3426 = vst [vmem:[#allocation7 + $0x3d0] sm:$0xff] %v3278
    %3427 = vst [vmem:[#allocation7 + $0x3d8] sm:$0xff] %v3279
    %3428 = vst [vmem:[#allocation7 + $0x3e0] sm:$0xff] %v3280
    %3429 = vst [vmem:[#allocation7 + $0x3e8] sm:$0xff] %v3281
    %3430 = vst [vmem:[#allocation7 + $0x3f0] sm:$0xff] %v3282
    %3431 = vst [vmem:[#allocation7 + $0x3f8] sm:$0xff] %v3283
    %3432 = vst [vmem:[#allocation7 + $0x400] sm:$0xff] %v3284
    %3433 = vst [vmem:[#allocation7 + $0x408] sm:$0xff] %v3285
    %3434 = vst [vmem:[#allocation7 + $0x410] sm:$0xff] %v3286
    %3435 = vst [vmem:[#allocation7 + $0x418] sm:$0xff] %v3287
    %3436 = vst [vmem:[#allocation7 + $0x420] sm:$0xff] %v3288
    %3437 = vst [vmem:[#allocation7 + $0x428] sm:$0xff] %v3289
    %3438 = vst [vmem:[#allocation7 + $0x430] sm:$0xff] %v3290
    %3439 = vst [vmem:[#allocation7 + $0x438] sm:$0xff] %v3291
    %3440 = vst [vmem:[#allocation7 + $0x440] sm:$0xff] %v3292
    %3441 = vst [vmem:[#allocation7 + $0x448] sm:$0xff] %v3293
    %3442 = vst [vmem:[#allocation7 + $0x450] sm:$0xff] %v3294
    %3443 = vst [vmem:[#allocation7 + $0x458] sm:$0xff] %v3295
    %3444 = vst [vmem:[#allocation7 + $0x460] sm:$0xff] %v3296
    %3445 = vst [vmem:[#allocation7 + $0x468] sm:$0xff] %v3297
    %3446 = vst [vmem:[#allocation7 + $0x470] sm:$0xff] %v3298
    %3447 = vst [vmem:[#allocation7 + $0x478] sm:$0xff] %v3299
    %3448 = vst [vmem:[#allocation7 + $0x480] sm:$0xff] %v3300
    %3449 = vst [vmem:[#allocation7 + $0x488] sm:$0xff] %v3301
    %3450 = vst [vmem:[#allocation7 + $0x490] sm:$0xff] %v3302
    %3451 = vst [vmem:[#allocation7 + $0x498] sm:$0xff] %v3303
    // Predicated region
    $region10: #{tpu_custom_call.1} parent=1 // pred_check
      _
    $region11: #{tpu_custom_call.1} parent=1 // pred_check_branch
      %3453 = sbr.rel (0) target = $region13
    $region12: #{tpu_custom_call.1} parent=1 // pred_region
      %3455 = vsyncadd [#allocation6], 0
      %s3456 = sshll.u32 [#allocation7], 4
      %s3457 = int_to_ptr.vmem [resolvable:$true] %s3456
      %s3458 = sshll.u32 %s2, 4
      %s3459 = int_to_ptr.hbm [resolvable:$true] %s3458
      %3464 = dma.vmem_to_hbm [thread:$0]  %s3457, 18944, %s3459, [#allocation6], 512, 512, 32
    $region13: #{tpu_custom_call.1} parent=1 // pred_fallthru
      _
    // Predicated region
    $region14: #{tpu_custom_call.1} parent=1 // pred_check
      _
    $region15: #{tpu_custom_call.1} parent=1 // pred_check_branch
      %3466 = sbr.rel (0) target = $region17
    $region16: #{tpu_custom_call.1} parent=1 // pred_region
      %3468 = dma.done [#allocation6], 18944
    $region17: #{tpu_custom_call.1} parent=1 // pred_fallthru
      _
    %3469 = vsyncpa [#allocation5], 1
    %3470 = vsyncpa [#allocation6], 1

</llo_original>
